<compile_context>
chip_gen: v6e
topology: v6e:2x2x1
jax: 0.10.0
libtpu: 0.0.40
codegen_flags: <defaults>
</compile_context>

<pallas_src>
import functools

import jax
import jax.numpy as jnp
from jax.experimental import pallas as pl
from jax.experimental.pallas import tpu as pltpu

_LANE = 128


def _round_up(x, m):
    return (x + m - 1) // m * m


# ---------------------------------------------------------------------------
# Fused Pallas kernel: all FFT layers + fully_connected + log_softmax
# ---------------------------------------------------------------------------
def _fftnet_fused_kernel(x_ref, w0_ref, b0_ref, wl_ref, wr_ref, bin_ref,
                         wout_ref, bout_ref, wfc_ref, bfc_ref, o_ref,
                         *, halves, tile_t, n_classes):
    f32 = jnp.float32
    mm_dtype = wl_ref.dtype                  # bf16 (default) or f32 MXU weights
    t = pl.program_id(1)
    start = pl.multiple_of(t * tile_t, 8)    # tile_t is a multiple of 8
    rf_m1 = sum(halves)                      # receptive field - 1
    half0 = halves[0]

    # ---- layer 0 (C_in == 1): VPU broadcast multiply-add ------------------
    # Load the halo window ONCE and reuse it for both shifted views (avoids
    # two overlapping lane-sparse vld streams of the (T,1) input).
    L = tile_t + rf_m1 - half0               # layer-0 output rows for this tile
    xw = x_ref[pl.ds(start, L + half0), :]   # (L+half0, 1) f32 halo window
    x_l = xw[:L, :]
    x_r = xw[half0:half0 + L, :]
    w0 = w0_ref[...].astype(f32)             # (2, Cp): rows = [w_L0, w_R0]
    h = x_l * w0[0:1, :] + x_r * w0[1:2, :] + b0_ref[...].astype(f32)
    h = jnp.maximum(h, 0.0)
    h = jnp.dot(h.astype(mm_dtype), wout_ref[0], preferred_element_type=f32)
    h = jnp.maximum(h + bout_ref[0].astype(f32), 0.0)        # (L, Cp)

    # ---- layers 1..depth-1: two K=Cp dots summed in f32 (no concat buffer) -
    for i, half in enumerate(halves[1:]):
        L = L - half
        hb = h.astype(mm_dtype)              # cast once per layer
        z = (jnp.dot(hb[:L, :], wl_ref[i], preferred_element_type=f32)
             + jnp.dot(hb[half:half + L, :], wr_ref[i],
                       preferred_element_type=f32))
        z = jnp.maximum(z + bin_ref[i].astype(f32), 0.0)
        h = jnp.dot(z.astype(mm_dtype), wout_ref[i + 1],
                    preferred_element_type=f32)
        h = jnp.maximum(h + bout_ref[i + 1].astype(f32), 0.0)  # (L, Cp)

    # ---- fully_connected + log_softmax over the real (unpadded) classes ---
    logits = jnp.dot(h.astype(mm_dtype), wfc_ref[...],
                     preferred_element_type=f32) + bfc_ref[...].astype(f32)
    kp = logits.shape[-1]
    if n_classes < kp:                       # mask the padded class lanes
        lane = jax.lax.broadcasted_iota(jnp.int32, logits.shape, 1)
        logits = jnp.where(lane < n_classes, logits,
                           jnp.full_like(logits, -1e30))
    m = jnp.max(logits, axis=-1, keepdims=True)
    z = logits - m
    lse = jnp.log(jnp.sum(jnp.exp(z), axis=-1, keepdims=True))
    o_ref[...] = (z - lse).astype(o_ref.dtype)


# ---------------------------------------------------------------------------
# Parameter init (PyTorch-like uniform +-1/sqrt(fan_in)) and packing
# ---------------------------------------------------------------------------
def init_fftnet_params(key, n_channels, n_depth, n_classes):
    params = []
    halves = []
    in_c = 1
    for idx in range(n_depth):
        input_size = 2 ** (n_depth - idx)
        halves.append(input_size // 2)
        key, k1, k2, k3, k4, k5, k6 = jax.random.split(key, 7)
        s_in = 1.0 / (in_c ** 0.5)
        s_out = 1.0 / (n_channels ** 0.5)
        w_l = jax.random.uniform(k1, (in_c, n_channels), jnp.float32, -s_in, s_in)
        w_r = jax.random.uniform(k2, (in_c, n_channels), jnp.float32, -s_in, s_in)
        b_l = jax.random.uniform(k3, (1, n_channels), jnp.float32, -s_in, s_in)
        b_r = jax.random.uniform(k4, (1, n_channels), jnp.float32, -s_in, s_in)
        w_out = jax.random.uniform(k5, (n_channels, n_channels), jnp.float32,
                                   -s_out, s_out)
        b_out = jax.random.uniform(k6, (1, n_channels), jnp.float32, -s_out, s_out)
        # conv_L bias + conv_R bias add into the same pre-activation
        params.append((w_l, w_r, b_l + b_r, w_out, b_out))
        in_c = n_channels
    key, kf1, kf2 = jax.random.split(key, 3)
    s_fc = 1.0 / (n_channels ** 0.5)
    w_fc = jax.random.uniform(kf1, (n_channels, n_classes), jnp.float32,
                              -s_fc, s_fc)
    b_fc = jax.random.uniform(kf2, (1, n_classes), jnp.float32, -s_fc, s_fc)
    return params, halves, w_fc, b_fc


def pack_fftnet_params(params, w_fc, b_fc, n_channels, n_classes,
                       mxu_dtype=jnp.bfloat16):
    """Zero-pad to lane-dense (multiples of 128); keep W_L / W_R separate.

    bf16 MXU weights are the default on every generation (v5e's MXU is
    bf16-native; v6e/v7x halve weight HBM/VMEM); accumulation stays f32.
    """
    assert len(params) >= 2, "n_depth must be >= 2"
    cp = _round_up(n_channels, _LANE)
    kp = _round_up(n_classes, _LANE)

    def pad2(a, rows, cols):
        return jnp.pad(a, ((0, rows - a.shape[0]), (0, cols - a.shape[1])))

    w_l0, w_r0, b0, _, _ = params[0]
    w0 = jnp.concatenate([pad2(w_l0, 1, cp), pad2(w_r0, 1, cp)], axis=0)  # (2,Cp)
    b0p = pad2(b0, 1, cp)
    wl = jnp.stack([pad2(w, cp, cp) for w, _, _, _, _ in params[1:]])     # (d-1,Cp,Cp)
    wr = jnp.stack([pad2(w, cp, cp) for _, w, _, _, _ in params[1:]])     # (d-1,Cp,Cp)
    binp = jnp.stack([pad2(b, 1, cp) for _, _, b, _, _ in params[1:]])    # (d-1,1,Cp)
    wout = jnp.stack([pad2(w, cp, cp) for _, _, _, w, _ in params])       # (d,Cp,Cp)
    bout = jnp.stack([pad2(b, 1, cp) for _, _, _, _, b in params])        # (d,1,Cp)
    wfcp = pad2(w_fc, cp, kp)
    bfcp = pad2(b_fc, 1, kp)
    return (w0.astype(jnp.float32), b0p.astype(jnp.float32),
            wl.astype(mxu_dtype), wr.astype(mxu_dtype),
            binp.astype(jnp.float32),
            wout.astype(mxu_dtype), bout.astype(jnp.float32),
            wfcp.astype(mxu_dtype), bfcp.astype(jnp.float32))


# ---------------------------------------------------------------------------
# Chip-aware VMEM budget and tile selection
# ---------------------------------------------------------------------------
def _pick_vmem_limit():
    try:
        cap = int(pltpu.get_tpu_info().vmem_capacity_bytes)
        # ~48 MiB on v7x (64 MiB/TC), ~96 MiB on v5e/v6e (128 MiB).
        return max(min(cap - (16 << 20), int(cap * 0.75)), 32 << 20)
    except Exception:
        return 48 << 20


def _auto_tile_t(B, t_out, rf_m1, cp, kp, weight_bytes, vmem_limit):
    # Halo amortization: target >= ~4x the receptive field, bounded by an
    # activation budget of roughly half the VMEM limit minus (possibly
    # double-buffered) weights; per output row we keep ~3 live (rows x Cp)
    # f32 intermediates plus the double-buffered (tile_t x Kp) output.
    act_budget = max(vmem_limit // 2 - 2 * weight_bytes, 4 << 20)
    per_row = (3 * cp + 2 * kp) * 4 + 16
    max_rows = max(act_budget // per_row, rf_m1 + 64)
    tile = min(max(4 * rf_m1, 1024), max_rows - rf_m1)
    tile = max(min(tile, _round_up(t_out, 8)), 8)
    # Keep both v7x TensorCores (megacore pair on older chips) busy.
    if B * pl.cdiv(t_out, tile) < 2 and t_out > 8:
        tile = max(_round_up(-(-t_out // 2), 8), 8)
    return _round_up(tile, 8)


def _const_spec(shape, single_buffered):
    rank = len(shape)

    def imap(b, t):
        return (0,) * rank

    if single_buffered:
        # Constant block index -> DMA'd once; single-buffer to halve the
        # resident weight VMEM (frees budget for a larger tile_t).
        return pl.BlockSpec(shape, imap, pipeline_mode=pl.Buffered(1))
    return pl.BlockSpec(shape, imap)


# ---------------------------------------------------------------------------
# Fused forward wrapper
# ---------------------------------------------------------------------------
def fftnet_forward(x, packed, halves, n_channels, n_classes, *, tile_t=None):
    """x: (B, T, 1) f32 channels-last.  Returns (B, T - (RF-1), n_classes)."""
    B, t_in, c_in = x.shape
    assert c_in == 1
    d = len(halves)
    assert d >= 2
    rf_m1 = sum(halves)
    t_out = t_in - rf_m1
    assert t_out > 0, "input shorter than receptive field"
    cp = _round_up(n_channels, _LANE)
    kp = _round_up(n_classes, _LANE)

    w0, b0, wl, wr, binp, wout, bout, wfc, bfc = packed
    weight_bytes = sum(int(a.size) * a.dtype.itemsize for a in packed)

    vmem_limit = _pick_vmem_limit()
    if tile_t is None:
        tile_t = _auto_tile_t(B, t_out, rf_m1, cp, kp, weight_bytes, vmem_limit)
    assert tile_t % 8 == 0 and tile_t > 0

    num_tiles = pl.cdiv(t_out, tile_t)
    t_pad = rf_m1 + num_tiles * tile_t
    x_pad = jnp.pad(x.astype(jnp.float32), ((0, 0), (0, t_pad - t_in), (0, 0)))

    # Advisory cost estimate (helps XLA schedule around the fused call).
    flops = 0
    L = tile_t + rf_m1 - halves[0]
    flops += 6 * L * cp + 2 * L * cp * cp
    for h_ in halves[1:]:
        L -= h_
        flops += 6 * L * cp * cp
    flops += 2 * tile_t * cp * kp
    flops *= B * num_tiles
    cost = pl.CostEstimate(
        flops=int(flops),
        transcendentals=int(B * num_tiles * tile_t * (kp + 1)),
        bytes_accessed=int(x_pad.size * 4 + B * num_tiles * tile_t * kp * 4
                           + weight_bytes))

    kernel = functools.partial(_fftnet_fused_kernel, halves=tuple(halves),
                               tile_t=tile_t, n_classes=n_classes)

    def build_and_run(single_buffered_weights):
        in_specs = [
            # full (tiny, 1-channel) input per batch element; the per-tile
            # halo window is taken with a dynamic pl.ds slice in the kernel
            pl.BlockSpec((None, t_pad, 1), lambda b, t: (b, 0, 0)),
            _const_spec((2, cp), single_buffered_weights),
            _const_spec((1, cp), single_buffered_weights),
            _const_spec((d - 1, cp, cp), single_buffered_weights),
            _const_spec((d - 1, cp, cp), single_buffered_weights),
            _const_spec((d - 1, 1, cp), single_buffered_weights),
            _const_spec((d, cp, cp), single_buffered_weights),
            _const_spec((d, 1, cp), single_buffered_weights),
            _const_spec((cp, kp), single_buffered_weights),
            _const_spec((1, kp), single_buffered_weights),
        ]
        return pl.pallas_call(
            kernel,
            out_shape=jax.ShapeDtypeStruct((B, num_tiles * tile_t, kp),
                                           jnp.float32),
            grid=(B, num_tiles),
            in_specs=in_specs,
            out_specs=pl.BlockSpec((None, tile_t, kp), lambda b, t: (b, t, 0)),
            compiler_params=pltpu.CompilerParams(
                dimension_semantics=("parallel", "parallel"),
                vmem_limit_bytes=int(vmem_limit)),
            cost_estimate=cost,
        )(x_pad, w0, b0, wl, wr, binp, wout, bout, wfc, bfc)

    try:
        out = build_and_run(True)
    except Exception:
        # Fallback if pipeline_mode=pl.Buffered(1) is not supported by the
        # installed JAX/Mosaic: default (double-buffered) weight specs.
        out = build_and_run(False)

    # Avoid the extra HBM copy when no trimming is needed.
    if t_out == num_tiles * tile_t and kp == n_classes:
        return out
    return out[:, :t_out, :n_classes]


# ---------------------------------------------------------------------------
# Pure-JAX reference (module semantics, unpadded, f32)
# ---------------------------------------------------------------------------
def fftnet_forward_ref(x, params, halves, w_fc, b_fc):
    h = x
    for (w_l, w_r, b_in, w_out, b_out), half in zip(params, halves):
        t_out = h.shape[1] - half
        z = h[:, :t_out, :] @ w_l + h[:, half:half + t_out, :] @ w_r + b_in
        z = jnp.maximum(z, 0.0)
        h = jnp.maximum(z @ w_out + b_out, 0.0)
    logits = h @ w_fc + b_fc
    return jax.nn.log_softmax(logits, axis=-1)


# ---------------------------------------------------------------------------
if __name__ == "__main__":
    def _check(n_channels, n_depth, n_classes, B, T, tile_t):
        key = jax.random.PRNGKey(0)
        key, pkey, xkey = jax.random.split(key, 3)
        params, halves, w_fc, b_fc = init_fftnet_params(
            pkey, n_channels, n_depth, n_classes)
        # PyTorch input would be (B, 1, T); we build it channels-last (B, T, 1).
        x = jax.random.uniform(xkey, (B, T, 1), jnp.float32)
        ref = jax.block_until_ready(
            fftnet_forward_ref(x, params, halves, w_fc, b_fc))
        expected_shape = (B, T - (2 ** n_depth - 1), n_classes)

        # f32 MXU weights: tight check against the unpadded reference.
        packed_f32 = pack_fftnet_params(params, w_fc, b_fc, n_channels,
                                        n_classes, mxu_dtype=jnp.float32)
        out_f32 = jax.block_until_ready(
            fftnet_forward(x, packed_f32, halves, n_channels, n_classes,
                           tile_t=tile_t))
        assert out_f32.shape == expected_shape, out_f32.shape
        err_f32 = float(jnp.max(jnp.abs(out_f32 - ref)))
        assert err_f32 < 2e-3, err_f32

        # bf16 MXU weights (f32 accumulation): default packing, all chips.
        packed_bf16 = pack_fftnet_params(params, w_fc, b_fc, n_channels,
                                         n_classes)
        out_bf16 = jax.block_until_ready(
            fftnet_forward(x, packed_bf16, halves, n_channels, n_classes,
                           tile_t=tile_t))
        assert out_bf16.shape == expected_shape, out_bf16.shape
        err_bf16 = float(jnp.max(jnp.abs(out_bf16 - ref)))
        assert err_bf16 < 1e-1, err_bf16

    # Config 1: depth 4 (RF 16), 2 output tiles -> exercises halo logic,
    # channel padding (32 -> 128), and the no-slice fast path
    # (t_out = 32 divides tile_t = 16, n_classes already 128).
    _check(n_channels=32, n_depth=4, n_classes=128, B=2, T=47, tile_t=16)

    # Config 2: auto tile selection (tile_t=None), class/time padding and the
    # trailing-slice path, plus a layer-0 half < 8.
    _check(n_channels=16, n_depth=3, n_classes=20, B=1, T=32, tile_t=None)

    print("KERNEL_OK")
</pallas_src>

<mosaic_0001>
module attributes {stable_mosaic.version = 11 : i64} {
  func.func @_fftnet_fused_kernel(%arg0: i32, %arg1: i32, %arg2: memref<1x47x1xf32, #tpu.memory_space<vmem>>, %arg3: memref<2x128xf32, #tpu.memory_space<vmem>>, %arg4: memref<1x128xf32, #tpu.memory_space<vmem>>, %arg5: memref<3x128x128xf32, #tpu.memory_space<vmem>>, %arg6: memref<3x128x128xf32, #tpu.memory_space<vmem>>, %arg7: memref<3x1x128xf32, #tpu.memory_space<vmem>>, %arg8: memref<4x128x128xf32, #tpu.memory_space<vmem>>, %arg9: memref<4x1x128xf32, #tpu.memory_space<vmem>>, %arg10: memref<128x128xf32, #tpu.memory_space<vmem>>, %arg11: memref<1x128xf32, #tpu.memory_space<vmem>>, %arg12: memref<1x16x128xf32, #tpu.memory_space<vmem>>) attributes {dimension_semantics = [#tpu.dimension_semantics<parallel>, #tpu.dimension_semantics<parallel>], iteration_bounds = array<i64: 2, 2>, scalar_prefetch = 0 : i64, scratch_operands = 0 : i64, tpu.core_type = #tpu.core_type<tc>, window_params = [{transform_indices = @transform_0, window_bounds = array<i64: 1, 47, 1>}, {pipeline_mode = #tpu.pipeline_mode<synchronous>, transform_indices = @transform_1, window_bounds = array<i64: 2, 128>}, {pipeline_mode = #tpu.pipeline_mode<synchronous>, transform_indices = @transform_2, window_bounds = array<i64: 1, 128>}, {pipeline_mode = #tpu.pipeline_mode<synchronous>, transform_indices = @transform_3, window_bounds = array<i64: 3, 128, 128>}, {pipeline_mode = #tpu.pipeline_mode<synchronous>, transform_indices = @transform_4, window_bounds = array<i64: 3, 128, 128>}, {pipeline_mode = #tpu.pipeline_mode<synchronous>, transform_indices = @transform_5, window_bounds = array<i64: 3, 1, 128>}, {pipeline_mode = #tpu.pipeline_mode<synchronous>, transform_indices = @transform_6, window_bounds = array<i64: 4, 128, 128>}, {pipeline_mode = #tpu.pipeline_mode<synchronous>, transform_indices = @transform_7, window_bounds = array<i64: 4, 1, 128>}, {pipeline_mode = #tpu.pipeline_mode<synchronous>, transform_indices = @transform_8, window_bounds = array<i64: 128, 128>}, {pipeline_mode = #tpu.pipeline_mode<synchronous>, transform_indices = @transform_9, window_bounds = array<i64: 1, 128>}, {transform_indices = @transform_10, window_bounds = array<i64: 1, 16, 128>}]} {
    %c16_i32 = arith.constant 16 : i32
    %0 = arith.muli %arg1, %c16_i32 : i32
    %1 = tpu.assume_multiple %0, 8 : i32
    %c0 = arith.constant 0 : index
    %2 = arith.index_cast %1 : i32 to index
    %c0_0 = arith.constant 0 : index
    %3 = vector.load %arg2[%c0, %2, %c0_0] : memref<1x47x1xf32, #tpu.memory_space<vmem>>, vector<1x31x1xf32>
    %4 = vector.shape_cast %3 : vector<1x31x1xf32> to vector<31x1xf32>
    %5 = vector.extract_strided_slice %4 {offsets = [0, 0], sizes = [23, 1], strides = [1, 1]} : vector<31x1xf32> to vector<23x1xf32>
    %6 = vector.extract_strided_slice %4 {offsets = [8, 0], sizes = [23, 1], strides = [1, 1]} : vector<31x1xf32> to vector<23x1xf32>
    %c0_1 = arith.constant 0 : index
    %c0_2 = arith.constant 0 : index
    %7 = vector.load %arg3[%c0_1, %c0_2] : memref<2x128xf32, #tpu.memory_space<vmem>>, vector<2x128xf32>
    %8 = vector.extract_strided_slice %7 {offsets = [0, 0], sizes = [1, 128], strides = [1, 1]} : vector<2x128xf32> to vector<1x128xf32>
    %9 = vector.broadcast %5 : vector<23x1xf32> to vector<23x128xf32>
    %10 = vector.broadcast %8 : vector<1x128xf32> to vector<23x128xf32>
    %11 = arith.mulf %9, %10 : vector<23x128xf32>
    %12 = vector.extract_strided_slice %7 {offsets = [1, 0], sizes = [1, 128], strides = [1, 1]} : vector<2x128xf32> to vector<1x128xf32>
    %13 = vector.broadcast %6 : vector<23x1xf32> to vector<23x128xf32>
    %14 = vector.broadcast %12 : vector<1x128xf32> to vector<23x128xf32>
    %15 = arith.mulf %13, %14 : vector<23x128xf32>
    %16 = arith.addf %11, %15 : vector<23x128xf32>
    %c0_3 = arith.constant 0 : index
    %c0_4 = arith.constant 0 : index
    %17 = vector.load %arg4[%c0_3, %c0_4] : memref<1x128xf32, #tpu.memory_space<vmem>>, vector<1x128xf32>
    %18 = vector.broadcast %17 : vector<1x128xf32> to vector<23x128xf32>
    %19 = arith.addf %16, %18 : vector<23x128xf32>
    %cst = arith.constant 0.000000e+00 : f32
    %20 = vector.broadcast %cst : f32 to vector<23x128xf32>
    %21 = arith.maximumf %19, %20 : vector<23x128xf32>
    %c0_5 = arith.constant 0 : index
    %c0_6 = arith.constant 0 : index
    %c0_7 = arith.constant 0 : index
    %22 = vector.load %arg8[%c0_5, %c0_6, %c0_7] : memref<4x128x128xf32, #tpu.memory_space<vmem>>, vector<1x128x128xf32>
    %23 = vector.shape_cast %22 : vector<1x128x128xf32> to vector<128x128xf32>
    %cst_8 = arith.constant dense<0.000000e+00> : vector<23x128xf32>
    %24 = tpu.matmul %21, %23, %cst_8 {dimension_numbers = #tpu.dot_dimension_numbers<[1], [0], [0], [1], [0, 0, 1, 1], [], []>} : vector<23x128xf32>, vector<128x128xf32>, vector<23x128xf32> -> vector<23x128xf32>
    %c0_9 = arith.constant 0 : index
    %c0_10 = arith.constant 0 : index
    %c0_11 = arith.constant 0 : index
    %25 = vector.load %arg9[%c0_9, %c0_10, %c0_11] : memref<4x1x128xf32, #tpu.memory_space<vmem>>, vector<1x1x128xf32>
    %26 = vector.shape_cast %25 : vector<1x1x128xf32> to vector<1x128xf32>
    %27 = vector.broadcast %26 : vector<1x128xf32> to vector<23x128xf32>
    %28 = arith.addf %24, %27 : vector<23x128xf32>
    %cst_12 = arith.constant 0.000000e+00 : f32
    %29 = vector.broadcast %cst_12 : f32 to vector<23x128xf32>
    %30 = arith.maximumf %28, %29 : vector<23x128xf32>
    %31 = vector.extract_strided_slice %30 {offsets = [0, 0], sizes = [19, 128], strides = [1, 1]} : vector<23x128xf32> to vector<19x128xf32>
    %c0_13 = arith.constant 0 : index
    %c0_14 = arith.constant 0 : index
    %c0_15 = arith.constant 0 : index
    %32 = vector.load %arg5[%c0_13, %c0_14, %c0_15] : memref<3x128x128xf32, #tpu.memory_space<vmem>>, vector<1x128x128xf32>
    %33 = vector.shape_cast %32 : vector<1x128x128xf32> to vector<128x128xf32>
    %cst_16 = arith.constant dense<0.000000e+00> : vector<19x128xf32>
    %34 = tpu.matmul %31, %33, %cst_16 {dimension_numbers = #tpu.dot_dimension_numbers<[1], [0], [0], [1], [0, 0, 1, 1], [], []>} : vector<19x128xf32>, vector<128x128xf32>, vector<19x128xf32> -> vector<19x128xf32>
    %35 = vector.extract_strided_slice %30 {offsets = [4, 0], sizes = [19, 128], strides = [1, 1]} : vector<23x128xf32> to vector<19x128xf32>
    %c0_17 = arith.constant 0 : index
    %c0_18 = arith.constant 0 : index
    %c0_19 = arith.constant 0 : index
    %36 = vector.load %arg6[%c0_17, %c0_18, %c0_19] : memref<3x128x128xf32, #tpu.memory_space<vmem>>, vector<1x128x128xf32>
    %37 = vector.shape_cast %36 : vector<1x128x128xf32> to vector<128x128xf32>
    %cst_20 = arith.constant dense<0.000000e+00> : vector<19x128xf32>
    %38 = tpu.matmul %35, %37, %cst_20 {dimension_numbers = #tpu.dot_dimension_numbers<[1], [0], [0], [1], [0, 0, 1, 1], [], []>} : vector<19x128xf32>, vector<128x128xf32>, vector<19x128xf32> -> vector<19x128xf32>
    %39 = arith.addf %34, %38 : vector<19x128xf32>
    %c0_21 = arith.constant 0 : index
    %c0_22 = arith.constant 0 : index
    %c0_23 = arith.constant 0 : index
    %40 = vector.load %arg7[%c0_21, %c0_22, %c0_23] : memref<3x1x128xf32, #tpu.memory_space<vmem>>, vector<1x1x128xf32>
    %41 = vector.shape_cast %40 : vector<1x1x128xf32> to vector<1x128xf32>
    %42 = vector.broadcast %41 : vector<1x128xf32> to vector<19x128xf32>
    %43 = arith.addf %39, %42 : vector<19x128xf32>
    %cst_24 = arith.constant 0.000000e+00 : f32
    %44 = vector.broadcast %cst_24 : f32 to vector<19x128xf32>
    %45 = arith.maximumf %43, %44 : vector<19x128xf32>
    %c1 = arith.constant 1 : index
    %c0_25 = arith.constant 0 : index
    %c0_26 = arith.constant 0 : index
    %46 = vector.load %arg8[%c1, %c0_25, %c0_26] : memref<4x128x128xf32, #tpu.memory_space<vmem>>, vector<1x128x128xf32>
    %47 = vector.shape_cast %46 : vector<1x128x128xf32> to vector<128x128xf32>
    %cst_27 = arith.constant dense<0.000000e+00> : vector<19x128xf32>
    %48 = tpu.matmul %45, %47, %cst_27 {dimension_numbers = #tpu.dot_dimension_numbers<[1], [0], [0], [1], [0, 0, 1, 1], [], []>} : vector<19x128xf32>, vector<128x128xf32>, vector<19x128xf32> -> vector<19x128xf32>
    %c1_28 = arith.constant 1 : index
    %c0_29 = arith.constant 0 : index
    %c0_30 = arith.constant 0 : index
    %49 = vector.load %arg9[%c1_28, %c0_29, %c0_30] : memref<4x1x128xf32, #tpu.memory_space<vmem>>, vector<1x1x128xf32>
    %50 = vector.shape_cast %49 : vector<1x1x128xf32> to vector<1x128xf32>
    %51 = vector.broadcast %50 : vector<1x128xf32> to vector<19x128xf32>
    %52 = arith.addf %48, %51 : vector<19x128xf32>
    %cst_31 = arith.constant 0.000000e+00 : f32
    %53 = vector.broadcast %cst_31 : f32 to vector<19x128xf32>
    %54 = arith.maximumf %52, %53 : vector<19x128xf32>
    %55 = vector.extract_strided_slice %54 {offsets = [0, 0], sizes = [17, 128], strides = [1, 1]} : vector<19x128xf32> to vector<17x128xf32>
    %c1_32 = arith.constant 1 : index
    %c0_33 = arith.constant 0 : index
    %c0_34 = arith.constant 0 : index
    %56 = vector.load %arg5[%c1_32, %c0_33, %c0_34] : memref<3x128x128xf32, #tpu.memory_space<vmem>>, vector<1x128x128xf32>
    %57 = vector.shape_cast %56 : vector<1x128x128xf32> to vector<128x128xf32>
    %cst_35 = arith.constant dense<0.000000e+00> : vector<17x128xf32>
    %58 = tpu.matmul %55, %57, %cst_35 {dimension_numbers = #tpu.dot_dimension_numbers<[1], [0], [0], [1], [0, 0, 1, 1], [], []>} : vector<17x128xf32>, vector<128x128xf32>, vector<17x128xf32> -> vector<17x128xf32>
    %59 = vector.extract_strided_slice %54 {offsets = [2, 0], sizes = [17, 128], strides = [1, 1]} : vector<19x128xf32> to vector<17x128xf32>
    %c1_36 = arith.constant 1 : index
    %c0_37 = arith.constant 0 : index
    %c0_38 = arith.constant 0 : index
    %60 = vector.load %arg6[%c1_36, %c0_37, %c0_38] : memref<3x128x128xf32, #tpu.memory_space<vmem>>, vector<1x128x128xf32>
    %61 = vector.shape_cast %60 : vector<1x128x128xf32> to vector<128x128xf32>
    %cst_39 = arith.constant dense<0.000000e+00> : vector<17x128xf32>
    %62 = tpu.matmul %59, %61, %cst_39 {dimension_numbers = #tpu.dot_dimension_numbers<[1], [0], [0], [1], [0, 0, 1, 1], [], []>} : vector<17x128xf32>, vector<128x128xf32>, vector<17x128xf32> -> vector<17x128xf32>
    %63 = arith.addf %58, %62 : vector<17x128xf32>
    %c1_40 = arith.constant 1 : index
    %c0_41 = arith.constant 0 : index
    %c0_42 = arith.constant 0 : index
    %64 = vector.load %arg7[%c1_40, %c0_41, %c0_42] : memref<3x1x128xf32, #tpu.memory_space<vmem>>, vector<1x1x128xf32>
    %65 = vector.shape_cast %64 : vector<1x1x128xf32> to vector<1x128xf32>
    %66 = vector.broadcast %65 : vector<1x128xf32> to vector<17x128xf32>
    %67 = arith.addf %63, %66 : vector<17x128xf32>
    %cst_43 = arith.constant 0.000000e+00 : f32
    %68 = vector.broadcast %cst_43 : f32 to vector<17x128xf32>
    %69 = arith.maximumf %67, %68 : vector<17x128xf32>
    %c2 = arith.constant 2 : index
    %c0_44 = arith.constant 0 : index
    %c0_45 = arith.constant 0 : index
    %70 = vector.load %arg8[%c2, %c0_44, %c0_45] : memref<4x128x128xf32, #tpu.memory_space<vmem>>, vector<1x128x128xf32>
    %71 = vector.shape_cast %70 : vector<1x128x128xf32> to vector<128x128xf32>
    %cst_46 = arith.constant dense<0.000000e+00> : vector<17x128xf32>
    %72 = tpu.matmul %69, %71, %cst_46 {dimension_numbers = #tpu.dot_dimension_numbers<[1], [0], [0], [1], [0, 0, 1, 1], [], []>} : vector<17x128xf32>, vector<128x128xf32>, vector<17x128xf32> -> vector<17x128xf32>
    %c2_47 = arith.constant 2 : index
    %c0_48 = arith.constant 0 : index
    %c0_49 = arith.constant 0 : index
    %73 = vector.load %arg9[%c2_47, %c0_48, %c0_49] : memref<4x1x128xf32, #tpu.memory_space<vmem>>, vector<1x1x128xf32>
    %74 = vector.shape_cast %73 : vector<1x1x128xf32> to vector<1x128xf32>
    %75 = vector.broadcast %74 : vector<1x128xf32> to vector<17x128xf32>
    %76 = arith.addf %72, %75 : vector<17x128xf32>
    %cst_50 = arith.constant 0.000000e+00 : f32
    %77 = vector.broadcast %cst_50 : f32 to vector<17x128xf32>
    %78 = arith.maximumf %76, %77 : vector<17x128xf32>
    %79 = vector.extract_strided_slice %78 {offsets = [0, 0], sizes = [16, 128], strides = [1, 1]} : vector<17x128xf32> to vector<16x128xf32>
    %c2_51 = arith.constant 2 : index
    %c0_52 = arith.constant 0 : index
    %c0_53 = arith.constant 0 : index
    %80 = vector.load %arg5[%c2_51, %c0_52, %c0_53] : memref<3x128x128xf32, #tpu.memory_space<vmem>>, vector<1x128x128xf32>
    %81 = vector.shape_cast %80 : vector<1x128x128xf32> to vector<128x128xf32>
    %cst_54 = arith.constant dense<0.000000e+00> : vector<16x128xf32>
    %82 = tpu.matmul %79, %81, %cst_54 {dimension_numbers = #tpu.dot_dimension_numbers<[1], [0], [0], [1], [0, 0, 1, 1], [], []>} : vector<16x128xf32>, vector<128x128xf32>, vector<16x128xf32> -> vector<16x128xf32>
    %83 = vector.extract_strided_slice %78 {offsets = [1, 0], sizes = [16, 128], strides = [1, 1]} : vector<17x128xf32> to vector<16x128xf32>
    %c2_55 = arith.constant 2 : index
    %c0_56 = arith.constant 0 : index
    %c0_57 = arith.constant 0 : index
    %84 = vector.load %arg6[%c2_55, %c0_56, %c0_57] : memref<3x128x128xf32, #tpu.memory_space<vmem>>, vector<1x128x128xf32>
    %85 = vector.shape_cast %84 : vector<1x128x128xf32> to vector<128x128xf32>
    %cst_58 = arith.constant dense<0.000000e+00> : vector<16x128xf32>
    %86 = tpu.matmul %83, %85, %cst_58 {dimension_numbers = #tpu.dot_dimension_numbers<[1], [0], [0], [1], [0, 0, 1, 1], [], []>} : vector<16x128xf32>, vector<128x128xf32>, vector<16x128xf32> -> vector<16x128xf32>
    %87 = arith.addf %82, %86 : vector<16x128xf32>
    %c2_59 = arith.constant 2 : index
    %c0_60 = arith.constant 0 : index
    %c0_61 = arith.constant 0 : index
    %88 = vector.load %arg7[%c2_59, %c0_60, %c0_61] : memref<3x1x128xf32, #tpu.memory_space<vmem>>, vector<1x1x128xf32>
    %89 = vector.shape_cast %88 : vector<1x1x128xf32> to vector<1x128xf32>
    %90 = vector.broadcast %89 : vector<1x128xf32> to vector<16x128xf32>
    %91 = arith.addf %87, %90 : vector<16x128xf32>
    %cst_62 = arith.constant 0.000000e+00 : f32
    %92 = vector.broadcast %cst_62 : f32 to vector<16x128xf32>
    %93 = arith.maximumf %91, %92 : vector<16x128xf32>
    %c3 = arith.constant 3 : index
    %c0_63 = arith.constant 0 : index
    %c0_64 = arith.constant 0 : index
    %94 = vector.load %arg8[%c3, %c0_63, %c0_64] : memref<4x128x128xf32, #tpu.memory_space<vmem>>, vector<1x128x128xf32>
    %95 = vector.shape_cast %94 : vector<1x128x128xf32> to vector<128x128xf32>
    %cst_65 = arith.constant dense<0.000000e+00> : vector<16x128xf32>
    %96 = tpu.matmul %93, %95, %cst_65 {dimension_numbers = #tpu.dot_dimension_numbers<[1], [0], [0], [1], [0, 0, 1, 1], [], []>} : vector<16x128xf32>, vector<128x128xf32>, vector<16x128xf32> -> vector<16x128xf32>
    %c3_66 = arith.constant 3 : index
    %c0_67 = arith.constant 0 : index
    %c0_68 = arith.constant 0 : index
    %97 = vector.load %arg9[%c3_66, %c0_67, %c0_68] : memref<4x1x128xf32, #tpu.memory_space<vmem>>, vector<1x1x128xf32>
    %98 = vector.shape_cast %97 : vector<1x1x128xf32> to vector<1x128xf32>
    %99 = vector.broadcast %98 : vector<1x128xf32> to vector<16x128xf32>
    %100 = arith.addf %96, %99 : vector<16x128xf32>
    %cst_69 = arith.constant 0.000000e+00 : f32
    %101 = vector.broadcast %cst_69 : f32 to vector<16x128xf32>
    %102 = arith.maximumf %100, %101 : vector<16x128xf32>
    %c0_70 = arith.constant 0 : index
    %c0_71 = arith.constant 0 : index
    %103 = vector.load %arg10[%c0_70, %c0_71] : memref<128x128xf32, #tpu.memory_space<vmem>>, vector<128x128xf32>
    %cst_72 = arith.constant dense<0.000000e+00> : vector<16x128xf32>
    %104 = tpu.matmul %102, %103, %cst_72 {dimension_numbers = #tpu.dot_dimension_numbers<[1], [0], [0], [1], [0, 0, 1, 1], [], []>} : vector<16x128xf32>, vector<128x128xf32>, vector<16x128xf32> -> vector<16x128xf32>
    %c0_73 = arith.constant 0 : index
    %c0_74 = arith.constant 0 : index
    %105 = vector.load %arg11[%c0_73, %c0_74] : memref<1x128xf32, #tpu.memory_space<vmem>>, vector<1x128xf32>
    %106 = vector.broadcast %105 : vector<1x128xf32> to vector<16x128xf32>
    %107 = arith.addf %104, %106 : vector<16x128xf32>
    %cst_75 = arith.constant dense<0xFF800000> : vector<16xf32>
    %108 = vector.multi_reduction <maximumf>, %107, %cst_75 [1] : vector<16x128xf32> to vector<16xf32>
    %109 = vector.shape_cast %108 : vector<16xf32> to vector<16x1xf32>
    %110 = vector.broadcast %109 : vector<16x1xf32> to vector<16x128xf32>
    %111 = arith.subf %107, %110 : vector<16x128xf32>
    %112 = math.exp %111 : vector<16x128xf32>
    %cst_76 = arith.constant dense<0.000000e+00> : vector<16xf32>
    %113 = vector.multi_reduction <add>, %112, %cst_76 [1] : vector<16x128xf32> to vector<16xf32>
    %114 = vector.shape_cast %113 : vector<16xf32> to vector<16x1xf32>
    %115 = math.log %114 : vector<16x1xf32>
    %116 = vector.broadcast %115 : vector<16x1xf32> to vector<16x128xf32>
    %117 = arith.subf %111, %116 : vector<16x128xf32>
    %c0_77 = arith.constant 0 : index
    %c0_78 = arith.constant 0 : index
    %c0_79 = arith.constant 0 : index
    %118 = vector.load %arg12[%c0_77, %c0_78, %c0_79] : memref<1x16x128xf32, #tpu.memory_space<vmem>>, vector<1x16x128xf32>
    %119 = vector.shape_cast %118 : vector<1x16x128xf32> to vector<16x128xf32>
    %120 = vector.shape_cast %117 : vector<16x128xf32> to vector<1x16x128xf32>
    tpu.vector_store %arg12[%c0_77, %c0_78, %c0_79], %120 {strides = array<i32>} : memref<1x16x128xf32, #tpu.memory_space<vmem>>, vector<1x16x128xf32>,
    return
  }
  func.func @transform_0(%arg0: i32, %arg1: i32) -> (i32, i32, i32) {
    %c0_i32 = arith.constant 0 : i32
    %c0_i32_0 = arith.constant 0 : i32
    %c0_i32_1 = arith.constant 0 : i32
    return %arg0, %c0_i32, %c0_i32_0 : i32, i32, i32
  }
  func.func @transform_1(%arg0: i32, %arg1: i32) -> (i32, i32) {
    %c0_i32 = arith.constant 0 : i32
    %c0_i32_0 = arith.constant 0 : i32
    %c0_i32_1 = arith.constant 0 : i32
    return %c0_i32, %c0_i32_0 : i32, i32
  }
  func.func @transform_2(%arg0: i32, %arg1: i32) -> (i32, i32) {
    %c0_i32 = arith.constant 0 : i32
    %c0_i32_0 = arith.constant 0 : i32
    %c0_i32_1 = arith.constant 0 : i32
    return %c0_i32, %c0_i32_0 : i32, i32
  }
  func.func @transform_3(%arg0: i32, %arg1: i32) -> (i32, i32, i32) {
    %c0_i32 = arith.constant 0 : i32
    %c0_i32_0 = arith.constant 0 : i32
    %c0_i32_1 = arith.constant 0 : i32
    %c0_i32_2 = arith.constant 0 : i32
    return %c0_i32, %c0_i32_0, %c0_i32_1 : i32, i32, i32
  }
  func.func @transform_4(%arg0: i32, %arg1: i32) -> (i32, i32, i32) {
    %c0_i32 = arith.constant 0 : i32
    %c0_i32_0 = arith.constant 0 : i32
    %c0_i32_1 = arith.constant 0 : i32
    %c0_i32_2 = arith.constant 0 : i32
    return %c0_i32, %c0_i32_0, %c0_i32_1 : i32, i32, i32
  }
  func.func @transform_5(%arg0: i32, %arg1: i32) -> (i32, i32, i32) {
    %c0_i32 = arith.constant 0 : i32
    %c0_i32_0 = arith.constant 0 : i32
    %c0_i32_1 = arith.constant 0 : i32
    %c0_i32_2 = arith.constant 0 : i32
    return %c0_i32, %c0_i32_0, %c0_i32_1 : i32, i32, i32
  }
  func.func @transform_6(%arg0: i32, %arg1: i32) -> (i32, i32, i32) {
    %c0_i32 = arith.constant 0 : i32
    %c0_i32_0 = arith.constant 0 : i32
    %c0_i32_1 = arith.constant 0 : i32
    %c0_i32_2 = arith.constant 0 : i32
    return %c0_i32, %c0_i32_0, %c0_i32_1 : i32, i32, i32
  }
  func.func @transform_7(%arg0: i32, %arg1: i32) -> (i32, i32, i32) {
    %c0_i32 = arith.constant 0 : i32
    %c0_i32_0 = arith.constant 0 : i32
    %c0_i32_1 = arith.constant 0 : i32
    %c0_i32_2 = arith.constant 0 : i32
    return %c0_i32, %c0_i32_0, %c0_i32_1 : i32, i32, i32
  }
  func.func @transform_8(%arg0: i32, %arg1: i32) -> (i32, i32) {
    %c0_i32 = arith.constant 0 : i32
    %c0_i32_0 = arith.constant 0 : i32
    %c0_i32_1 = arith.constant 0 : i32
    return %c0_i32, %c0_i32_0 : i32, i32
  }
  func.func @transform_9(%arg0: i32, %arg1: i32) -> (i32, i32) {
    %c0_i32 = arith.constant 0 : i32
    %c0_i32_0 = arith.constant 0 : i32
    %c0_i32_1 = arith.constant 0 : i32
    return %c0_i32, %c0_i32_0 : i32, i32
  }
  func.func @transform_10(%arg0: i32, %arg1: i32) -> (i32, i32, i32) {
    %c0_i32 = arith.constant 0 : i32
    %c0_i32_0 = arith.constant 0 : i32
    return %arg0, %arg1, %c0_i32 : i32, i32, i32
  }
}

module attributes {stable_mosaic.version = 11 : i64} {
  func.func @_fftnet_fused_kernel(%arg0: i32, %arg1: i32, %arg2: memref<1x47x1xf32, #tpu.memory_space<vmem>>, %arg3: memref<2x128xf32, #tpu.memory_space<vmem>>, %arg4: memref<1x128xf32, #tpu.memory_space<vmem>>, %arg5: memref<3x128x128xf32, #tpu.memory_space<vmem>>, %arg6: memref<3x128x128xf32, #tpu.memory_space<vmem>>, %arg7: memref<3x1x128xf32, #tpu.memory_space<vmem>>, %arg8: memref<4x128x128xf32, #tpu.memory_space<vmem>>, %arg9: memref<4x1x128xf32, #tpu.memory_space<vmem>>, %arg10: memref<128x128xf32, #tpu.memory_space<vmem>>, %arg11: memref<1x128xf32, #tpu.memory_space<vmem>>, %arg12: memref<1x16x128xf32, #tpu.memory_space<vmem>>) attributes {dimension_semantics = [#tpu.dimension_semantics<parallel>, #tpu.dimension_semantics<parallel>], iteration_bounds = array<i64: 2, 2>, scalar_prefetch = 0 : i64, scratch_operands = 0 : i64, tpu.core_type = #tpu.core_type<tc>, window_params = [{transform_indices = @transform_0, window_bounds = array<i64: 1, 47, 1>}, {pipeline_mode = #tpu.pipeline_mode<synchronous>, transform_indices = @transform_1, window_bounds = array<i64: 2, 128>}, {pipeline_mode = #tpu.pipeline_mode<synchronous>, transform_indices = @transform_2, window_bounds = array<i64: 1, 128>}, {pipeline_mode = #tpu.pipeline_mode<synchronous>, transform_indices = @transform_3, window_bounds = array<i64: 3, 128, 128>}, {pipeline_mode = #tpu.pipeline_mode<synchronous>, transform_indices = @transform_4, window_bounds = array<i64: 3, 128, 128>}, {pipeline_mode = #tpu.pipeline_mode<synchronous>, transform_indices = @transform_5, window_bounds = array<i64: 3, 1, 128>}, {pipeline_mode = #tpu.pipeline_mode<synchronous>, transform_indices = @transform_6, window_bounds = array<i64: 4, 128, 128>}, {pipeline_mode = #tpu.pipeline_mode<synchronous>, transform_indices = @transform_7, window_bounds = array<i64: 4, 1, 128>}, {pipeline_mode = #tpu.pipeline_mode<synchronous>, transform_indices = @transform_8, window_bounds = array<i64: 128, 128>}, {pipeline_mode = #tpu.pipeline_mode<synchronous>, transform_indices = @transform_9, window_bounds = array<i64: 1, 128>}, {transform_indices = @transform_10, window_bounds = array<i64: 1, 16, 128>}]} {
    %c16_i32 = arith.constant 16 : i32
    %0 = arith.muli %arg1, %c16_i32 : i32
    %1 = tpu.assume_multiple %0, 8 : i32
    %c0 = arith.constant 0 : index
    %2 = arith.index_cast %1 : i32 to index
    %c0_0 = arith.constant 0 : index
    %3 = vector.load %arg2[%c0, %2, %c0_0] : memref<1x47x1xf32, #tpu.memory_space<vmem>>, vector<1x31x1xf32>
    %4 = vector.shape_cast %3 : vector<1x31x1xf32> to vector<31x1xf32>
    %5 = vector.extract_strided_slice %4 {offsets = [0, 0], sizes = [23, 1], strides = [1, 1]} : vector<31x1xf32> to vector<23x1xf32>
    %6 = vector.extract_strided_slice %4 {offsets = [8, 0], sizes = [23, 1], strides = [1, 1]} : vector<31x1xf32> to vector<23x1xf32>
    %c0_1 = arith.constant 0 : index
    %c0_2 = arith.constant 0 : index
    %7 = vector.load %arg3[%c0_1, %c0_2] : memref<2x128xf32, #tpu.memory_space<vmem>>, vector<2x128xf32>
    %8 = vector.extract_strided_slice %7 {offsets = [0, 0], sizes = [1, 128], strides = [1, 1]} : vector<2x128xf32> to vector<1x128xf32>
    %9 = vector.broadcast %5 : vector<23x1xf32> to vector<23x128xf32>
    %10 = vector.broadcast %8 : vector<1x128xf32> to vector<23x128xf32>
    %11 = arith.mulf %9, %10 : vector<23x128xf32>
    %12 = vector.extract_strided_slice %7 {offsets = [1, 0], sizes = [1, 128], strides = [1, 1]} : vector<2x128xf32> to vector<1x128xf32>
    %13 = vector.broadcast %6 : vector<23x1xf32> to vector<23x128xf32>
    %14 = vector.broadcast %12 : vector<1x128xf32> to vector<23x128xf32>
    %15 = arith.mulf %13, %14 : vector<23x128xf32>
    %16 = arith.addf %11, %15 : vector<23x128xf32>
    %c0_3 = arith.constant 0 : index
    %c0_4 = arith.constant 0 : index
    %17 = vector.load %arg4[%c0_3, %c0_4] : memref<1x128xf32, #tpu.memory_space<vmem>>, vector<1x128xf32>
    %18 = vector.broadcast %17 : vector<1x128xf32> to vector<23x128xf32>
    %19 = arith.addf %16, %18 : vector<23x128xf32>
    %cst = arith.constant 0.000000e+00 : f32
    %20 = vector.broadcast %cst : f32 to vector<23x128xf32>
    %21 = arith.maximumf %19, %20 : vector<23x128xf32>
    %c0_5 = arith.constant 0 : index
    %c0_6 = arith.constant 0 : index
    %c0_7 = arith.constant 0 : index
    %22 = vector.load %arg8[%c0_5, %c0_6, %c0_7] : memref<4x128x128xf32, #tpu.memory_space<vmem>>, vector<1x128x128xf32>
    %23 = vector.shape_cast %22 : vector<1x128x128xf32> to vector<128x128xf32>
    %cst_8 = arith.constant dense<0.000000e+00> : vector<23x128xf32>
    %24 = tpu.matmul %21, %23, %cst_8 {dimension_numbers = #tpu.dot_dimension_numbers<[1], [0], [0], [1], [0, 0, 1, 1], [], []>} : vector<23x128xf32>, vector<128x128xf32>, vector<23x128xf32> -> vector<23x128xf32>
    %c0_9 = arith.constant 0 : index
    %c0_10 = arith.constant 0 : index
    %c0_11 = arith.constant 0 : index
    %25 = vector.load %arg9[%c0_9, %c0_10, %c0_11] : memref<4x1x128xf32, #tpu.memory_space<vmem>>, vector<1x1x128xf32>
    %26 = vector.shape_cast %25 : vector<1x1x128xf32> to vector<1x128xf32>
    %27 = vector.broadcast %26 : vector<1x128xf32> to vector<23x128xf32>
    %28 = arith.addf %24, %27 : vector<23x128xf32>
    %cst_12 = arith.constant 0.000000e+00 : f32
    %29 = vector.broadcast %cst_12 : f32 to vector<23x128xf32>
    %30 = arith.maximumf %28, %29 : vector<23x128xf32>
    %31 = vector.extract_strided_slice %30 {offsets = [0, 0], sizes = [19, 128], strides = [1, 1]} : vector<23x128xf32> to vector<19x128xf32>
    %c0_13 = arith.constant 0 : index
    %c0_14 = arith.constant 0 : index
    %c0_15 = arith.constant 0 : index
    %32 = vector.load %arg5[%c0_13, %c0_14, %c0_15] : memref<3x128x128xf32, #tpu.memory_space<vmem>>, vector<1x128x128xf32>
    %33 = vector.shape_cast %32 : vector<1x128x128xf32> to vector<128x128xf32>
    %cst_16 = arith.constant dense<0.000000e+00> : vector<19x128xf32>
    %34 = tpu.matmul %31, %33, %cst_16 {dimension_numbers = #tpu.dot_dimension_numbers<[1], [0], [0], [1], [0, 0, 1, 1], [], []>} : vector<19x128xf32>, vector<128x128xf32>, vector<19x128xf32> -> vector<19x128xf32>
    %35 = vector.extract_strided_slice %30 {offsets = [4, 0], sizes = [19, 128], strides = [1, 1]} : vector<23x128xf32> to vector<19x128xf32>
    %c0_17 = arith.constant 0 : index
    %c0_18 = arith.constant 0 : index
    %c0_19 = arith.constant 0 : index
    %36 = vector.load %arg6[%c0_17, %c0_18, %c0_19] : memref<3x128x128xf32, #tpu.memory_space<vmem>>, vector<1x128x128xf32>
    %37 = vector.shape_cast %36 : vector<1x128x128xf32> to vector<128x128xf32>
    %cst_20 = arith.constant dense<0.000000e+00> : vector<19x128xf32>
    %38 = tpu.matmul %35, %37, %cst_20 {dimension_numbers = #tpu.dot_dimension_numbers<[1], [0], [0], [1], [0, 0, 1, 1], [], []>} : vector<19x128xf32>, vector<128x128xf32>, vector<19x128xf32> -> vector<19x128xf32>
    %39 = arith.addf %34, %38 : vector<19x128xf32>
    %c0_21 = arith.constant 0 : index
    %c0_22 = arith.constant 0 : index
    %c0_23 = arith.constant 0 : index
    %40 = vector.load %arg7[%c0_21, %c0_22, %c0_23] : memref<3x1x128xf32, #tpu.memory_space<vmem>>, vector<1x1x128xf32>
    %41 = vector.shape_cast %40 : vector<1x1x128xf32> to vector<1x128xf32>
    %42 = vector.broadcast %41 : vector<1x128xf32> to vector<19x128xf32>
    %43 = arith.addf %39, %42 : vector<19x128xf32>
    %cst_24 = arith.constant 0.000000e+00 : f32
    %44 = vector.broadcast %cst_24 : f32 to vector<19x128xf32>
    %45 = arith.maximumf %43, %44 : vector<19x128xf32>
    %c1 = arith.constant 1 : index
    %c0_25 = arith.constant 0 : index
    %c0_26 = arith.constant 0 : index
    %46 = vector.load %arg8[%c1, %c0_25, %c0_26] : memref<4x128x128xf32, #tpu.memory_space<vmem>>, vector<1x128x128xf32>
    %47 = vector.shape_cast %46 : vector<1x128x128xf32> to vector<128x128xf32>
    %cst_27 = arith.constant dense<0.000000e+00> : vector<19x128xf32>
    %48 = tpu.matmul %45, %47, %cst_27 {dimension_numbers = #tpu.dot_dimension_numbers<[1], [0], [0], [1], [0, 0, 1, 1], [], []>} : vector<19x128xf32>, vector<128x128xf32>, vector<19x128xf32> -> vector<19x128xf32>
    %c1_28 = arith.constant 1 : index
    %c0_29 = arith.constant 0 : index
    %c0_30 = arith.constant 0 : index
    %49 = vector.load %arg9[%c1_28, %c0_29, %c0_30] : memref<4x1x128xf32, #tpu.memory_space<vmem>>, vector<1x1x128xf32>
    %50 = vector.shape_cast %49 : vector<1x1x128xf32> to vector<1x128xf32>
    %51 = vector.broadcast %50 : vector<1x128xf32> to vector<19x128xf32>
    %52 = arith.addf %48, %51 : vector<19x128xf32>
    %cst_31 = arith.constant 0.000000e+00 : f32
    %53 = vector.broadcast %cst_31 : f32 to vector<19x128xf32>
    %54 = arith.maximumf %52, %53 : vector<19x128xf32>
    %55 = vector.extract_strided_slice %54 {offsets = [0, 0], sizes = [17, 128], strides = [1, 1]} : vector<19x128xf32> to vector<17x128xf32>
    %c1_32 = arith.constant 1 : index
    %c0_33 = arith.constant 0 : index
    %c0_34 = arith.constant 0 : index
    %56 = vector.load %arg5[%c1_32, %c0_33, %c0_34] : memref<3x128x128xf32, #tpu.memory_space<vmem>>, vector<1x128x128xf32>
    %57 = vector.shape_cast %56 : vector<1x128x128xf32> to vector<128x128xf32>
    %cst_35 = arith.constant dense<0.000000e+00> : vector<17x128xf32>
    %58 = tpu.matmul %55, %57, %cst_35 {dimension_numbers = #tpu.dot_dimension_numbers<[1], [0], [0], [1], [0, 0, 1, 1], [], []>} : vector<17x128xf32>, vector<128x128xf32>, vector<17x128xf32> -> vector<17x128xf32>
    %59 = vector.extract_strided_slice %54 {offsets = [2, 0], sizes = [17, 128], strides = [1, 1]} : vector<19x128xf32> to vector<17x128xf32>
    %c1_36 = arith.constant 1 : index
    %c0_37 = arith.constant 0 : index
    %c0_38 = arith.constant 0 : index
    %60 = vector.load %arg6[%c1_36, %c0_37, %c0_38] : memref<3x128x128xf32, #tpu.memory_space<vmem>>, vector<1x128x128xf32>
    %61 = vector.shape_cast %60 : vector<1x128x128xf32> to vector<128x128xf32>
    %cst_39 = arith.constant dense<0.000000e+00> : vector<17x128xf32>
    %62 = tpu.matmul %59, %61, %cst_39 {dimension_numbers = #tpu.dot_dimension_numbers<[1], [0], [0], [1], [0, 0, 1, 1], [], []>} : vector<17x128xf32>, vector<128x128xf32>, vector<17x128xf32> -> vector<17x128xf32>
    %63 = arith.addf %58, %62 : vector<17x128xf32>
    %c1_40 = arith.constant 1 : index
    %c0_41 = arith.constant 0 : index
    %c0_42 = arith.constant 0 : index
    %64 = vector.load %arg7[%c1_40, %c0_41, %c0_42] : memref<3x1x128xf32, #tpu.memory_space<vmem>>, vector<1x1x128xf32>
    %65 = vector.shape_cast %64 : vector<1x1x128xf32> to vector<1x128xf32>
    %66 = vector.broadcast %65 : vector<1x128xf32> to vector<17x128xf32>
    %67 = arith.addf %63, %66 : vector<17x128xf32>
    %cst_43 = arith.constant 0.000000e+00 : f32
    %68 = vector.broadcast %cst_43 : f32 to vector<17x128xf32>
    %69 = arith.maximumf %67, %68 : vector<17x128xf32>
    %c2 = arith.constant 2 : index
    %c0_44 = arith.constant 0 : index
    %c0_45 = arith.constant 0 : index
    %70 = vector.load %arg8[%c2, %c0_44, %c0_45] : memref<4x128x128xf32, #tpu.memory_space<vmem>>, vector<1x128x128xf32>
    %71 = vector.shape_cast %70 : vector<1x128x128xf32> to vector<128x128xf32>
    %cst_46 = arith.constant dense<0.000000e+00> : vector<17x128xf32>
    %72 = tpu.matmul %69, %71, %cst_46 {dimension_numbers = #tpu.dot_dimension_numbers<[1], [0], [0], [1], [0, 0, 1, 1], [], []>} : vector<17x128xf32>, vector<128x128xf32>, vector<17x128xf32> -> vector<17x128xf32>
    %c2_47 = arith.constant 2 : index
    %c0_48 = arith.constant 0 : index
    %c0_49 = arith.constant 0 : index
    %73 = vector.load %arg9[%c2_47, %c0_48, %c0_49] : memref<4x1x128xf32, #tpu.memory_space<vmem>>, vector<1x1x128xf32>
    %74 = vector.shape_cast %73 : vector<1x1x128xf32> to vector<1x128xf32>
    %75 = vector.broadcast %74 : vector<1x128xf32> to vector<17x128xf32>
    %76 = arith.addf %72, %75 : vector<17x128xf32>
    %cst_50 = arith.constant 0.000000e+00 : f32
    %77 = vector.broadcast %cst_50 : f32 to vector<17x128xf32>
    %78 = arith.maximumf %76, %77 : vector<17x128xf32>
    %79 = vector.extract_strided_slice %78 {offsets = [0, 0], sizes = [16, 128], strides = [1, 1]} : vector<17x128xf32> to vector<16x128xf32>
    %c2_51 = arith.constant 2 : index
    %c0_52 = arith.constant 0 : index
    %c0_53 = arith.constant 0 : index
    %80 = vector.load %arg5[%c2_51, %c0_52, %c0_53] : memref<3x128x128xf32, #tpu.memory_space<vmem>>, vector<1x128x128xf32>
    %81 = vector.shape_cast %80 : vector<1x128x128xf32> to vector<128x128xf32>
    %cst_54 = arith.constant dense<0.000000e+00> : vector<16x128xf32>
    %82 = tpu.matmul %79, %81, %cst_54 {dimension_numbers = #tpu.dot_dimension_numbers<[1], [0], [0], [1], [0, 0, 1, 1], [], []>} : vector<16x128xf32>, vector<128x128xf32>, vector<16x128xf32> -> vector<16x128xf32>
    %83 = vector.extract_strided_slice %78 {offsets = [1, 0], sizes = [16, 128], strides = [1, 1]} : vector<17x128xf32> to vector<16x128xf32>
    %c2_55 = arith.constant 2 : index
    %c0_56 = arith.constant 0 : index
    %c0_57 = arith.constant 0 : index
    %84 = vector.load %arg6[%c2_55, %c0_56, %c0_57] : memref<3x128x128xf32, #tpu.memory_space<vmem>>, vector<1x128x128xf32>
    %85 = vector.shape_cast %84 : vector<1x128x128xf32> to vector<128x128xf32>
    %cst_58 = arith.constant dense<0.000000e+00> : vector<16x128xf32>
    %86 = tpu.matmul %83, %85, %cst_58 {dimension_numbers = #tpu.dot_dimension_numbers<[1], [0], [0], [1], [0, 0, 1, 1], [], []>} : vector<16x128xf32>, vector<128x128xf32>, vector<16x128xf32> -> vector<16x128xf32>
    %87 = arith.addf %82, %86 : vector<16x128xf32>
    %c2_59 = arith.constant 2 : index
    %c0_60 = arith.constant 0 : index
    %c0_61 = arith.constant 0 : index
    %88 = vector.load %arg7[%c2_59, %c0_60, %c0_61] : memref<3x1x128xf32, #tpu.memory_space<vmem>>, vector<1x1x128xf32>
    %89 = vector.shape_cast %88 : vector<1x1x128xf32> to vector<1x128xf32>
    %90 = vector.broadcast %89 : vector<1x128xf32> to vector<16x128xf32>
    %91 = arith.addf %87, %90 : vector<16x128xf32>
    %cst_62 = arith.constant 0.000000e+00 : f32
    %92 = vector.broadcast %cst_62 : f32 to vector<16x128xf32>
    %93 = arith.maximumf %91, %92 : vector<16x128xf32>
    %c3 = arith.constant 3 : index
    %c0_63 = arith.constant 0 : index
    %c0_64 = arith.constant 0 : index
    %94 = vector.load %arg8[%c3, %c0_63, %c0_64] : memref<4x128x128xf32, #tpu.memory_space<vmem>>, vector<1x128x128xf32>
    %95 = vector.shape_cast %94 : vector<1x128x128xf32> to vector<128x128xf32>
    %cst_65 = arith.constant dense<0.000000e+00> : vector<16x128xf32>
    %96 = tpu.matmul %93, %95, %cst_65 {dimension_numbers = #tpu.dot_dimension_numbers<[1], [0], [0], [1], [0, 0, 1, 1], [], []>} : vector<16x128xf32>, vector<128x128xf32>, vector<16x128xf32> -> vector<16x128xf32>
    %c3_66 = arith.constant 3 : index
    %c0_67 = arith.constant 0 : index
    %c0_68 = arith.constant 0 : index
    %97 = vector.load %arg9[%c3_66, %c0_67, %c0_68] : memref<4x1x128xf32, #tpu.memory_space<vmem>>, vector<1x1x128xf32>
    %98 = vector.shape_cast %97 : vector<1x1x128xf32> to vector<1x128xf32>
    %99 = vector.broadcast %98 : vector<1x128xf32> to vector<16x128xf32>
    %100 = arith.addf %96, %99 : vector<16x128xf32>
    %cst_69 = arith.constant 0.000000e+00 : f32
    %101 = vector.broadcast %cst_69 : f32 to vector<16x128xf32>
    %102 = arith.maximumf %100, %101 : vector<16x128xf32>
    %c0_70 = arith.constant 0 : index
    %c0_71 = arith.constant 0 : index
    %103 = vector.load %arg10[%c0_70, %c0_71] : memref<128x128xf32, #tpu.memory_space<vmem>>, vector<128x128xf32>
    %cst_72 = arith.constant dense<0.000000e+00> : vector<16x128xf32>
    %104 = tpu.matmul %102, %103, %cst_72 {dimension_numbers = #tpu.dot_dimension_numbers<[1], [0], [0], [1], [0, 0, 1, 1], [], []>} : vector<16x128xf32>, vector<128x128xf32>, vector<16x128xf32> -> vector<16x128xf32>
    %c0_73 = arith.constant 0 : index
    %c0_74 = arith.constant 0 : index
    %105 = vector.load %arg11[%c0_73, %c0_74] : memref<1x128xf32, #tpu.memory_space<vmem>>, vector<1x128xf32>
    %106 = vector.broadcast %105 : vector<1x128xf32> to vector<16x128xf32>
    %107 = arith.addf %104, %106 : vector<16x128xf32>
    %cst_75 = arith.constant dense<0xFF800000> : vector<16xf32>
    %108 = vector.multi_reduction <maximumf>, %107, %cst_75 [1] : vector<16x128xf32> to vector<16xf32>
    %109 = vector.shape_cast %108 : vector<16xf32> to vector<16x1xf32>
    %110 = vector.broadcast %109 : vector<16x1xf32> to vector<16x128xf32>
    %111 = arith.subf %107, %110 : vector<16x128xf32>
    %112 = math.exp %111 : vector<16x128xf32>
    %cst_76 = arith.constant dense<0.000000e+00> : vector<16xf32>
    %113 = vector.multi_reduction <add>, %112, %cst_76 [1] : vector<16x128xf32> to vector<16xf32>
    %114 = vector.shape_cast %113 : vector<16xf32> to vector<16x1xf32>
    %115 = math.log %114 : vector<16x1xf32>
    %116 = vector.broadcast %115 : vector<16x1xf32> to vector<16x128xf32>
    %117 = arith.subf %111, %116 : vector<16x128xf32>
    %c0_77 = arith.constant 0 : index
    %c0_78 = arith.constant 0 : index
    %c0_79 = arith.constant 0 : index
    %118 = vector.load %arg12[%c0_77, %c0_78, %c0_79] : memref<1x16x128xf32, #tpu.memory_space<vmem>>, vector<1x16x128xf32>
    %119 = vector.shape_cast %118 : vector<1x16x128xf32> to vector<16x128xf32>
    %120 = vector.shape_cast %117 : vector<16x128xf32> to vector<1x16x128xf32>
    tpu.vector_store %arg12[%c0_77, %c0_78, %c0_79], %120 {strides = array<i32>} : memref<1x16x128xf32, #tpu.memory_space<vmem>>, vector<1x16x128xf32>,
    return
  }
  func.func @transform_0(%arg0: i32, %arg1: i32) -> (i32, i32, i32) {
    %c0_i32 = arith.constant 0 : i32
    %c0_i32_0 = arith.constant 0 : i32
    %c0_i32_1 = arith.constant 0 : i32
    return %arg0, %c0_i32, %c0_i32_0 : i32, i32, i32
  }
  func.func @transform_1(%arg0: i32, %arg1: i32) -> (i32, i32) {
    %c0_i32 = arith.constant 0 : i32
    %c0_i32_0 = arith.constant 0 : i32
    %c0_i32_1 = arith.constant 0 : i32
    return %c0_i32, %c0_i32_0 : i32, i32
  }
  func.func @transform_2(%arg0: i32, %arg1: i32) -> (i32, i32) {
    %c0_i32 = arith.constant 0 : i32
    %c0_i32_0 = arith.constant 0 : i32
    %c0_i32_1 = arith.constant 0 : i32
    return %c0_i32, %c0_i32_0 : i32, i32
  }
  func.func @transform_3(%arg0: i32, %arg1: i32) -> (i32, i32, i32) {
    %c0_i32 = arith.constant 0 : i32
    %c0_i32_0 = arith.constant 0 : i32
    %c0_i32_1 = arith.constant 0 : i32
    %c0_i32_2 = arith.constant 0 : i32
    return %c0_i32, %c0_i32_0, %c0_i32_1 : i32, i32, i32
  }
  func.func @transform_4(%arg0: i32, %arg1: i32) -> (i32, i32, i32) {
    %c0_i32 = arith.constant 0 : i32
    %c0_i32_0 = arith.constant 0 : i32
    %c0_i32_1 = arith.constant 0 : i32
    %c0_i32_2 = arith.constant 0 : i32
    return %c0_i32, %c0_i32_0, %c0_i32_1 : i32, i32, i32
  }
  func.func @transform_5(%arg0: i32, %arg1: i32) -> (i32, i32, i32) {
    %c0_i32 = arith.constant 0 : i32
    %c0_i32_0 = arith.constant 0 : i32
    %c0_i32_1 = arith.constant 0 : i32
    %c0_i32_2 = arith.constant 0 : i32
    return %c0_i32, %c0_i32_0, %c0_i32_1 : i32, i32, i32
  }
  func.func @transform_6(%arg0: i32, %arg1: i32) -> (i32, i32, i32) {
    %c0_i32 = arith.constant 0 : i32
    %c0_i32_0 = arith.constant 0 : i32
    %c0_i32_1 = arith.constant 0 : i32
    %c0_i32_2 = arith.constant 0 : i32
    return %c0_i32, %c0_i32_0, %c0_i32_1 : i32, i32, i32
  }
  func.func @transform_7(%arg0: i32, %arg1: i32) -> (i32, i32, i32) {
    %c0_i32 = arith.constant 0 : i32
    %c0_i32_0 = arith.constant 0 : i32
    %c0_i32_1 = arith.constant 0 : i32
    %c0_i32_2 = arith.constant 0 : i32
    return %c0_i32, %c0_i32_0, %c0_i32_1 : i32, i32, i32
  }
  func.func @transform_8(%arg0: i32, %arg1: i32) -> (i32, i32) {
    %c0_i32 = arith.constant 0 : i32
    %c0_i32_0 = arith.constant 0 : i32
    %c0_i32_1 = arith.constant 0 : i32
    return %c0_i32, %c0_i32_0 : i32, i32
  }
  func.func @transform_9(%arg0: i32, %arg1: i32) -> (i32, i32) {
    %c0_i32 = arith.constant 0 : i32
    %c0_i32_0 = arith.constant 0 : i32
    %c0_i32_1 = arith.constant 0 : i32
    return %c0_i32, %c0_i32_0 : i32, i32
  }
  func.func @transform_10(%arg0: i32, %arg1: i32) -> (i32, i32, i32) {
    %c0_i32 = arith.constant 0 : i32
    %c0_i32_0 = arith.constant 0 : i32
    return %arg0, %arg1, %c0_i32 : i32, i32, i32
  }
}

</mosaic_0001>

<llo_original>
// kernel: tpu_custom_call.1
$region0: #{tpu_custom_call.1}
  #allocation0 [shape = 'u32[]', space=smem, size = 0x4, offset = 0x4, fixed_abs, tag = 'smem constant byte address 0x4 - core index']
  #allocation1 [shape = 'u32[144,128]{1,0:T(1,128)}', space=vmem, size = 0x12000, scoped, tag = 'internal scratch']
  %s0 = inlined_call_operand.vmem [shape: f32[2,47,1], index: 0, kind: input, shape index: {}]
  %s1 = inlined_call_operand.vmem [shape: f32[2,128], index: 1, kind: input, shape index: {}]
  %s2 = inlined_call_operand.vmem [shape: f32[1,128], index: 2, kind: input, shape index: {}]
  %s3 = inlined_call_operand.hbm [shape: f32[3,128,128], index: 3, kind: input, shape index: {}]
  %s4 = inlined_call_operand.hbm [shape: f32[3,128,128], index: 4, kind: input, shape index: {}]
  %s5 = inlined_call_operand.vmem [shape: f32[3,1,128], index: 5, kind: input, shape index: {}]
  %s6 = inlined_call_operand.hbm [shape: f32[4,128,128], index: 6, kind: input, shape index: {}]
  %s7 = inlined_call_operand.vmem [shape: f32[4,1,128], index: 7, kind: input, shape index: {}]
  %s8 = inlined_call_operand.hbm [shape: f32[128,128], index: 8, kind: input, shape index: {}]
  %s9 = inlined_call_operand.vmem [shape: f32[1,128], index: 9, kind: input, shape index: {}]
  %s10 = inlined_call_operand.hbm [shape: f32[2,32,128], index: 10, kind: output, shape index: {}]
  %s11 = sld [smem:[#allocation0]]
  $region89: #{tpu_custom_call.1} parent=0
    _
  %s13 = ssub.s32 1, %s11
  %s14 = scalar_select 0, %s13, %s11
  $region1: #{tpu_custom_call.1} parent=0
    #allocation2 [shape = 'u8[196608]{0}', space=vmem, size = 0x30000, scoped, tag = 'input window, operand 3, single buffered']
    #allocation3 [shape = 's32[2]{0}', space=sflag, size = 0x8, scoped, tag = 'scoped memory for tpu_custom_call.1']
    #allocation4 [shape = 's32[2]{0}', space=sflag, size = 0x8, scoped, tag = 'scoped memory for tpu_custom_call.1']
    #allocation5 [shape = 'u8[196608]{0}', space=vmem, size = 0x30000, scoped, tag = 'input window, operand 4, single buffered']
    #allocation6 [shape = 's32[1]{0}', space=sflag, size = 0x4, scoped, tag = 'scoped memory for tpu_custom_call.1']
    #allocation7 [shape = 'u8[262144]{0}', space=vmem, size = 0x40000, scoped, tag = 'input window, operand 6, single buffered']
    #allocation8 [shape = 'u8[65536]{0}', space=vmem, size = 0x10000, scoped, tag = 'input window, operand 8, single buffered']
    #allocation9 [shape = 's32[1]{0}', space=sflag, size = 0x4, scoped, tag = 'scoped memory for tpu_custom_call.1']
    #allocation10 [shape = 'u8[16384]{0}', space=vmem, size = 0x4000, scoped, tag = 'output window, operand 0']
    %15 = vsyncpa [#allocation3], 0
    %16 = vsyncpa [#allocation6], 0
    %17 = vsyncpa [#allocation9], 0
    %18 = vsyncpa [#allocation4], 0
    %s19 = scalar_lea.sflag [#allocation4], 1
    %20 = vsyncpa %s19, 0
    loop: start=0, step=1, limit=6
    $region2: #{tpu_custom_call.1} parent=1 // loop_pre_header
      _
    $region3: #{tpu_custom_call.1} parent=1 // loop_header
      %s22 = sphi 0, %s26
      %p23 = scmp.ge.s32.totalorder %s22, 6
      %s29 = sphi 0, %s41
      %s30 = sphi 0, %s37
      %s31 = sphi 0, %s29
      %s32 = sphi 0, %s30
      %s33 = sphi 0, %s31
      %s34 = sphi 0, %s32
      %s44 = sphi 0, %s46
      %s47 = sphi 0, %s44
      %s48 = sphi 0, %s47
      %s64 = sphi 0, %s48
      %s68 = sphi 0, %s68
      %s70 = sphi 0, %s68
      %s71 = sphi 0, %s70
      %s85 = sphi 0, %s71
      %s89 = sphi 0, %s89
      %s91 = sphi 0, %s89
      %s92 = sphi 0, %s91
      %s106 = sphi 0, %s92
      %s110 = sphi 0, %s110
      %s112 = sphi 0, %s110
      %s113 = sphi 0, %s112
      %s127 = sphi 0, %s113
      %s131 = sphi 0, %s131
      %s133 = sphi 0, %s131
      %s134 = sphi 0, %s133
      %s148 = sphi 0, %s134
      %s152 = sphi 0, %s152
      %s154 = sphi 0, %s152
      %s155 = sphi 0, %s154
      %s169 = sphi 0, %s155
      %s173 = sphi 0, %s173
      %s175 = sphi 0, %s173
      %s176 = sphi 0, %s175
      %s190 = sphi 0, %s176
      %s194 = sphi 0, %s194
      %s196 = sphi 0, %s194
      %s197 = sphi 0, %s196
      %s211 = sphi 0, %s197
      %s215 = sphi 0, %s215
      %s217 = sphi 0, %s215
      %s218 = sphi 0, %s217
      %s232 = sphi 0, %s218
      %s236 = sphi 0, %s236
      %s238 = sphi 0, %s236
      %s239 = sphi 0, %s238
      %s253 = sphi 0, %s239
      %s261 = sphi 0, %s263
      %s264 = sphi 0, %s261
      %s265 = sphi 0, %s264
      %s281 = sphi 0, %s265
    $region4: #{tpu_custom_call.1} parent=1 // loop_header_branch
      %25 = sbr.rel (%p23) target = $region8
    $region5: #{tpu_custom_call.1} parent=1 // loop_body
      %s27 = ssub.s32 %s22, 1
      %s28 = ssub.s32 %s22, 2
      %s35 = sadd.s32 1, %s30
      %p36 = scmp.ge.s32.totalorder %s35, 2
      %s37 = scalar_select %p36, 0, %s35
      %s38 = sadd.s32 1, %s29
      %s39 = scalar_select %p36, %s38, %s29
      %p40 = scmp.ge.s32.totalorder %s39, 2
      %s41 = scalar_select %p40, 0, %s39
      %s42 = ssub.s32 %s29, %s41
      %p43 = scmp.eq.s32.totalorder %s42, 0
      %s45 = sadd.s32 %s44, 1
      %s46 = scalar_select %p43, %s44, %s45
      %p49 = pneg %p43
      %p50 = scmp.eq.s32.totalorder %s22, 3
      %p51 = por %p49, %p50
      %p52 = scmp.ne.s32.totalorder %s44, %s47
      %p53 = scmp.eq.s32.totalorder %s22, 0
      %p54 = por %p52, %p53
      %p55 = scmp.ne.s32.totalorder %s44, %s47
      %p56 = scmp.eq.s32.totalorder %s27, 3
      %p57 = por %p55, %p56
      %p58 = scmp.ne.s32.totalorder %s47, %s48
      %p59 = scmp.eq.s32.totalorder %s27, 0
      %p60 = por %p58, %p59
      %p61 = scmp.ne.s32.totalorder %s47, %s48
      %p62 = scmp.eq.s32.totalorder %s28, 3
      %p63 = por %p61, %p62
      %p65 = scmp.ne.s32.totalorder %s48, %s64
      %p66 = scmp.eq.s32.totalorder %s28, 0
      %p67 = por %p65, %p66
      %s69 = sadd.s32 %s68, 1
      %p72 = scmp.eq.s32.totalorder %s22, 3
      %p73 = scmp.ne.s32.totalorder %s68, %s70
      %p74 = scmp.eq.s32.totalorder %s22, 0
      %p75 = por %p73, %p74
      %p76 = scmp.ne.s32.totalorder %s68, %s70
      %p77 = scmp.eq.s32.totalorder %s27, 3
      %p78 = por %p76, %p77
      %p79 = scmp.ne.s32.totalorder %s70, %s71
      %p80 = scmp.eq.s32.totalorder %s27, 0
      %p81 = por %p79, %p80
      %p82 = scmp.ne.s32.totalorder %s70, %s71
      %p83 = scmp.eq.s32.totalorder %s28, 3
      %p84 = por %p82, %p83
      %p86 = scmp.ne.s32.totalorder %s71, %s85
      %p87 = scmp.eq.s32.totalorder %s28, 0
      %p88 = por %p86, %p87
      %s90 = sadd.s32 %s89, 1
      %p93 = scmp.eq.s32.totalorder %s22, 3
      %p94 = scmp.ne.s32.totalorder %s89, %s91
      %p95 = scmp.eq.s32.totalorder %s22, 0
      %p96 = por %p94, %p95
      %p97 = scmp.ne.s32.totalorder %s89, %s91
      %p98 = scmp.eq.s32.totalorder %s27, 3
      %p99 = por %p97, %p98
      %p100 = scmp.ne.s32.totalorder %s91, %s92
      %p101 = scmp.eq.s32.totalorder %s27, 0
      %p102 = por %p100, %p101
      %p103 = scmp.ne.s32.totalorder %s91, %s92
      %p104 = scmp.eq.s32.totalorder %s28, 3
      %p105 = por %p103, %p104
      %p107 = scmp.ne.s32.totalorder %s92, %s106
      %p108 = scmp.eq.s32.totalorder %s28, 0
      %p109 = por %p107, %p108
      %s111 = sadd.s32 %s110, 1
      %p114 = scmp.eq.s32.totalorder %s22, 3
      %p115 = scmp.ne.s32.totalorder %s110, %s112
      %p116 = scmp.eq.s32.totalorder %s22, 0
      %p117 = por %p115, %p116
      %p118 = scmp.ne.s32.totalorder %s110, %s112
      %p119 = scmp.eq.s32.totalorder %s27, 3
      %p120 = por %p118, %p119
      %p121 = scmp.ne.s32.totalorder %s112, %s113
      %p122 = scmp.eq.s32.totalorder %s27, 0
      %p123 = por %p121, %p122
      %p124 = scmp.ne.s32.totalorder %s112, %s113
      %p125 = scmp.eq.s32.totalorder %s28, 3
      %p126 = por %p124, %p125
      %p128 = scmp.ne.s32.totalorder %s113, %s127
      %p129 = scmp.eq.s32.totalorder %s28, 0
      %p130 = por %p128, %p129
      %s132 = sadd.s32 %s131, 1
      %p135 = scmp.eq.s32.totalorder %s22, 3
      %p136 = scmp.ne.s32.totalorder %s131, %s133
      %p137 = scmp.eq.s32.totalorder %s22, 0
      %p138 = por %p136, %p137
      %p139 = scmp.ne.s32.totalorder %s131, %s133
      %p140 = scmp.eq.s32.totalorder %s27, 3
      %p141 = por %p139, %p140
      %p142 = scmp.ne.s32.totalorder %s133, %s134
      %p143 = scmp.eq.s32.totalorder %s27, 0
      %p144 = por %p142, %p143
      %p145 = scmp.ne.s32.totalorder %s133, %s134
      %p146 = scmp.eq.s32.totalorder %s28, 3
      %p147 = por %p145, %p146
      %p149 = scmp.ne.s32.totalorder %s134, %s148
      %p150 = scmp.eq.s32.totalorder %s28, 0
      %p151 = por %p149, %p150
      %s153 = sadd.s32 %s152, 1
      %p156 = scmp.eq.s32.totalorder %s22, 3
      %p157 = scmp.ne.s32.totalorder %s152, %s154
      %p158 = scmp.eq.s32.totalorder %s22, 0
      %p159 = por %p157, %p158
      %p160 = scmp.ne.s32.totalorder %s152, %s154
      %p161 = scmp.eq.s32.totalorder %s27, 3
      %p162 = por %p160, %p161
      %p163 = scmp.ne.s32.totalorder %s154, %s155
      %p164 = scmp.eq.s32.totalorder %s27, 0
      %p165 = por %p163, %p164
      %p166 = scmp.ne.s32.totalorder %s154, %s155
      %p167 = scmp.eq.s32.totalorder %s28, 3
      %p168 = por %p166, %p167
      %p170 = scmp.ne.s32.totalorder %s155, %s169
      %p171 = scmp.eq.s32.totalorder %s28, 0
      %p172 = por %p170, %p171
      %s174 = sadd.s32 %s173, 1
      %p177 = scmp.eq.s32.totalorder %s22, 3
      %p178 = scmp.ne.s32.totalorder %s173, %s175
      %p179 = scmp.eq.s32.totalorder %s22, 0
      %p180 = por %p178, %p179
      %p181 = scmp.ne.s32.totalorder %s173, %s175
      %p182 = scmp.eq.s32.totalorder %s27, 3
      %p183 = por %p181, %p182
      %p184 = scmp.ne.s32.totalorder %s175, %s176
      %p185 = scmp.eq.s32.totalorder %s27, 0
      %p186 = por %p184, %p185
      %p187 = scmp.ne.s32.totalorder %s175, %s176
      %p188 = scmp.eq.s32.totalorder %s28, 3
      %p189 = por %p187, %p188
      %p191 = scmp.ne.s32.totalorder %s176, %s190
      %p192 = scmp.eq.s32.totalorder %s28, 0
      %p193 = por %p191, %p192
      %s195 = sadd.s32 %s194, 1
      %p198 = scmp.eq.s32.totalorder %s22, 3
      %p199 = scmp.ne.s32.totalorder %s194, %s196
      %p200 = scmp.eq.s32.totalorder %s22, 0
      %p201 = por %p199, %p200
      %p202 = scmp.ne.s32.totalorder %s194, %s196
      %p203 = scmp.eq.s32.totalorder %s27, 3
      %p204 = por %p202, %p203
      %p205 = scmp.ne.s32.totalorder %s196, %s197
      %p206 = scmp.eq.s32.totalorder %s27, 0
      %p207 = por %p205, %p206
      %p208 = scmp.ne.s32.totalorder %s196, %s197
      %p209 = scmp.eq.s32.totalorder %s28, 3
      %p210 = por %p208, %p209
      %p212 = scmp.ne.s32.totalorder %s197, %s211
      %p213 = scmp.eq.s32.totalorder %s28, 0
      %p214 = por %p212, %p213
      %s216 = sadd.s32 %s215, 1
      %p219 = scmp.eq.s32.totalorder %s22, 3
      %p220 = scmp.ne.s32.totalorder %s215, %s217
      %p221 = scmp.eq.s32.totalorder %s22, 0
      %p222 = por %p220, %p221
      %p223 = scmp.ne.s32.totalorder %s215, %s217
      %p224 = scmp.eq.s32.totalorder %s27, 3
      %p225 = por %p223, %p224
      %p226 = scmp.ne.s32.totalorder %s217, %s218
      %p227 = scmp.eq.s32.totalorder %s27, 0
      %p228 = por %p226, %p227
      %p229 = scmp.ne.s32.totalorder %s217, %s218
      %p230 = scmp.eq.s32.totalorder %s28, 3
      %p231 = por %p229, %p230
      %p233 = scmp.ne.s32.totalorder %s218, %s232
      %p234 = scmp.eq.s32.totalorder %s28, 0
      %p235 = por %p233, %p234
      %s237 = sadd.s32 %s236, 1
      %p240 = scmp.eq.s32.totalorder %s22, 3
      %p241 = scmp.ne.s32.totalorder %s236, %s238
      %p242 = scmp.eq.s32.totalorder %s22, 0
      %p243 = por %p241, %p242
      %p244 = scmp.ne.s32.totalorder %s236, %s238
      %p245 = scmp.eq.s32.totalorder %s27, 3
      %p246 = por %p244, %p245
      %p247 = scmp.ne.s32.totalorder %s238, %s239
      %p248 = scmp.eq.s32.totalorder %s27, 0
      %p249 = por %p247, %p248
      %p250 = scmp.ne.s32.totalorder %s238, %s239
      %p251 = scmp.eq.s32.totalorder %s28, 3
      %p252 = por %p250, %p251
      %p254 = scmp.ne.s32.totalorder %s239, %s253
      %p255 = scmp.eq.s32.totalorder %s28, 0
      %p256 = por %p254, %p255
      %s257 = ssub.s32 %s29, %s41
      %s258 = ssub.s32 %s30, %s37
      %s259 = sor.u32 %s257, %s258
      %p260 = scmp.eq.s32.totalorder %s259, 0
      %s262 = sadd.s32 %s261, 1
      %s263 = scalar_select %p260, %s261, %s262
      %p266 = pneg %p260
      %p267 = scmp.eq.s32.totalorder %s22, 3
      %p268 = por %p266, %p267
      %p269 = scmp.ne.s32.totalorder %s261, %s264
      %p270 = scmp.eq.s32.totalorder %s22, 0
      %p271 = por %p269, %p270
      %p272 = scmp.ne.s32.totalorder %s261, %s264
      %p273 = scmp.eq.s32.totalorder %s27, 3
      %p274 = por %p272, %p273
      %p275 = scmp.ne.s32.totalorder %s264, %s265
      %p276 = scmp.eq.s32.totalorder %s27, 0
      %p277 = por %p275, %p276
      %p278 = scmp.ne.s32.totalorder %s264, %s265
      %p279 = scmp.eq.s32.totalorder %s28, 3
      %p280 = por %p278, %p279
      %p282 = scmp.ne.s32.totalorder %s265, %s281
      %p283 = scmp.eq.s32.totalorder %s28, 0
      %p284 = por %p282, %p283
      %p285 = scmp.le.s32.totalorder 1, %s22
      %p286 = scmp.lt.s32.totalorder %s22, 5
      %p287 = pnand %p285, %p286
      %p288 = pneg %p287
      // Predicated region
      $region9: #{tpu_custom_call.1} parent=5 // pred_check
        _
      $region10: #{tpu_custom_call.1} parent=5 // pred_check_branch
        %290 = sbr.rel (%p287) target = $region12
      $region11: #{tpu_custom_call.1} parent=5 // pred_region
        %s291 = ssub.s32 %s22, 1
        // Predicated region
        $region13: #{tpu_custom_call.1} parent=11 // pred_check
          %p292 = pneg %p81
        $region14: #{tpu_custom_call.1} parent=11 // pred_check_branch
          %294 = sbr.rel (%p292) target = $region16
        $region15: #{tpu_custom_call.1} parent=11 // pred_region
          _
        $region16: #{tpu_custom_call.1} parent=11 // pred_fallthru
          _
        // Predicated region
        $region17: #{tpu_custom_call.1} parent=11 // pred_check
          %p295 = pneg %p102
        $region18: #{tpu_custom_call.1} parent=11 // pred_check_branch
          %297 = sbr.rel (%p295) target = $region20
        $region19: #{tpu_custom_call.1} parent=11 // pred_region
          _
        $region20: #{tpu_custom_call.1} parent=11 // pred_fallthru
          _
        // Predicated region
        $region21: #{tpu_custom_call.1} parent=11 // pred_check
          %p298 = pneg %p123
        $region22: #{tpu_custom_call.1} parent=11 // pred_check_branch
          %300 = sbr.rel (%p298) target = $region24
        $region23: #{tpu_custom_call.1} parent=11 // pred_region
          %s302 = ssub.s32 6144, 6144
          %303 = vsyncadd [#allocation3], %s302
          %s304 = sshll.u32 [#allocation2], 4
          %s305 = int_to_ptr.vmem [resolvable:$true] %s304
          %310 = dma.hbm_to_vmem [thread:$0]  %s3, 6144, %s305, [#allocation3], 128, 128, 8
        $region24: #{tpu_custom_call.1} parent=11 // pred_fallthru
          _
        // Predicated region
        $region25: #{tpu_custom_call.1} parent=11 // pred_check
          %p311 = pneg %p144
        $region26: #{tpu_custom_call.1} parent=11 // pred_check_branch
          %313 = sbr.rel (%p311) target = $region28
        $region27: #{tpu_custom_call.1} parent=11 // pred_region
          %s315 = ssub.s32 6144, 6144
          %316 = vsyncadd [#allocation6], %s315
          %s317 = sshll.u32 [#allocation5], 4
          %s318 = int_to_ptr.vmem [resolvable:$true] %s317
          %323 = dma.hbm_to_vmem [thread:$0]  %s4, 6144, %s318, [#allocation6], 128, 128, 8
        $region28: #{tpu_custom_call.1} parent=11 // pred_fallthru
          _
        // Predicated region
        $region29: #{tpu_custom_call.1} parent=11 // pred_check
          %p324 = pneg %p165
        $region30: #{tpu_custom_call.1} parent=11 // pred_check_branch
          %326 = sbr.rel (%p324) target = $region32
        $region31: #{tpu_custom_call.1} parent=11 // pred_region
          _
        $region32: #{tpu_custom_call.1} parent=11 // pred_fallthru
          _
        // Predicated region
        $region33: #{tpu_custom_call.1} parent=11 // pred_check
          %p327 = pneg %p186
        $region34: #{tpu_custom_call.1} parent=11 // pred_check_branch
          %329 = sbr.rel (%p327) target = $region36
        $region35: #{tpu_custom_call.1} parent=11 // pred_region
          %s331 = ssub.s32 8192, 8192
          %332 = vsyncadd [#allocation6], %s331
          %s333 = sshll.u32 [#allocation7], 4
          %s334 = int_to_ptr.vmem [resolvable:$true] %s333
          %339 = dma.hbm_to_vmem [thread:$0]  %s6, 8192, %s334, [#allocation6], 128, 128, 8
        $region36: #{tpu_custom_call.1} parent=11 // pred_fallthru
          _
        // Predicated region
        $region37: #{tpu_custom_call.1} parent=11 // pred_check
          %p340 = pneg %p207
        $region38: #{tpu_custom_call.1} parent=11 // pred_check_branch
          %342 = sbr.rel (%p340) target = $region40
        $region39: #{tpu_custom_call.1} parent=11 // pred_region
          _
        $region40: #{tpu_custom_call.1} parent=11 // pred_fallthru
          _
        // Predicated region
        $region41: #{tpu_custom_call.1} parent=11 // pred_check
          %p343 = pneg %p228
        $region42: #{tpu_custom_call.1} parent=11 // pred_check_branch
          %345 = sbr.rel (%p343) target = $region44
        $region43: #{tpu_custom_call.1} parent=11 // pred_region
          %s347 = ssub.s32 2048, 2048
          %348 = vsyncadd [#allocation9], %s347
          %s349 = sshll.u32 [#allocation8], 4
          %s350 = int_to_ptr.vmem [resolvable:$true] %s349
          %355 = dma.hbm_to_vmem [thread:$0]  %s8, 2048, %s350, [#allocation9], 128, 128, 8
        $region44: #{tpu_custom_call.1} parent=11 // pred_fallthru
          _
        // Predicated region
        $region45: #{tpu_custom_call.1} parent=11 // pred_check
          %p356 = pneg %p249
        $region46: #{tpu_custom_call.1} parent=11 // pred_check_branch
          %358 = sbr.rel (%p356) target = $region48
        $region47: #{tpu_custom_call.1} parent=11 // pred_region
          _
        $region48: #{tpu_custom_call.1} parent=11 // pred_fallthru
          _
      $region12: #{tpu_custom_call.1} parent=5 // pred_fallthru
        _
      %p359 = scmp.lt.s32.totalorder %s22, 4
      // Predicated region
      $region49: #{tpu_custom_call.1} parent=5 // pred_check
        %p360 = pneg %p359
      $region50: #{tpu_custom_call.1} parent=5 // pred_check_branch
        %362 = sbr.rel (%p360) target = $region52
      $region51: #{tpu_custom_call.1} parent=5 // pred_region
        // Predicated region
        $region53: #{tpu_custom_call.1} parent=51 // pred_check
          %p363 = pneg %p54
        $region54: #{tpu_custom_call.1} parent=51 // pred_check_branch
          %365 = sbr.rel (%p363) target = $region56
        $region55: #{tpu_custom_call.1} parent=51 // pred_region
          %p366 = scmp.lt.s32.totalorder %s29, 1
          %s367 = scalar_select %p366, %s29, 1
          %s368 = smul.addr %s367, 6
          %s369 = smul.addr %s368, 8
          %s370 = scalar_lea.vmem %s0, %s369
        $region56: #{tpu_custom_call.1} parent=51 // pred_fallthru
          _
      $region52: #{tpu_custom_call.1} parent=5 // pred_fallthru
        _
      %p371 = scmp.le.s32.totalorder 1, %s22
      %p372 = scmp.lt.s32.totalorder %s22, 5
      %p373 = pnand %p371, %p372
      %p374 = pneg %p373
      // Predicated region
      $region57: #{tpu_custom_call.1} parent=5 // pred_check
        _
      $region58: #{tpu_custom_call.1} parent=5 // pred_check_branch
        %376 = sbr.rel (%p373) target = $region60
      $region59: #{tpu_custom_call.1} parent=5 // pred_region
        %s377 = ssub.s32 %s22, 1
        // Predicated region
        $region61: #{tpu_custom_call.1} parent=59 // pred_check
          %p378 = pneg %p123
        $region62: #{tpu_custom_call.1} parent=59 // pred_check_branch
          %380 = sbr.rel (%p378) target = $region64
        $region63: #{tpu_custom_call.1} parent=59 // pred_region
          %381 = dma.done [#allocation3], 6144
        $region64: #{tpu_custom_call.1} parent=59 // pred_fallthru
          _
        // Predicated region
        $region65: #{tpu_custom_call.1} parent=59 // pred_check
          %p382 = pneg %p144
        $region66: #{tpu_custom_call.1} parent=59 // pred_check_branch
          %384 = sbr.rel (%p382) target = $region68
        $region67: #{tpu_custom_call.1} parent=59 // pred_region
          %385 = dma.done [#allocation6], 6144
        $region68: #{tpu_custom_call.1} parent=59 // pred_fallthru
          _
        // Predicated region
        $region69: #{tpu_custom_call.1} parent=59 // pred_check
          %p386 = pneg %p186
        $region70: #{tpu_custom_call.1} parent=59 // pred_check_branch
          %388 = sbr.rel (%p386) target = $region72
        $region71: #{tpu_custom_call.1} parent=59 // pred_region
          %389 = dma.done [#allocation6], 8192
        $region72: #{tpu_custom_call.1} parent=59 // pred_fallthru
          _
        // Predicated region
        $region73: #{tpu_custom_call.1} parent=59 // pred_check
          %p390 = pneg %p228
        $region74: #{tpu_custom_call.1} parent=59 // pred_check_branch
          %392 = sbr.rel (%p390) target = $region76
        $region75: #{tpu_custom_call.1} parent=59 // pred_region
          %393 = dma.done [#allocation9], 2048
        $region76: #{tpu_custom_call.1} parent=59 // pred_fallthru
          _
        %p394 = scmp.lt.s32.totalorder %s31, 1
        %s395 = scalar_select %p394, %s31, 1
        %s396 = smul.addr %s395, 6
        %s397 = smul.addr %s396, 8
        %s398 = scalar_lea.vmem %s0, %s397
        %p399 = pneg %p60
        %p400 = pneg %p57
        %p401 = pneg %p81
        %p402 = pneg %p78
        %p403 = pneg %p102
        %p404 = pneg %p99
        %p405 = pneg %p123
        %p406 = pneg %p120
        %p407 = pneg %p144
        %p408 = pneg %p141
        %p409 = pneg %p165
        %p410 = pneg %p162
        %p411 = pneg %p186
        %p412 = pneg %p183
        %p413 = pneg %p207
        %p414 = pneg %p204
        %p415 = pneg %p228
        %p416 = pneg %p225
        %p417 = pneg %p249
        %p418 = pneg %p246
        %p419 = pneg %p277
        %p420 = pneg %p274
        %s421 = sand.u32 %s264, 1
        %s422 = scalar_lea.sflag [#allocation4], %s421
        %s423 = sand.u32 %s264, 1
        %s424 = smul.addr %s423, 16
        %s425 = scalar_lea.vmem [#allocation10], %s424
        %p426 = scmp.lt.s32.totalorder %s31, 1
        %s427 = scalar_select %p426, %s31, 1
        %s428 = smul.addr %s427, 6
        %s429 = smul.addr %s428, 8
        %s430 = scalar_lea.vmem %s0, %s429
        %s431 = smul.u32 2, %s32
        %s432 = smul.u32 %s32, 16
        %s433 = scalar_lea.vmem %s430, %s432
        %v434 = vld [vmem:[%s433] sm:$0xff]
        %v435 = vld [vmem:[%s433 + $0x8] sm:$0xff]
        %v436 = vld [vmem:[%s433 + $0x10] sm:$0xff]
        %v437 = vld [vmem:[%s433 + $0x18] sm:$0x7f]
        %v438 = vld [vmem:[%s1] sm:$0x3]
        %440 = vset.pattern.permute.xlu0 0
        %441 = vperm.xlu0 %440, %v434
        %v442 = vpop.permute.xlu0 %441
        %445 = vset.pattern.permute.xlu0 0
        %446 = vperm.xlu0 %445, %v435
        %v447 = vpop.permute.xlu0 %446
        %450 = vset.pattern.permute.xlu0 0
        %451 = vperm.xlu0 %450, %v436
        %v452 = vpop.permute.xlu0 %451
        %v454 = vlaneseq
        %v455 = vshrl.u32 %v454, 7
        %v456 = vsub.s32 0, %v455
        %v457 = vrot.slane %v438, %v456
        %v458 = vmul.f32 %v442, %v457
        %v459 = vmul.f32 %v447, %v457
        %v460 = vmul.f32 %v452, %v457
        %462 = vset.pattern.permute.xlu0 0
        %463 = vperm.xlu0 %462, %v437
        %v464 = vpop.permute.xlu0 %463
        %v466 = vlaneseq
        %v467 = vshrl.u32 %v466, 7
        %v468 = vsub.s32 1, %v467
        %v469 = vrot.slane %v438, %v468
        %v470 = vmul.f32 %v447, %v469
        %v471 = vmul.f32 %v452, %v469
        %v472 = vmul.f32 %v464, %v469
        %v473 = vadd.f32 %v458, %v470
        %v474 = vadd.f32 %v459, %v471
        %v475 = vadd.f32 %v460, %v472
        %v476 = vld [vmem:[%s2] sm:$0x1]
        %v478 = vlaneseq
        %v479 = vshrl.u32 %v478, 7
        %v480 = vsub.s32 0, %v479
        %v481 = vrot.slane %v476, %v480
        %v483 = vadd.f32 %v473, %v481
        %v484 = vadd.f32 %v474, %v481
        %v485 = vadd.f32 %v475, %v481
        %v486 = vmax.f32 %v483, 0.0
        %v487 = vmax.f32 %v484, 0.0
        %v488 = vmax.f32 %v485, 0.0
        %v489 = vld [vmem:[#allocation7] sm:$0xff]
        %v490 = vld [vmem:[#allocation7 + $0x8] sm:$0xff]
        %v491 = vld [vmem:[#allocation7 + $0x10] sm:$0xff]
        %v492 = vld [vmem:[#allocation7 + $0x18] sm:$0xff]
        %v493 = vld [vmem:[#allocation7 + $0x20] sm:$0xff]
        %v494 = vld [vmem:[#allocation7 + $0x28] sm:$0xff]
        %v495 = vld [vmem:[#allocation7 + $0x30] sm:$0xff]
        %v496 = vld [vmem:[#allocation7 + $0x38] sm:$0xff]
        %v497 = vld [vmem:[#allocation7 + $0x40] sm:$0xff]
        %v498 = vld [vmem:[#allocation7 + $0x48] sm:$0xff]
        %v499 = vld [vmem:[#allocation7 + $0x50] sm:$0xff]
        %v500 = vld [vmem:[#allocation7 + $0x58] sm:$0xff]
        %v501 = vld [vmem:[#allocation7 + $0x60] sm:$0xff]
        %v502 = vld [vmem:[#allocation7 + $0x68] sm:$0xff]
        %v503 = vld [vmem:[#allocation7 + $0x70] sm:$0xff]
        %v504 = vld [vmem:[#allocation7 + $0x78] sm:$0xff]
        %v505 = vld [vmem:[%s7] sm:$0x1]
        %v507 = vlaneseq
        %v508 = vshrl.u32 %v507, 7
        %v509 = vsub.s32 0, %v508
        %v510 = vrot.slane %v505, %v509
        %512 = vmatprep.subr.mxu0 0.0
        %513 = vmatpush1.msra.mxu0 %v504
        %514 = vmatprep.subr.mxu0 0.0
        %515 = vmatpush1.msra.mxu0 %v503
        %516 = vmatprep.subr.mxu0 0.0
        %517 = vmatpush1.msra.mxu0 %v502
        %518 = vmatprep.subr.mxu0 0.0
        %519 = vmatpush1.msra.mxu0 %v501
        %520 = vmatprep.subr.mxu0 0.0
        %521 = vmatpush1.msra.mxu0 %v500
        %522 = vmatprep.subr.mxu0 0.0
        %523 = vmatpush1.msra.mxu0 %v499
        %524 = vmatprep.subr.mxu0 0.0
        %525 = vmatpush1.msra.mxu0 %v498
        %526 = vmatprep.subr.mxu0 0.0
        %527 = vmatpush1.msra.mxu0 %v497
        %528 = vmatprep.subr.mxu0 0.0
        %529 = vmatpush1.msra.mxu0 %v496
        %530 = vmatprep.subr.mxu0 0.0
        %531 = vmatpush1.msra.mxu0 %v495
        %532 = vmatprep.subr.mxu0 0.0
        %533 = vmatpush1.msra.mxu0 %v494
        %534 = vmatprep.subr.mxu0 0.0
        %535 = vmatpush1.msra.mxu0 %v493
        %536 = vmatprep.subr.mxu0 0.0
        %537 = vmatpush1.msra.mxu0 %v492
        %538 = vmatprep.subr.mxu0 0.0
        %539 = vmatpush1.msra.mxu0 %v491
        %540 = vmatprep.subr.mxu0 0.0
        %541 = vmatpush1.msra.mxu0 %v490
        %542 = vmatprep.subr.mxu0 0.0
        %543 = vmatpush1.msra.mxu0 %v489
        %544 = vmatprep.subr.mxu0 0.0
        %545 = vmatpush2.msra.mxu0 0.0
        %546 = vmatprep.subr.mxu0 0.0
        %547 = vmatpush2.msra.mxu0 0.0
        %548 = vmatprep.subr.mxu0 0.0
        %549 = vmatpush2.msra.mxu0 0.0
        %550 = vmatprep.subr.mxu0 0.0
        %551 = vmatpush2.msra.mxu0 0.0
        %552 = vmatprep.subr.mxu0 0.0
        %553 = vmatpush2.msra.mxu0 0.0
        %554 = vmatprep.subr.mxu0 0.0
        %555 = vmatpush2.msra.mxu0 0.0
        %556 = vmatprep.subr.mxu0 0.0
        %557 = vmatpush2.msra.mxu0 0.0
        %558 = vmatprep.subr.mxu0 0.0
        %559 = vmatpush2.msra.mxu0 0.0
        %560 = vmatprep.subr.mxu0 0.0
        %561 = vmatpush2.msra.mxu0 0.0
        %562 = vmatprep.subr.mxu0 0.0
        %563 = vmatpush2.msra.mxu0 0.0
        %564 = vmatprep.subr.mxu0 0.0
        %565 = vmatpush2.msra.mxu0 0.0
        %566 = vmatprep.subr.mxu0 0.0
        %567 = vmatpush2.msra.mxu0 0.0
        %568 = vmatprep.subr.mxu0 0.0
        %569 = vmatpush2.msra.mxu0 0.0
        %570 = vmatprep.subr.mxu0 0.0
        %571 = vmatpush2.msra.mxu0 0.0
        %572 = vmatprep.subr.mxu0 0.0
        %573 = vmatpush2.msra.mxu0 0.0
        %574 = vmatprep.subr.mxu0 0.0
        %575 = vmatpush2.msra.mxu0 0.0
        %576 = vmatprep.mubr.f32.mxu0 0.0
        %577 = vmatmul.mubr.f32.gmra.mxu0 %v486
        %v578 = vpop.f32.mrf.mxu0
        %v579 = vadd.f32 %v510, %v578
        %v580 = vpop.f32.mrf.mxu0
        %581 = vmatprep.mubr.f32.mxu0 0.0
        %582 = vmatmul.mubr.f32.gmra.mxu0 %v487
        %v583 = vpop.f32.mrf.mxu0
        %v584 = vadd.f32 %v510, %v583
        %v585 = vpop.f32.mrf.mxu0
        %586 = vmatprep.mubr.f32.mxu0 0.0
        %587 = vmatmul.mubr.f32.gmra.mxu0 %v488
        %v588 = vpop.f32.mrf.mxu0
        %v589 = vadd.f32 %v510, %v588
        %v590 = vpop.f32.mrf.mxu0
        %591 = vdwg.mxu0
        %v592 = vmax.f32 %v579, 0.0
        %v593 = vmax.f32 %v584, 0.0
        %v594 = vmax.f32 %v589, 0.0
        %v595 = vld [vmem:[#allocation2] sm:$0xff]
        %v596 = vld [vmem:[#allocation2 + $0x8] sm:$0xff]
        %v597 = vld [vmem:[#allocation2 + $0x10] sm:$0xff]
        %v598 = vld [vmem:[#allocation2 + $0x18] sm:$0xff]
        %v599 = vld [vmem:[#allocation2 + $0x20] sm:$0xff]
        %v600 = vld [vmem:[#allocation2 + $0x28] sm:$0xff]
        %v601 = vld [vmem:[#allocation2 + $0x30] sm:$0xff]
        %v602 = vld [vmem:[#allocation2 + $0x38] sm:$0xff]
        %v603 = vld [vmem:[#allocation2 + $0x40] sm:$0xff]
        %v604 = vld [vmem:[#allocation2 + $0x48] sm:$0xff]
        %v605 = vld [vmem:[#allocation2 + $0x50] sm:$0xff]
        %v606 = vld [vmem:[#allocation2 + $0x58] sm:$0xff]
        %v607 = vld [vmem:[#allocation2 + $0x60] sm:$0xff]
        %v608 = vld [vmem:[#allocation2 + $0x68] sm:$0xff]
        %v609 = vld [vmem:[#allocation2 + $0x70] sm:$0xff]
        %v610 = vld [vmem:[#allocation2 + $0x78] sm:$0xff]
        %v611 = vld [vmem:[#allocation5] sm:$0xff]
        %v612 = vld [vmem:[#allocation5 + $0x8] sm:$0xff]
        %v613 = vld [vmem:[#allocation5 + $0x10] sm:$0xff]
        %v614 = vld [vmem:[#allocation5 + $0x18] sm:$0xff]
        %v615 = vld [vmem:[#allocation5 + $0x20] sm:$0xff]
        %v616 = vld [vmem:[#allocation5 + $0x28] sm:$0xff]
        %v617 = vld [vmem:[#allocation5 + $0x30] sm:$0xff]
        %v618 = vld [vmem:[#allocation5 + $0x38] sm:$0xff]
        %v619 = vld [vmem:[#allocation5 + $0x40] sm:$0xff]
        %v620 = vld [vmem:[#allocation5 + $0x48] sm:$0xff]
        %v621 = vld [vmem:[#allocation5 + $0x50] sm:$0xff]
        %v622 = vld [vmem:[#allocation5 + $0x58] sm:$0xff]
        %v623 = vld [vmem:[#allocation5 + $0x60] sm:$0xff]
        %v624 = vld [vmem:[#allocation5 + $0x68] sm:$0xff]
        %v625 = vld [vmem:[#allocation5 + $0x70] sm:$0xff]
        %v626 = vld [vmem:[#allocation5 + $0x78] sm:$0xff]
        %vm630 = vcmask 1043456
        %v631 = vrot.slane %v592, 4
        %v632 = vrot.slane %v593, 4
        %v633 = vsel %vm630, %v631, %v632
        %v634 = vrot.slane %v594, 4
        %v635 = vsel %vm630, %v632, %v634
        %639 = vmatprep.subr.mxu0 0.0
        %640 = vmatpush1.msra.mxu0 %v626
        %641 = vmatprep.subr.mxu0 0.0
        %642 = vmatpush1.msra.mxu0 %v625
        %643 = vmatprep.subr.mxu0 0.0
        %644 = vmatpush1.msra.mxu0 %v624
        %645 = vmatprep.subr.mxu0 0.0
        %646 = vmatpush1.msra.mxu0 %v623
        %647 = vmatprep.subr.mxu0 0.0
        %648 = vmatpush1.msra.mxu0 %v622
        %649 = vmatprep.subr.mxu0 0.0
        %650 = vmatpush1.msra.mxu0 %v621
        %651 = vmatprep.subr.mxu0 0.0
        %652 = vmatpush1.msra.mxu0 %v620
        %653 = vmatprep.subr.mxu0 0.0
        %654 = vmatpush1.msra.mxu0 %v619
        %655 = vmatprep.subr.mxu0 0.0
        %656 = vmatpush1.msra.mxu0 %v618
        %657 = vmatprep.subr.mxu0 0.0
        %658 = vmatpush1.msra.mxu0 %v617
        %659 = vmatprep.subr.mxu0 0.0
        %660 = vmatpush1.msra.mxu0 %v616
        %661 = vmatprep.subr.mxu0 0.0
        %662 = vmatpush1.msra.mxu0 %v615
        %663 = vmatprep.subr.mxu0 0.0
        %664 = vmatpush1.msra.mxu0 %v614
        %665 = vmatprep.subr.mxu0 0.0
        %666 = vmatpush1.msra.mxu0 %v613
        %667 = vmatprep.subr.mxu0 0.0
        %668 = vmatpush1.msra.mxu0 %v612
        %669 = vmatprep.subr.mxu0 0.0
        %670 = vmatpush1.msra.mxu0 %v611
        %671 = vmatprep.subr.mxu0 0.0
        %672 = vmatpush2.msra.mxu0 0.0
        %673 = vmatprep.subr.mxu0 0.0
        %674 = vmatpush2.msra.mxu0 0.0
        %675 = vmatprep.subr.mxu0 0.0
        %676 = vmatpush2.msra.mxu0 0.0
        %677 = vmatprep.subr.mxu0 0.0
        %678 = vmatpush2.msra.mxu0 0.0
        %679 = vmatprep.subr.mxu0 0.0
        %680 = vmatpush2.msra.mxu0 0.0
        %681 = vmatprep.subr.mxu0 0.0
        %682 = vmatpush2.msra.mxu0 0.0
        %683 = vmatprep.subr.mxu0 0.0
        %684 = vmatpush2.msra.mxu0 0.0
        %685 = vmatprep.subr.mxu0 0.0
        %686 = vmatpush2.msra.mxu0 0.0
        %687 = vmatprep.subr.mxu0 0.0
        %688 = vmatpush2.msra.mxu0 0.0
        %689 = vmatprep.subr.mxu0 0.0
        %690 = vmatpush2.msra.mxu0 0.0
        %691 = vmatprep.subr.mxu0 0.0
        %692 = vmatpush2.msra.mxu0 0.0
        %693 = vmatprep.subr.mxu0 0.0
        %694 = vmatpush2.msra.mxu0 0.0
        %695 = vmatprep.subr.mxu0 0.0
        %696 = vmatpush2.msra.mxu0 0.0
        %697 = vmatprep.subr.mxu0 0.0
        %698 = vmatpush2.msra.mxu0 0.0
        %699 = vmatprep.subr.mxu0 0.0
        %700 = vmatpush2.msra.mxu0 0.0
        %701 = vmatprep.subr.mxu0 0.0
        %702 = vmatpush2.msra.mxu0 0.0
        %703 = vmatprep.mubr.f32.mxu0 0.0
        %704 = vmatmul.mubr.f32.gmra.mxu0 %v633
        %v705 = vpop.f32.mrf.mxu0
        %v706 = vadd.f32 0.0, %v705
        %v707 = vpop.f32.mrf.mxu0
        %708 = vmatprep.mubr.f32.mxu0 0.0
        %709 = vmatmul.mubr.f32.gmra.mxu0 %v635
        %v710 = vpop.f32.mrf.mxu0
        %v711 = vadd.f32 0.0, %v710
        %v712 = vpop.f32.mrf.mxu0
        %713 = vmatprep.mubr.f32.mxu0 0.0
        %714 = vmatmul.mubr.f32.gmra.mxu0 %v634
        %v715 = vpop.f32.mrf.mxu0
        %v716 = vadd.f32 0.0, %v715
        %v717 = vpop.f32.mrf.mxu0
        %718 = vdwg.mxu0
        %719 = vmatprep.subr.mxu0 0.0
        %720 = vmatpush1.msra.mxu0 %v610
        %721 = vmatprep.subr.mxu0 0.0
        %722 = vmatpush1.msra.mxu0 %v609
        %723 = vmatprep.subr.mxu0 0.0
        %724 = vmatpush1.msra.mxu0 %v608
        %725 = vmatprep.subr.mxu0 0.0
        %726 = vmatpush1.msra.mxu0 %v607
        %727 = vmatprep.subr.mxu0 0.0
        %728 = vmatpush1.msra.mxu0 %v606
        %729 = vmatprep.subr.mxu0 0.0
        %730 = vmatpush1.msra.mxu0 %v605
        %731 = vmatprep.subr.mxu0 0.0
        %732 = vmatpush1.msra.mxu0 %v604
        %733 = vmatprep.subr.mxu0 0.0
        %734 = vmatpush1.msra.mxu0 %v603
        %735 = vmatprep.subr.mxu0 0.0
        %736 = vmatpush1.msra.mxu0 %v602
        %737 = vmatprep.subr.mxu0 0.0
        %738 = vmatpush1.msra.mxu0 %v601
        %739 = vmatprep.subr.mxu0 0.0
        %740 = vmatpush1.msra.mxu0 %v600
        %741 = vmatprep.subr.mxu0 0.0
        %742 = vmatpush1.msra.mxu0 %v599
        %743 = vmatprep.subr.mxu0 0.0
        %744 = vmatpush1.msra.mxu0 %v598
        %745 = vmatprep.subr.mxu0 0.0
        %746 = vmatpush1.msra.mxu0 %v597
        %747 = vmatprep.subr.mxu0 0.0
        %748 = vmatpush1.msra.mxu0 %v596
        %749 = vmatprep.subr.mxu0 0.0
        %750 = vmatpush1.msra.mxu0 %v595
        %751 = vmatprep.subr.mxu0 0.0
        %752 = vmatpush2.msra.mxu0 0.0
        %753 = vmatprep.subr.mxu0 0.0
        %754 = vmatpush2.msra.mxu0 0.0
        %755 = vmatprep.subr.mxu0 0.0
        %756 = vmatpush2.msra.mxu0 0.0
        %757 = vmatprep.subr.mxu0 0.0
        %758 = vmatpush2.msra.mxu0 0.0
        %759 = vmatprep.subr.mxu0 0.0
        %760 = vmatpush2.msra.mxu0 0.0
        %761 = vmatprep.subr.mxu0 0.0
        %762 = vmatpush2.msra.mxu0 0.0
        %763 = vmatprep.subr.mxu0 0.0
        %764 = vmatpush2.msra.mxu0 0.0
        %765 = vmatprep.subr.mxu0 0.0
        %766 = vmatpush2.msra.mxu0 0.0
        %767 = vmatprep.subr.mxu0 0.0
        %768 = vmatpush2.msra.mxu0 0.0
        %769 = vmatprep.subr.mxu0 0.0
        %770 = vmatpush2.msra.mxu0 0.0
        %771 = vmatprep.subr.mxu0 0.0
        %772 = vmatpush2.msra.mxu0 0.0
        %773 = vmatprep.subr.mxu0 0.0
        %774 = vmatpush2.msra.mxu0 0.0
        %775 = vmatprep.subr.mxu0 0.0
        %776 = vmatpush2.msra.mxu0 0.0
        %777 = vmatprep.subr.mxu0 0.0
        %778 = vmatpush2.msra.mxu0 0.0
        %779 = vmatprep.subr.mxu0 0.0
        %780 = vmatpush2.msra.mxu0 0.0
        %781 = vmatprep.subr.mxu0 0.0
        %782 = vmatpush2.msra.mxu0 0.0
        %783 = vmatprep.mubr.f32.mxu0 0.0
        %784 = vmatmul.mubr.f32.gmra.mxu0 %v592
        %v785 = vpop.f32.mrf.mxu0
        %v786 = vadd.f32 %v706, %v785
        %v787 = vpop.f32.mrf.mxu0
        %788 = vmatprep.mubr.f32.mxu0 0.0
        %789 = vmatmul.mubr.f32.gmra.mxu0 %v593
        %v790 = vpop.f32.mrf.mxu0
        %v791 = vadd.f32 %v711, %v790
        %v792 = vpop.f32.mrf.mxu0
        %793 = vmatprep.mubr.f32.mxu0 0.0
        %794 = vmatmul.mubr.f32.gmra.mxu0 %v594
        %v795 = vpop.f32.mrf.mxu0
        %v796 = vadd.f32 %v716, %v795
        %v797 = vpop.f32.mrf.mxu0
        %798 = vdwg.mxu0
        %v799 = vld [vmem:[%s5] sm:$0x1]
        %v801 = vlaneseq
        %v802 = vshrl.u32 %v801, 7
        %v803 = vsub.s32 0, %v802
        %v804 = vrot.slane %v799, %v803
        %v806 = vadd.f32 %v786, %v804
        %v807 = vadd.f32 %v791, %v804
        %v808 = vadd.f32 %v796, %v804
        %v809 = vmax.f32 %v806, 0.0
        %v810 = vmax.f32 %v807, 0.0
        %v811 = vmax.f32 %v808, 0.0
        %s812 = scalar_lea.vmem [#allocation7], 128
        %v813 = vld [vmem:[%s812] sm:$0xff]
        %v814 = vld [vmem:[%s812 + $0x8] sm:$0xff]
        %v815 = vld [vmem:[%s812 + $0x10] sm:$0xff]
        %v816 = vld [vmem:[%s812 + $0x18] sm:$0xff]
        %v817 = vld [vmem:[%s812 + $0x20] sm:$0xff]
        %v818 = vld [vmem:[%s812 + $0x28] sm:$0xff]
        %v819 = vld [vmem:[%s812 + $0x30] sm:$0xff]
        %v820 = vld [vmem:[%s812 + $0x38] sm:$0xff]
        %v821 = vld [vmem:[%s812 + $0x40] sm:$0xff]
        %v822 = vld [vmem:[%s812 + $0x48] sm:$0xff]
        %v823 = vld [vmem:[%s812 + $0x50] sm:$0xff]
        %v824 = vld [vmem:[%s812 + $0x58] sm:$0xff]
        %v825 = vld [vmem:[%s812 + $0x60] sm:$0xff]
        %v826 = vld [vmem:[%s812 + $0x68] sm:$0xff]
        %v827 = vld [vmem:[%s812 + $0x70] sm:$0xff]
        %v828 = vld [vmem:[%s812 + $0x78] sm:$0xff]
        %s829 = scalar_lea.vmem %s7, 1
        %v830 = vld [vmem:[%s829] sm:$0x1]
        %v832 = vlaneseq
        %v833 = vshrl.u32 %v832, 7
        %v834 = vsub.s32 0, %v833
        %v835 = vrot.slane %v830, %v834
        %837 = vmatprep.subr.mxu0 0.0
        %838 = vmatpush1.msra.mxu0 %v828
        %839 = vmatprep.subr.mxu0 0.0
        %840 = vmatpush1.msra.mxu0 %v827
        %841 = vmatprep.subr.mxu0 0.0
        %842 = vmatpush1.msra.mxu0 %v826
        %843 = vmatprep.subr.mxu0 0.0
        %844 = vmatpush1.msra.mxu0 %v825
        %845 = vmatprep.subr.mxu0 0.0
        %846 = vmatpush1.msra.mxu0 %v824
        %847 = vmatprep.subr.mxu0 0.0
        %848 = vmatpush1.msra.mxu0 %v823
        %849 = vmatprep.subr.mxu0 0.0
        %850 = vmatpush1.msra.mxu0 %v822
        %851 = vmatprep.subr.mxu0 0.0
        %852 = vmatpush1.msra.mxu0 %v821
        %853 = vmatprep.subr.mxu0 0.0
        %854 = vmatpush1.msra.mxu0 %v820
        %855 = vmatprep.subr.mxu0 0.0
        %856 = vmatpush1.msra.mxu0 %v819
        %857 = vmatprep.subr.mxu0 0.0
        %858 = vmatpush1.msra.mxu0 %v818
        %859 = vmatprep.subr.mxu0 0.0
        %860 = vmatpush1.msra.mxu0 %v817
        %861 = vmatprep.subr.mxu0 0.0
        %862 = vmatpush1.msra.mxu0 %v816
        %863 = vmatprep.subr.mxu0 0.0
        %864 = vmatpush1.msra.mxu0 %v815
        %865 = vmatprep.subr.mxu0 0.0
        %866 = vmatpush1.msra.mxu0 %v814
        %867 = vmatprep.subr.mxu0 0.0
        %868 = vmatpush1.msra.mxu0 %v813
        %869 = vmatprep.subr.mxu0 0.0
        %870 = vmatpush2.msra.mxu0 0.0
        %871 = vmatprep.subr.mxu0 0.0
        %872 = vmatpush2.msra.mxu0 0.0
        %873 = vmatprep.subr.mxu0 0.0
        %874 = vmatpush2.msra.mxu0 0.0
        %875 = vmatprep.subr.mxu0 0.0
        %876 = vmatpush2.msra.mxu0 0.0
        %877 = vmatprep.subr.mxu0 0.0
        %878 = vmatpush2.msra.mxu0 0.0
        %879 = vmatprep.subr.mxu0 0.0
        %880 = vmatpush2.msra.mxu0 0.0
        %881 = vmatprep.subr.mxu0 0.0
        %882 = vmatpush2.msra.mxu0 0.0
        %883 = vmatprep.subr.mxu0 0.0
        %884 = vmatpush2.msra.mxu0 0.0
        %885 = vmatprep.subr.mxu0 0.0
        %886 = vmatpush2.msra.mxu0 0.0
        %887 = vmatprep.subr.mxu0 0.0
        %888 = vmatpush2.msra.mxu0 0.0
        %889 = vmatprep.subr.mxu0 0.0
        %890 = vmatpush2.msra.mxu0 0.0
        %891 = vmatprep.subr.mxu0 0.0
        %892 = vmatpush2.msra.mxu0 0.0
        %893 = vmatprep.subr.mxu0 0.0
        %894 = vmatpush2.msra.mxu0 0.0
        %895 = vmatprep.subr.mxu0 0.0
        %896 = vmatpush2.msra.mxu0 0.0
        %897 = vmatprep.subr.mxu0 0.0
        %898 = vmatpush2.msra.mxu0 0.0
        %899 = vmatprep.subr.mxu0 0.0
        %900 = vmatpush2.msra.mxu0 0.0
        %901 = vmatprep.mubr.f32.mxu0 0.0
        %902 = vmatmul.mubr.f32.gmra.mxu0 %v809
        %v903 = vpop.f32.mrf.mxu0
        %v904 = vadd.f32 %v835, %v903
        %v905 = vpop.f32.mrf.mxu0
        %906 = vmatprep.mubr.f32.mxu0 0.0
        %907 = vmatmul.mubr.f32.gmra.mxu0 %v810
        %v908 = vpop.f32.mrf.mxu0
        %v909 = vadd.f32 %v835, %v908
        %v910 = vpop.f32.mrf.mxu0
        %911 = vmatprep.mubr.f32.mxu0 0.0
        %912 = vmatmul.mubr.f32.gmra.mxu0 %v811
        %v913 = vpop.f32.mrf.mxu0
        %v914 = vadd.f32 %v835, %v913
        %v915 = vpop.f32.mrf.mxu0
        %916 = vdwg.mxu0
        %v917 = vmax.f32 %v904, 0.0
        %v918 = vmax.f32 %v909, 0.0
        %v919 = vmax.f32 %v914, 0.0
        %s920 = scalar_lea.vmem [#allocation2], 128
        %v921 = vld [vmem:[%s920] sm:$0xff]
        %v922 = vld [vmem:[%s920 + $0x8] sm:$0xff]
        %v923 = vld [vmem:[%s920 + $0x10] sm:$0xff]
        %v924 = vld [vmem:[%s920 + $0x18] sm:$0xff]
        %v925 = vld [vmem:[%s920 + $0x20] sm:$0xff]
        %v926 = vld [vmem:[%s920 + $0x28] sm:$0xff]
        %v927 = vld [vmem:[%s920 + $0x30] sm:$0xff]
        %v928 = vld [vmem:[%s920 + $0x38] sm:$0xff]
        %v929 = vld [vmem:[%s920 + $0x40] sm:$0xff]
        %v930 = vld [vmem:[%s920 + $0x48] sm:$0xff]
        %v931 = vld [vmem:[%s920 + $0x50] sm:$0xff]
        %v932 = vld [vmem:[%s920 + $0x58] sm:$0xff]
        %v933 = vld [vmem:[%s920 + $0x60] sm:$0xff]
        %v934 = vld [vmem:[%s920 + $0x68] sm:$0xff]
        %v935 = vld [vmem:[%s920 + $0x70] sm:$0xff]
        %v936 = vld [vmem:[%s920 + $0x78] sm:$0xff]
        %s937 = scalar_lea.vmem [#allocation5], 128
        %v938 = vld [vmem:[%s937] sm:$0xff]
        %v939 = vld [vmem:[%s937 + $0x8] sm:$0xff]
        %v940 = vld [vmem:[%s937 + $0x10] sm:$0xff]
        %v941 = vld [vmem:[%s937 + $0x18] sm:$0xff]
        %v942 = vld [vmem:[%s937 + $0x20] sm:$0xff]
        %v943 = vld [vmem:[%s937 + $0x28] sm:$0xff]
        %v944 = vld [vmem:[%s937 + $0x30] sm:$0xff]
        %v945 = vld [vmem:[%s937 + $0x38] sm:$0xff]
        %v946 = vld [vmem:[%s937 + $0x40] sm:$0xff]
        %v947 = vld [vmem:[%s937 + $0x48] sm:$0xff]
        %v948 = vld [vmem:[%s937 + $0x50] sm:$0xff]
        %v949 = vld [vmem:[%s937 + $0x58] sm:$0xff]
        %v950 = vld [vmem:[%s937 + $0x60] sm:$0xff]
        %v951 = vld [vmem:[%s937 + $0x68] sm:$0xff]
        %v952 = vld [vmem:[%s937 + $0x70] sm:$0xff]
        %v953 = vld [vmem:[%s937 + $0x78] sm:$0xff]
        %vm957 = vcmask 1045504
        %v958 = vrot.slane %v917, 2
        %v959 = vrot.slane %v918, 2
        %v960 = vsel %vm957, %v958, %v959
        %v961 = vrot.slane %v919, 2
        %v962 = vsel %vm957, %v959, %v961
        %966 = vmatprep.subr.mxu0 0.0
        %967 = vmatpush1.msra.mxu0 %v953
        %968 = vmatprep.subr.mxu0 0.0
        %969 = vmatpush1.msra.mxu0 %v952
        %970 = vmatprep.subr.mxu0 0.0
        %971 = vmatpush1.msra.mxu0 %v951
        %972 = vmatprep.subr.mxu0 0.0
        %973 = vmatpush1.msra.mxu0 %v950
        %974 = vmatprep.subr.mxu0 0.0
        %975 = vmatpush1.msra.mxu0 %v949
        %976 = vmatprep.subr.mxu0 0.0
        %977 = vmatpush1.msra.mxu0 %v948
        %978 = vmatprep.subr.mxu0 0.0
        %979 = vmatpush1.msra.mxu0 %v947
        %980 = vmatprep.subr.mxu0 0.0
        %981 = vmatpush1.msra.mxu0 %v946
        %982 = vmatprep.subr.mxu0 0.0
        %983 = vmatpush1.msra.mxu0 %v945
        %984 = vmatprep.subr.mxu0 0.0
        %985 = vmatpush1.msra.mxu0 %v944
        %986 = vmatprep.subr.mxu0 0.0
        %987 = vmatpush1.msra.mxu0 %v943
        %988 = vmatprep.subr.mxu0 0.0
        %989 = vmatpush1.msra.mxu0 %v942
        %990 = vmatprep.subr.mxu0 0.0
        %991 = vmatpush1.msra.mxu0 %v941
        %992 = vmatprep.subr.mxu0 0.0
        %993 = vmatpush1.msra.mxu0 %v940
        %994 = vmatprep.subr.mxu0 0.0
        %995 = vmatpush1.msra.mxu0 %v939
        %996 = vmatprep.subr.mxu0 0.0
        %997 = vmatpush1.msra.mxu0 %v938
        %998 = vmatprep.subr.mxu0 0.0
        %999 = vmatpush2.msra.mxu0 0.0
        %1000 = vmatprep.subr.mxu0 0.0
        %1001 = vmatpush2.msra.mxu0 0.0
        %1002 = vmatprep.subr.mxu0 0.0
        %1003 = vmatpush2.msra.mxu0 0.0
        %1004 = vmatprep.subr.mxu0 0.0
        %1005 = vmatpush2.msra.mxu0 0.0
        %1006 = vmatprep.subr.mxu0 0.0
        %1007 = vmatpush2.msra.mxu0 0.0
        %1008 = vmatprep.subr.mxu0 0.0
        %1009 = vmatpush2.msra.mxu0 0.0
        %1010 = vmatprep.subr.mxu0 0.0
        %1011 = vmatpush2.msra.mxu0 0.0
        %1012 = vmatprep.subr.mxu0 0.0
        %1013 = vmatpush2.msra.mxu0 0.0
        %1014 = vmatprep.subr.mxu0 0.0
        %1015 = vmatpush2.msra.mxu0 0.0
        %1016 = vmatprep.subr.mxu0 0.0
        %1017 = vmatpush2.msra.mxu0 0.0
        %1018 = vmatprep.subr.mxu0 0.0
        %1019 = vmatpush2.msra.mxu0 0.0
        %1020 = vmatprep.subr.mxu0 0.0
        %1021 = vmatpush2.msra.mxu0 0.0
        %1022 = vmatprep.subr.mxu0 0.0
        %1023 = vmatpush2.msra.mxu0 0.0
        %1024 = vmatprep.subr.mxu0 0.0
        %1025 = vmatpush2.msra.mxu0 0.0
        %1026 = vmatprep.subr.mxu0 0.0
        %1027 = vmatpush2.msra.mxu0 0.0
        %1028 = vmatprep.subr.mxu0 0.0
        %1029 = vmatpush2.msra.mxu0 0.0
        %1030 = vmatprep.mubr.f32.mxu0 0.0
        %1031 = vmatmul.mubr.f32.gmra.mxu0 %v960
        %v1032 = vpop.f32.mrf.mxu0
        %v1033 = vadd.f32 0.0, %v1032
        %v1034 = vpop.f32.mrf.mxu0
        %1035 = vmatprep.mubr.f32.mxu0 0.0
        %1036 = vmatmul.mubr.f32.gmra.mxu0 %v962
        %v1037 = vpop.f32.mrf.mxu0
        %v1038 = vadd.f32 0.0, %v1037
        %v1039 = vpop.f32.mrf.mxu0
        %1040 = vmatprep.mubr.f32.mxu0 0.0
        %1041 = vmatmul.mubr.f32.gmra.mxu0 %v961
        %v1042 = vpop.f32.mrf.mxu0
        %v1043 = vadd.f32 0.0, %v1042
        %v1044 = vpop.f32.mrf.mxu0
        %1045 = vdwg.mxu0
        %1046 = vmatprep.subr.mxu0 0.0
        %1047 = vmatpush1.msra.mxu0 %v936
        %1048 = vmatprep.subr.mxu0 0.0
        %1049 = vmatpush1.msra.mxu0 %v935
        %1050 = vmatprep.subr.mxu0 0.0
        %1051 = vmatpush1.msra.mxu0 %v934
        %1052 = vmatprep.subr.mxu0 0.0
        %1053 = vmatpush1.msra.mxu0 %v933
        %1054 = vmatprep.subr.mxu0 0.0
        %1055 = vmatpush1.msra.mxu0 %v932
        %1056 = vmatprep.subr.mxu0 0.0
        %1057 = vmatpush1.msra.mxu0 %v931
        %1058 = vmatprep.subr.mxu0 0.0
        %1059 = vmatpush1.msra.mxu0 %v930
        %1060 = vmatprep.subr.mxu0 0.0
        %1061 = vmatpush1.msra.mxu0 %v929
        %1062 = vmatprep.subr.mxu0 0.0
        %1063 = vmatpush1.msra.mxu0 %v928
        %1064 = vmatprep.subr.mxu0 0.0
        %1065 = vmatpush1.msra.mxu0 %v927
        %1066 = vmatprep.subr.mxu0 0.0
        %1067 = vmatpush1.msra.mxu0 %v926
        %1068 = vmatprep.subr.mxu0 0.0
        %1069 = vmatpush1.msra.mxu0 %v925
        %1070 = vmatprep.subr.mxu0 0.0
        %1071 = vmatpush1.msra.mxu0 %v924
        %1072 = vmatprep.subr.mxu0 0.0
        %1073 = vmatpush1.msra.mxu0 %v923
        %1074 = vmatprep.subr.mxu0 0.0
        %1075 = vmatpush1.msra.mxu0 %v922
        %1076 = vmatprep.subr.mxu0 0.0
        %1077 = vmatpush1.msra.mxu0 %v921
        %1078 = vmatprep.subr.mxu0 0.0
        %1079 = vmatpush2.msra.mxu0 0.0
        %1080 = vmatprep.subr.mxu0 0.0
        %1081 = vmatpush2.msra.mxu0 0.0
        %1082 = vmatprep.subr.mxu0 0.0
        %1083 = vmatpush2.msra.mxu0 0.0
        %1084 = vmatprep.subr.mxu0 0.0
        %1085 = vmatpush2.msra.mxu0 0.0
        %1086 = vmatprep.subr.mxu0 0.0
        %1087 = vmatpush2.msra.mxu0 0.0
        %1088 = vmatprep.subr.mxu0 0.0
        %1089 = vmatpush2.msra.mxu0 0.0
        %1090 = vmatprep.subr.mxu0 0.0
        %1091 = vmatpush2.msra.mxu0 0.0
        %1092 = vmatprep.subr.mxu0 0.0
        %1093 = vmatpush2.msra.mxu0 0.0
        %1094 = vmatprep.subr.mxu0 0.0
        %1095 = vmatpush2.msra.mxu0 0.0
        %1096 = vmatprep.subr.mxu0 0.0
        %1097 = vmatpush2.msra.mxu0 0.0
        %1098 = vmatprep.subr.mxu0 0.0
        %1099 = vmatpush2.msra.mxu0 0.0
        %1100 = vmatprep.subr.mxu0 0.0
        %1101 = vmatpush2.msra.mxu0 0.0
        %1102 = vmatprep.subr.mxu0 0.0
        %1103 = vmatpush2.msra.mxu0 0.0
        %1104 = vmatprep.subr.mxu0 0.0
        %1105 = vmatpush2.msra.mxu0 0.0
        %1106 = vmatprep.subr.mxu0 0.0
        %1107 = vmatpush2.msra.mxu0 0.0
        %1108 = vmatprep.subr.mxu0 0.0
        %1109 = vmatpush2.msra.mxu0 0.0
        %1110 = vmatprep.mubr.f32.mxu0 0.0
        %1111 = vmatmul.mubr.f32.gmra.mxu0 %v917
        %v1112 = vpop.f32.mrf.mxu0
        %v1113 = vadd.f32 %v1033, %v1112
        %v1114 = vpop.f32.mrf.mxu0
        %1115 = vmatprep.mubr.f32.mxu0 0.0
        %1116 = vmatmul.mubr.f32.gmra.mxu0 %v918
        %v1117 = vpop.f32.mrf.mxu0
        %v1118 = vadd.f32 %v1038, %v1117
        %v1119 = vpop.f32.mrf.mxu0
        %1120 = vmatprep.mubr.f32.mxu0 0.0
        %1121 = vmatmul.mubr.f32.gmra.mxu0 %v919
        %v1122 = vpop.f32.mrf.mxu0
        %v1123 = vadd.f32 %v1043, %v1122
        %v1124 = vpop.f32.mrf.mxu0
        %1125 = vdwg.mxu0
        %s1126 = scalar_lea.vmem %s5, 1
        %v1127 = vld [vmem:[%s1126] sm:$0x1]
        %v1129 = vlaneseq
        %v1130 = vshrl.u32 %v1129, 7
        %v1131 = vsub.s32 0, %v1130
        %v1132 = vrot.slane %v1127, %v1131
        %v1134 = vadd.f32 %v1113, %v1132
        %v1135 = vadd.f32 %v1118, %v1132
        %v1136 = vadd.f32 %v1123, %v1132
        %v1137 = vmax.f32 %v1134, 0.0
        %v1138 = vmax.f32 %v1135, 0.0
        %v1139 = vmax.f32 %v1136, 0.0
        %s1140 = scalar_lea.vmem [#allocation7], 256
        %v1141 = vld [vmem:[%s1140] sm:$0xff]
        %v1142 = vld [vmem:[%s1140 + $0x8] sm:$0xff]
        %v1143 = vld [vmem:[%s1140 + $0x10] sm:$0xff]
        %v1144 = vld [vmem:[%s1140 + $0x18] sm:$0xff]
        %v1145 = vld [vmem:[%s1140 + $0x20] sm:$0xff]
        %v1146 = vld [vmem:[%s1140 + $0x28] sm:$0xff]
        %v1147 = vld [vmem:[%s1140 + $0x30] sm:$0xff]
        %v1148 = vld [vmem:[%s1140 + $0x38] sm:$0xff]
        %v1149 = vld [vmem:[%s1140 + $0x40] sm:$0xff]
        %v1150 = vld [vmem:[%s1140 + $0x48] sm:$0xff]
        %v1151 = vld [vmem:[%s1140 + $0x50] sm:$0xff]
        %v1152 = vld [vmem:[%s1140 + $0x58] sm:$0xff]
        %v1153 = vld [vmem:[%s1140 + $0x60] sm:$0xff]
        %v1154 = vld [vmem:[%s1140 + $0x68] sm:$0xff]
        %v1155 = vld [vmem:[%s1140 + $0x70] sm:$0xff]
        %v1156 = vld [vmem:[%s1140 + $0x78] sm:$0xff]
        %s1157 = scalar_lea.vmem %s7, 2
        %v1158 = vld [vmem:[%s1157] sm:$0x1]
        %v1160 = vlaneseq
        %v1161 = vshrl.u32 %v1160, 7
        %v1162 = vsub.s32 0, %v1161
        %v1163 = vrot.slane %v1158, %v1162
        %1165 = vmatprep.subr.mxu0 0.0
        %1166 = vmatpush1.msra.mxu0 %v1156
        %1167 = vmatprep.subr.mxu0 0.0
        %1168 = vmatpush1.msra.mxu0 %v1155
        %1169 = vmatprep.subr.mxu0 0.0
        %1170 = vmatpush1.msra.mxu0 %v1154
        %1171 = vmatprep.subr.mxu0 0.0
        %1172 = vmatpush1.msra.mxu0 %v1153
        %1173 = vmatprep.subr.mxu0 0.0
        %1174 = vmatpush1.msra.mxu0 %v1152
        %1175 = vmatprep.subr.mxu0 0.0
        %1176 = vmatpush1.msra.mxu0 %v1151
        %1177 = vmatprep.subr.mxu0 0.0
        %1178 = vmatpush1.msra.mxu0 %v1150
        %1179 = vmatprep.subr.mxu0 0.0
        %1180 = vmatpush1.msra.mxu0 %v1149
        %1181 = vmatprep.subr.mxu0 0.0
        %1182 = vmatpush1.msra.mxu0 %v1148
        %1183 = vmatprep.subr.mxu0 0.0
        %1184 = vmatpush1.msra.mxu0 %v1147
        %1185 = vmatprep.subr.mxu0 0.0
        %1186 = vmatpush1.msra.mxu0 %v1146
        %1187 = vmatprep.subr.mxu0 0.0
        %1188 = vmatpush1.msra.mxu0 %v1145
        %1189 = vmatprep.subr.mxu0 0.0
        %1190 = vmatpush1.msra.mxu0 %v1144
        %1191 = vmatprep.subr.mxu0 0.0
        %1192 = vmatpush1.msra.mxu0 %v1143
        %1193 = vmatprep.subr.mxu0 0.0
        %1194 = vmatpush1.msra.mxu0 %v1142
        %1195 = vmatprep.subr.mxu0 0.0
        %1196 = vmatpush1.msra.mxu0 %v1141
        %1197 = vmatprep.subr.mxu0 0.0
        %1198 = vmatpush2.msra.mxu0 0.0
        %1199 = vmatprep.subr.mxu0 0.0
        %1200 = vmatpush2.msra.mxu0 0.0
        %1201 = vmatprep.subr.mxu0 0.0
        %1202 = vmatpush2.msra.mxu0 0.0
        %1203 = vmatprep.subr.mxu0 0.0
        %1204 = vmatpush2.msra.mxu0 0.0
        %1205 = vmatprep.subr.mxu0 0.0
        %1206 = vmatpush2.msra.mxu0 0.0
        %1207 = vmatprep.subr.mxu0 0.0
        %1208 = vmatpush2.msra.mxu0 0.0
        %1209 = vmatprep.subr.mxu0 0.0
        %1210 = vmatpush2.msra.mxu0 0.0
        %1211 = vmatprep.subr.mxu0 0.0
        %1212 = vmatpush2.msra.mxu0 0.0
        %1213 = vmatprep.subr.mxu0 0.0
        %1214 = vmatpush2.msra.mxu0 0.0
        %1215 = vmatprep.subr.mxu0 0.0
        %1216 = vmatpush2.msra.mxu0 0.0
        %1217 = vmatprep.subr.mxu0 0.0
        %1218 = vmatpush2.msra.mxu0 0.0
        %1219 = vmatprep.subr.mxu0 0.0
        %1220 = vmatpush2.msra.mxu0 0.0
        %1221 = vmatprep.subr.mxu0 0.0
        %1222 = vmatpush2.msra.mxu0 0.0
        %1223 = vmatprep.subr.mxu0 0.0
        %1224 = vmatpush2.msra.mxu0 0.0
        %1225 = vmatprep.subr.mxu0 0.0
        %1226 = vmatpush2.msra.mxu0 0.0
        %1227 = vmatprep.subr.mxu0 0.0
        %1228 = vmatpush2.msra.mxu0 0.0
        %1229 = vmatprep.mubr.f32.mxu0 0.0
        %1230 = vmatmul.mubr.f32.gmra.mxu0 %v1137
        %v1231 = vpop.f32.mrf.mxu0
        %v1232 = vadd.f32 %v1163, %v1231
        %v1233 = vpop.f32.mrf.mxu0
        %1234 = vmatprep.mubr.f32.mxu0 0.0
        %1235 = vmatmul.mubr.f32.gmra.mxu0 %v1138
        %v1236 = vpop.f32.mrf.mxu0
        %v1237 = vadd.f32 %v1163, %v1236
        %v1238 = vpop.f32.mrf.mxu0
        %1239 = vmatprep.mubr.f32.mxu0 0.0
        %1240 = vmatmul.mubr.f32.gmra.mxu0 %v1139
        %v1241 = vpop.f32.mrf.mxu0
        %v1242 = vadd.f32 %v1163, %v1241
        %v1243 = vpop.f32.mrf.mxu0
        %1244 = vdwg.mxu0
        %v1245 = vmax.f32 %v1232, 0.0
        %v1246 = vmax.f32 %v1237, 0.0
        %v1247 = vmax.f32 %v1242, 0.0
        %s1248 = scalar_lea.vmem [#allocation2], 256
        %v1249 = vld [vmem:[%s1248] sm:$0xff]
        %v1250 = vld [vmem:[%s1248 + $0x8] sm:$0xff]
        %v1251 = vld [vmem:[%s1248 + $0x10] sm:$0xff]
        %v1252 = vld [vmem:[%s1248 + $0x18] sm:$0xff]
        %v1253 = vld [vmem:[%s1248 + $0x20] sm:$0xff]
        %v1254 = vld [vmem:[%s1248 + $0x28] sm:$0xff]
        %v1255 = vld [vmem:[%s1248 + $0x30] sm:$0xff]
        %v1256 = vld [vmem:[%s1248 + $0x38] sm:$0xff]
        %v1257 = vld [vmem:[%s1248 + $0x40] sm:$0xff]
        %v1258 = vld [vmem:[%s1248 + $0x48] sm:$0xff]
        %v1259 = vld [vmem:[%s1248 + $0x50] sm:$0xff]
        %v1260 = vld [vmem:[%s1248 + $0x58] sm:$0xff]
        %v1261 = vld [vmem:[%s1248 + $0x60] sm:$0xff]
        %v1262 = vld [vmem:[%s1248 + $0x68] sm:$0xff]
        %v1263 = vld [vmem:[%s1248 + $0x70] sm:$0xff]
        %v1264 = vld [vmem:[%s1248 + $0x78] sm:$0xff]
        %s1265 = scalar_lea.vmem [#allocation5], 256
        %v1266 = vld [vmem:[%s1265] sm:$0xff]
        %v1267 = vld [vmem:[%s1265 + $0x8] sm:$0xff]
        %v1268 = vld [vmem:[%s1265 + $0x10] sm:$0xff]
        %v1269 = vld [vmem:[%s1265 + $0x18] sm:$0xff]
        %v1270 = vld [vmem:[%s1265 + $0x20] sm:$0xff]
        %v1271 = vld [vmem:[%s1265 + $0x28] sm:$0xff]
        %v1272 = vld [vmem:[%s1265 + $0x30] sm:$0xff]
        %v1273 = vld [vmem:[%s1265 + $0x38] sm:$0xff]
        %v1274 = vld [vmem:[%s1265 + $0x40] sm:$0xff]
        %v1275 = vld [vmem:[%s1265 + $0x48] sm:$0xff]
        %v1276 = vld [vmem:[%s1265 + $0x50] sm:$0xff]
        %v1277 = vld [vmem:[%s1265 + $0x58] sm:$0xff]
        %v1278 = vld [vmem:[%s1265 + $0x60] sm:$0xff]
        %v1279 = vld [vmem:[%s1265 + $0x68] sm:$0xff]
        %v1280 = vld [vmem:[%s1265 + $0x70] sm:$0xff]
        %v1281 = vld [vmem:[%s1265 + $0x78] sm:$0xff]
        %vm1285 = vcmask 1046528
        %v1286 = vrot.slane %v1245, 1
        %v1287 = vrot.slane %v1246, 1
        %v1288 = vsel %vm1285, %v1286, %v1287
        %v1289 = vrot.slane %v1247, 1
        %v1290 = vsel %vm1285, %v1287, %v1289
        %1293 = vmatprep.subr.mxu0 0.0
        %1294 = vmatpush1.msra.mxu0 %v1281
        %1295 = vmatprep.subr.mxu0 0.0
        %1296 = vmatpush1.msra.mxu0 %v1280
        %1297 = vmatprep.subr.mxu0 0.0
        %1298 = vmatpush1.msra.mxu0 %v1279
        %1299 = vmatprep.subr.mxu0 0.0
        %1300 = vmatpush1.msra.mxu0 %v1278
        %1301 = vmatprep.subr.mxu0 0.0
        %1302 = vmatpush1.msra.mxu0 %v1277
        %1303 = vmatprep.subr.mxu0 0.0
        %1304 = vmatpush1.msra.mxu0 %v1276
        %1305 = vmatprep.subr.mxu0 0.0
        %1306 = vmatpush1.msra.mxu0 %v1275
        %1307 = vmatprep.subr.mxu0 0.0
        %1308 = vmatpush1.msra.mxu0 %v1274
        %1309 = vmatprep.subr.mxu0 0.0
        %1310 = vmatpush1.msra.mxu0 %v1273
        %1311 = vmatprep.subr.mxu0 0.0
        %1312 = vmatpush1.msra.mxu0 %v1272
        %1313 = vmatprep.subr.mxu0 0.0
        %1314 = vmatpush1.msra.mxu0 %v1271
        %1315 = vmatprep.subr.mxu0 0.0
        %1316 = vmatpush1.msra.mxu0 %v1270
        %1317 = vmatprep.subr.mxu0 0.0
        %1318 = vmatpush1.msra.mxu0 %v1269
        %1319 = vmatprep.subr.mxu0 0.0
        %1320 = vmatpush1.msra.mxu0 %v1268
        %1321 = vmatprep.subr.mxu0 0.0
        %1322 = vmatpush1.msra.mxu0 %v1267
        %1323 = vmatprep.subr.mxu0 0.0
        %1324 = vmatpush1.msra.mxu0 %v1266
        %1325 = vmatprep.subr.mxu0 0.0
        %1326 = vmatpush2.msra.mxu0 0.0
        %1327 = vmatprep.subr.mxu0 0.0
        %1328 = vmatpush2.msra.mxu0 0.0
        %1329 = vmatprep.subr.mxu0 0.0
        %1330 = vmatpush2.msra.mxu0 0.0
        %1331 = vmatprep.subr.mxu0 0.0
        %1332 = vmatpush2.msra.mxu0 0.0
        %1333 = vmatprep.subr.mxu0 0.0
        %1334 = vmatpush2.msra.mxu0 0.0
        %1335 = vmatprep.subr.mxu0 0.0
        %1336 = vmatpush2.msra.mxu0 0.0
        %1337 = vmatprep.subr.mxu0 0.0
        %1338 = vmatpush2.msra.mxu0 0.0
        %1339 = vmatprep.subr.mxu0 0.0
        %1340 = vmatpush2.msra.mxu0 0.0
        %1341 = vmatprep.subr.mxu0 0.0
        %1342 = vmatpush2.msra.mxu0 0.0
        %1343 = vmatprep.subr.mxu0 0.0
        %1344 = vmatpush2.msra.mxu0 0.0
        %1345 = vmatprep.subr.mxu0 0.0
        %1346 = vmatpush2.msra.mxu0 0.0
        %1347 = vmatprep.subr.mxu0 0.0
        %1348 = vmatpush2.msra.mxu0 0.0
        %1349 = vmatprep.subr.mxu0 0.0
        %1350 = vmatpush2.msra.mxu0 0.0
        %1351 = vmatprep.subr.mxu0 0.0
        %1352 = vmatpush2.msra.mxu0 0.0
        %1353 = vmatprep.subr.mxu0 0.0
        %1354 = vmatpush2.msra.mxu0 0.0
        %1355 = vmatprep.subr.mxu0 0.0
        %1356 = vmatpush2.msra.mxu0 0.0
        %1357 = vmatprep.mubr.f32.mxu0 0.0
        %1358 = vmatmul.mubr.f32.gmra.mxu0 %v1288
        %v1359 = vpop.f32.mrf.mxu0
        %v1360 = vadd.f32 0.0, %v1359
        %v1361 = vpop.f32.mrf.mxu0
        %1362 = vmatprep.mubr.f32.mxu0 0.0
        %1363 = vmatmul.mubr.f32.gmra.mxu0 %v1290
        %v1364 = vpop.f32.mrf.mxu0
        %v1365 = vadd.f32 0.0, %v1364
        %v1366 = vpop.f32.mrf.mxu0
        %1367 = vdwg.mxu0
        %1368 = vmatprep.subr.mxu0 0.0
        %1369 = vmatpush1.msra.mxu0 %v1264
        %1370 = vmatprep.subr.mxu0 0.0
        %1371 = vmatpush1.msra.mxu0 %v1263
        %1372 = vmatprep.subr.mxu0 0.0
        %1373 = vmatpush1.msra.mxu0 %v1262
        %1374 = vmatprep.subr.mxu0 0.0
        %1375 = vmatpush1.msra.mxu0 %v1261
        %1376 = vmatprep.subr.mxu0 0.0
        %1377 = vmatpush1.msra.mxu0 %v1260
        %1378 = vmatprep.subr.mxu0 0.0
        %1379 = vmatpush1.msra.mxu0 %v1259
        %1380 = vmatprep.subr.mxu0 0.0
        %1381 = vmatpush1.msra.mxu0 %v1258
        %1382 = vmatprep.subr.mxu0 0.0
        %1383 = vmatpush1.msra.mxu0 %v1257
        %1384 = vmatprep.subr.mxu0 0.0
        %1385 = vmatpush1.msra.mxu0 %v1256
        %1386 = vmatprep.subr.mxu0 0.0
        %1387 = vmatpush1.msra.mxu0 %v1255
        %1388 = vmatprep.subr.mxu0 0.0
        %1389 = vmatpush1.msra.mxu0 %v1254
        %1390 = vmatprep.subr.mxu0 0.0
        %1391 = vmatpush1.msra.mxu0 %v1253
        %1392 = vmatprep.subr.mxu0 0.0
        %1393 = vmatpush1.msra.mxu0 %v1252
        %1394 = vmatprep.subr.mxu0 0.0
        %1395 = vmatpush1.msra.mxu0 %v1251
        %1396 = vmatprep.subr.mxu0 0.0
        %1397 = vmatpush1.msra.mxu0 %v1250
        %1398 = vmatprep.subr.mxu0 0.0
        %1399 = vmatpush1.msra.mxu0 %v1249
        %1400 = vmatprep.subr.mxu0 0.0
        %1401 = vmatpush2.msra.mxu0 0.0
        %1402 = vmatprep.subr.mxu0 0.0
        %1403 = vmatpush2.msra.mxu0 0.0
        %1404 = vmatprep.subr.mxu0 0.0
        %1405 = vmatpush2.msra.mxu0 0.0
        %1406 = vmatprep.subr.mxu0 0.0
        %1407 = vmatpush2.msra.mxu0 0.0
        %1408 = vmatprep.subr.mxu0 0.0
        %1409 = vmatpush2.msra.mxu0 0.0
        %1410 = vmatprep.subr.mxu0 0.0
        %1411 = vmatpush2.msra.mxu0 0.0
        %1412 = vmatprep.subr.mxu0 0.0
        %1413 = vmatpush2.msra.mxu0 0.0
        %1414 = vmatprep.subr.mxu0 0.0
        %1415 = vmatpush2.msra.mxu0 0.0
        %1416 = vmatprep.subr.mxu0 0.0
        %1417 = vmatpush2.msra.mxu0 0.0
        %1418 = vmatprep.subr.mxu0 0.0
        %1419 = vmatpush2.msra.mxu0 0.0
        %1420 = vmatprep.subr.mxu0 0.0
        %1421 = vmatpush2.msra.mxu0 0.0
        %1422 = vmatprep.subr.mxu0 0.0
        %1423 = vmatpush2.msra.mxu0 0.0
        %1424 = vmatprep.subr.mxu0 0.0
        %1425 = vmatpush2.msra.mxu0 0.0
        %1426 = vmatprep.subr.mxu0 0.0
        %1427 = vmatpush2.msra.mxu0 0.0
        %1428 = vmatprep.subr.mxu0 0.0
        %1429 = vmatpush2.msra.mxu0 0.0
        %1430 = vmatprep.subr.mxu0 0.0
        %1431 = vmatpush2.msra.mxu0 0.0
        %1432 = vmatprep.mubr.f32.mxu0 0.0
        %1433 = vmatmul.mubr.f32.gmra.mxu0 %v1245
        %v1434 = vpop.f32.mrf.mxu0
        %v1435 = vadd.f32 %v1360, %v1434
        %v1436 = vpop.f32.mrf.mxu0
        %1437 = vmatprep.mubr.f32.mxu0 0.0
        %1438 = vmatmul.mubr.f32.gmra.mxu0 %v1246
        %v1439 = vpop.f32.mrf.mxu0
        %v1440 = vadd.f32 %v1365, %v1439
        %v1441 = vpop.f32.mrf.mxu0
        %1442 = vdwg.mxu0
        %s1443 = scalar_lea.vmem %s5, 2
        %v1444 = vld [vmem:[%s1443] sm:$0x1]
        %v1446 = vlaneseq
        %v1447 = vshrl.u32 %v1446, 7
        %v1448 = vsub.s32 0, %v1447
        %v1449 = vrot.slane %v1444, %v1448
        %v1451 = vadd.f32 %v1435, %v1449
        %v1452 = vadd.f32 %v1440, %v1449
        %v1453 = vmax.f32 %v1451, 0.0
        %v1454 = vmax.f32 %v1452, 0.0
        %s1455 = scalar_lea.vmem [#allocation7], 384
        %v1456 = vld [vmem:[%s1455] sm:$0xff]
        %v1457 = vld [vmem:[%s1455 + $0x8] sm:$0xff]
        %v1458 = vld [vmem:[%s1455 + $0x10] sm:$0xff]
        %v1459 = vld [vmem:[%s1455 + $0x18] sm:$0xff]
        %v1460 = vld [vmem:[%s1455 + $0x20] sm:$0xff]
        %v1461 = vld [vmem:[%s1455 + $0x28] sm:$0xff]
        %v1462 = vld [vmem:[%s1455 + $0x30] sm:$0xff]
        %v1463 = vld [vmem:[%s1455 + $0x38] sm:$0xff]
        %v1464 = vld [vmem:[%s1455 + $0x40] sm:$0xff]
        %v1465 = vld [vmem:[%s1455 + $0x48] sm:$0xff]
        %v1466 = vld [vmem:[%s1455 + $0x50] sm:$0xff]
        %v1467 = vld [vmem:[%s1455 + $0x58] sm:$0xff]
        %v1468 = vld [vmem:[%s1455 + $0x60] sm:$0xff]
        %v1469 = vld [vmem:[%s1455 + $0x68] sm:$0xff]
        %v1470 = vld [vmem:[%s1455 + $0x70] sm:$0xff]
        %v1471 = vld [vmem:[%s1455 + $0x78] sm:$0xff]
        %s1472 = scalar_lea.vmem %s7, 3
        %v1473 = vld [vmem:[%s1472] sm:$0x1]
        %v1475 = vlaneseq
        %v1476 = vshrl.u32 %v1475, 7
        %v1477 = vsub.s32 0, %v1476
        %v1478 = vrot.slane %v1473, %v1477
        %1480 = vmatprep.subr.mxu0 0.0
        %1481 = vmatpush1.msra.mxu0 %v1471
        %1482 = vmatprep.subr.mxu0 0.0
        %1483 = vmatpush1.msra.mxu0 %v1470
        %1484 = vmatprep.subr.mxu0 0.0
        %1485 = vmatpush1.msra.mxu0 %v1469
        %1486 = vmatprep.subr.mxu0 0.0
        %1487 = vmatpush1.msra.mxu0 %v1468
        %1488 = vmatprep.subr.mxu0 0.0
        %1489 = vmatpush1.msra.mxu0 %v1467
        %1490 = vmatprep.subr.mxu0 0.0
        %1491 = vmatpush1.msra.mxu0 %v1466
        %1492 = vmatprep.subr.mxu0 0.0
        %1493 = vmatpush1.msra.mxu0 %v1465
        %1494 = vmatprep.subr.mxu0 0.0
        %1495 = vmatpush1.msra.mxu0 %v1464
        %1496 = vmatprep.subr.mxu0 0.0
        %1497 = vmatpush1.msra.mxu0 %v1463
        %1498 = vmatprep.subr.mxu0 0.0
        %1499 = vmatpush1.msra.mxu0 %v1462
        %1500 = vmatprep.subr.mxu0 0.0
        %1501 = vmatpush1.msra.mxu0 %v1461
        %1502 = vmatprep.subr.mxu0 0.0
        %1503 = vmatpush1.msra.mxu0 %v1460
        %1504 = vmatprep.subr.mxu0 0.0
        %1505 = vmatpush1.msra.mxu0 %v1459
        %1506 = vmatprep.subr.mxu0 0.0
        %1507 = vmatpush1.msra.mxu0 %v1458
        %1508 = vmatprep.subr.mxu0 0.0
        %1509 = vmatpush1.msra.mxu0 %v1457
        %1510 = vmatprep.subr.mxu0 0.0
        %1511 = vmatpush1.msra.mxu0 %v1456
        %1512 = vmatprep.subr.mxu0 0.0
        %1513 = vmatpush2.msra.mxu0 0.0
        %1514 = vmatprep.subr.mxu0 0.0
        %1515 = vmatpush2.msra.mxu0 0.0
        %1516 = vmatprep.subr.mxu0 0.0
        %1517 = vmatpush2.msra.mxu0 0.0
        %1518 = vmatprep.subr.mxu0 0.0
        %1519 = vmatpush2.msra.mxu0 0.0
        %1520 = vmatprep.subr.mxu0 0.0
        %1521 = vmatpush2.msra.mxu0 0.0
        %1522 = vmatprep.subr.mxu0 0.0
        %1523 = vmatpush2.msra.mxu0 0.0
        %1524 = vmatprep.subr.mxu0 0.0
        %1525 = vmatpush2.msra.mxu0 0.0
        %1526 = vmatprep.subr.mxu0 0.0
        %1527 = vmatpush2.msra.mxu0 0.0
        %1528 = vmatprep.subr.mxu0 0.0
        %1529 = vmatpush2.msra.mxu0 0.0
        %1530 = vmatprep.subr.mxu0 0.0
        %1531 = vmatpush2.msra.mxu0 0.0
        %1532 = vmatprep.subr.mxu0 0.0
        %1533 = vmatpush2.msra.mxu0 0.0
        %1534 = vmatprep.subr.mxu0 0.0
        %1535 = vmatpush2.msra.mxu0 0.0
        %1536 = vmatprep.subr.mxu0 0.0
        %1537 = vmatpush2.msra.mxu0 0.0
        %1538 = vmatprep.subr.mxu0 0.0
        %1539 = vmatpush2.msra.mxu0 0.0
        %1540 = vmatprep.subr.mxu0 0.0
        %1541 = vmatpush2.msra.mxu0 0.0
        %1542 = vmatprep.subr.mxu0 0.0
        %1543 = vmatpush2.msra.mxu0 0.0
        %1544 = vmatprep.mubr.f32.mxu0 0.0
        %1545 = vmatmul.mubr.f32.gmra.mxu0 %v1453
        %v1546 = vpop.f32.mrf.mxu0
        %v1547 = vadd.f32 %v1478, %v1546
        %v1548 = vpop.f32.mrf.mxu0
        %1549 = vmatprep.mubr.f32.mxu0 0.0
        %1550 = vmatmul.mubr.f32.gmra.mxu0 %v1454
        %v1551 = vpop.f32.mrf.mxu0
        %v1552 = vadd.f32 %v1478, %v1551
        %v1553 = vpop.f32.mrf.mxu0
        %1554 = vdwg.mxu0
        %v1555 = vmax.f32 %v1547, 0.0
        %v1556 = vmax.f32 %v1552, 0.0
        %v1557 = vld [vmem:[#allocation8] sm:$0xff]
        %v1558 = vld [vmem:[#allocation8 + $0x8] sm:$0xff]
        %v1559 = vld [vmem:[#allocation8 + $0x10] sm:$0xff]
        %v1560 = vld [vmem:[#allocation8 + $0x18] sm:$0xff]
        %v1561 = vld [vmem:[#allocation8 + $0x20] sm:$0xff]
        %v1562 = vld [vmem:[#allocation8 + $0x28] sm:$0xff]
        %v1563 = vld [vmem:[#allocation8 + $0x30] sm:$0xff]
        %v1564 = vld [vmem:[#allocation8 + $0x38] sm:$0xff]
        %v1565 = vld [vmem:[#allocation8 + $0x40] sm:$0xff]
        %v1566 = vld [vmem:[#allocation8 + $0x48] sm:$0xff]
        %v1567 = vld [vmem:[#allocation8 + $0x50] sm:$0xff]
        %v1568 = vld [vmem:[#allocation8 + $0x58] sm:$0xff]
        %v1569 = vld [vmem:[#allocation8 + $0x60] sm:$0xff]
        %v1570 = vld [vmem:[#allocation8 + $0x68] sm:$0xff]
        %v1571 = vld [vmem:[#allocation8 + $0x70] sm:$0xff]
        %v1572 = vld [vmem:[#allocation8 + $0x78] sm:$0xff]
        %v1573 = vld [vmem:[%s9] sm:$0x1]
        %v1575 = vlaneseq
        %v1576 = vshrl.u32 %v1575, 7
        %v1577 = vsub.s32 0, %v1576
        %v1578 = vrot.slane %v1573, %v1577
        %1580 = vmatprep.subr.mxu0 0.0
        %1581 = vmatpush1.msra.mxu0 %v1572
        %1582 = vmatprep.subr.mxu0 0.0
        %1583 = vmatpush1.msra.mxu0 %v1571
        %1584 = vmatprep.subr.mxu0 0.0
        %1585 = vmatpush1.msra.mxu0 %v1570
        %1586 = vmatprep.subr.mxu0 0.0
        %1587 = vmatpush1.msra.mxu0 %v1569
        %1588 = vmatprep.subr.mxu0 0.0
        %1589 = vmatpush1.msra.mxu0 %v1568
        %1590 = vmatprep.subr.mxu0 0.0
        %1591 = vmatpush1.msra.mxu0 %v1567
        %1592 = vmatprep.subr.mxu0 0.0
        %1593 = vmatpush1.msra.mxu0 %v1566
        %1594 = vmatprep.subr.mxu0 0.0
        %1595 = vmatpush1.msra.mxu0 %v1565
        %1596 = vmatprep.subr.mxu0 0.0
        %1597 = vmatpush1.msra.mxu0 %v1564
        %1598 = vmatprep.subr.mxu0 0.0
        %1599 = vmatpush1.msra.mxu0 %v1563
        %1600 = vmatprep.subr.mxu0 0.0
        %1601 = vmatpush1.msra.mxu0 %v1562
        %1602 = vmatprep.subr.mxu0 0.0
        %1603 = vmatpush1.msra.mxu0 %v1561
        %1604 = vmatprep.subr.mxu0 0.0
        %1605 = vmatpush1.msra.mxu0 %v1560
        %1606 = vmatprep.subr.mxu0 0.0
        %1607 = vmatpush1.msra.mxu0 %v1559
        %1608 = vmatprep.subr.mxu0 0.0
        %1609 = vmatpush1.msra.mxu0 %v1558
        %1610 = vmatprep.subr.mxu0 0.0
        %1611 = vmatpush1.msra.mxu0 %v1557
        %1612 = vmatprep.subr.mxu0 0.0
        %1613 = vmatpush2.msra.mxu0 0.0
        %1614 = vmatprep.subr.mxu0 0.0
        %1615 = vmatpush2.msra.mxu0 0.0
        %1616 = vmatprep.subr.mxu0 0.0
        %1617 = vmatpush2.msra.mxu0 0.0
        %1618 = vmatprep.subr.mxu0 0.0
        %1619 = vmatpush2.msra.mxu0 0.0
        %1620 = vmatprep.subr.mxu0 0.0
        %1621 = vmatpush2.msra.mxu0 0.0
        %1622 = vmatprep.subr.mxu0 0.0
        %1623 = vmatpush2.msra.mxu0 0.0
        %1624 = vmatprep.subr.mxu0 0.0
        %1625 = vmatpush2.msra.mxu0 0.0
        %1626 = vmatprep.subr.mxu0 0.0
        %1627 = vmatpush2.msra.mxu0 0.0
        %1628 = vmatprep.subr.mxu0 0.0
        %1629 = vmatpush2.msra.mxu0 0.0
        %1630 = vmatprep.subr.mxu0 0.0
        %1631 = vmatpush2.msra.mxu0 0.0
        %1632 = vmatprep.subr.mxu0 0.0
        %1633 = vmatpush2.msra.mxu0 0.0
        %1634 = vmatprep.subr.mxu0 0.0
        %1635 = vmatpush2.msra.mxu0 0.0
        %1636 = vmatprep.subr.mxu0 0.0
        %1637 = vmatpush2.msra.mxu0 0.0
        %1638 = vmatprep.subr.mxu0 0.0
        %1639 = vmatpush2.msra.mxu0 0.0
        %1640 = vmatprep.subr.mxu0 0.0
        %1641 = vmatpush2.msra.mxu0 0.0
        %1642 = vmatprep.subr.mxu0 0.0
        %1643 = vmatpush2.msra.mxu0 0.0
        %1644 = vmatprep.mubr.f32.mxu0 0.0
        %1645 = vmatmul.mubr.f32.gmra.mxu0 %v1555
        %v1646 = vpop.f32.mrf.mxu0
        %v1647 = vadd.f32 %v1578, %v1646
        %v1648 = vpop.f32.mrf.mxu0
        %1649 = vmatprep.mubr.f32.mxu0 0.0
        %1650 = vmatmul.mubr.f32.gmra.mxu0 %v1556
        %v1651 = vpop.f32.mrf.mxu0
        %v1652 = vadd.f32 %v1578, %v1651
        %v1653 = vpop.f32.mrf.mxu0
        %1654 = vdwg.mxu0
        %1655 = vmax.xlane.f32.xlu0 %v1647
        %v1656 = vpop.xlane.xlu0 %1655
        %1657 = vmax.xlane.f32.xlu0 %v1652
        %v1658 = vpop.xlane.xlu0 %1657
        %v1659 = vsub.f32 %v1647, %v1656
        %v1660 = vsub.f32 %v1652, %v1658
        %v1661 = vmul.f32 %v1659, 1.442695
        %v1662 = vpow.pop %v1661
        %v1663 = vmul.f32 %v1660, 1.442695
        %v1664 = vpow.pop %v1663
        %1665 = vadd.xlane.f32.xlu0 %v1662
        %v1666 = vpop.xlane.xlu0 %1665
        %1667 = vadd.xlane.f32.xlu0 %v1664
        %v1668 = vpop.xlane.xlu0 %1667
        %v1669 = vlog2.pop %v1666
        %v1670 = vmul.f32 %v1669, 0.6931472
        %v1671 = vlog2.pop %v1668
        %v1672 = vmul.f32 %v1671, 0.6931472
        %v1673 = vsub.f32 %v1659, %v1670
        %v1674 = vsub.f32 %v1660, %v1672
        %1675 = vst [vmem:[%s425] sm:$0xff] %v1673
        %1676 = vst [vmem:[%s425 + $0x8] sm:$0xff] %v1674
        %s1677 = sand.u32 %s264, 1
        %s1678 = scalar_lea.sflag [#allocation4], %s1677
        %s1679 = sand.u32 %s264, 1
        %s1680 = smul.addr %s1679, 16
        %s1681 = scalar_lea.vmem [#allocation10], %s1680
        // Predicated region
        $region77: #{tpu_custom_call.1} parent=59 // pred_check
          %p1682 = pneg %p274
        $region78: #{tpu_custom_call.1} parent=59 // pred_check_branch
          %1684 = sbr.rel (%p1682) target = $region80
        $region79: #{tpu_custom_call.1} parent=59 // pred_region
          %s1685 = smul.u32 2, %s32
          %s1687 = ssub.s32 256, 256
          %1688 = vsyncadd %s1678, %s1687
          %s1689 = smul.addr %s31, 4
          %s1690 = sadd.s32 %s1685, %s1689
          %s1691 = smul.addr %s1690, 128
          %s1692 = scalar_lea.hbm %s10, %s1691
          %s1693 = sshll.u32 %s1681, 4
          %s1694 = int_to_ptr.vmem [resolvable:$true] %s1693
          %1699 = dma.vmem_to_hbm [thread:$0]  %s1694, 256, %s1692, %s1678, 128, 128, 8
        $region80: #{tpu_custom_call.1} parent=59 // pred_fallthru
          _
      $region60: #{tpu_custom_call.1} parent=5 // pred_fallthru
        _
      %p1700 = scmp.le.s32.totalorder 2, %s22
      // Predicated region
      $region81: #{tpu_custom_call.1} parent=5 // pred_check
        %p1701 = pneg %p1700
      $region82: #{tpu_custom_call.1} parent=5 // pred_check_branch
        %1703 = sbr.rel (%p1701) target = $region84
      $region83: #{tpu_custom_call.1} parent=5 // pred_region
        %s1704 = ssub.s32 %s22, 2
        // Predicated region
        $region85: #{tpu_custom_call.1} parent=83 // pred_check
          %p1705 = pneg %p280
        $region86: #{tpu_custom_call.1} parent=83 // pred_check_branch
          %1707 = sbr.rel (%p1705) target = $region88
        $region87: #{tpu_custom_call.1} parent=83 // pred_region
          %s1708 = sand.u32 %s265, 1
          %s1709 = scalar_lea.sflag [#allocation4], %s1708
          %s1710 = sand.u32 %s265, 1
          %s1711 = smul.addr %s1710, 16
          %s1712 = scalar_lea.vmem [#allocation10], %s1711
          %1713 = dma.done %s1709, 256
        $region88: #{tpu_custom_call.1} parent=83 // pred_fallthru
          _
      $region84: #{tpu_custom_call.1} parent=5 // pred_fallthru
        _
    $region6: #{tpu_custom_call.1} parent=1 // loop_footer
      %s26 = sadd.s32 1, %s22
    $region7: #{tpu_custom_call.1} parent=1 // loop_footer_branch
      %21 = sbr.rel target = $region3
    $region8: #{tpu_custom_call.1} parent=1 // loop_exit
      _
    %1714 = vsyncpa [#allocation3], 1
    %s1715 = scalar_lea.sflag [#allocation3], 1
    %1716 = vsyncpa %s1715, 1
    %1717 = vsyncpa [#allocation6], 1
    %1718 = vsyncpa [#allocation9], 1
    %1719 = vsyncpa [#allocation4], 1
    %s1720 = scalar_lea.sflag [#allocation4], 1
    %1721 = vsyncpa %s1720, 1

// kernel: tpu_custom_call.1
$region0: #{tpu_custom_call.1}
  #allocation0 [shape = 'u32[]', space=smem, size = 0x4, offset = 0x4, fixed_abs, tag = 'smem constant byte address 0x4 - core index']
  #allocation1 [shape = 'u32[144,128]{1,0:T(1,128)}', space=vmem, size = 0x12000, scoped, tag = 'internal scratch']
  %s0 = inlined_call_operand.vmem [shape: f32[2,47,1], index: 0, kind: input, shape index: {}]
  %s1 = inlined_call_operand.vmem [shape: f32[2,128], index: 1, kind: input, shape index: {}]
  %s2 = inlined_call_operand.vmem [shape: f32[1,128], index: 2, kind: input, shape index: {}]
  %s3 = inlined_call_operand.hbm [shape: f32[3,128,128], index: 3, kind: input, shape index: {}]
  %s4 = inlined_call_operand.hbm [shape: f32[3,128,128], index: 4, kind: input, shape index: {}]
  %s5 = inlined_call_operand.vmem [shape: f32[3,1,128], index: 5, kind: input, shape index: {}]
  %s6 = inlined_call_operand.hbm [shape: f32[4,128,128], index: 6, kind: input, shape index: {}]
  %s7 = inlined_call_operand.vmem [shape: f32[4,1,128], index: 7, kind: input, shape index: {}]
  %s8 = inlined_call_operand.hbm [shape: f32[128,128], index: 8, kind: input, shape index: {}]
  %s9 = inlined_call_operand.vmem [shape: f32[1,128], index: 9, kind: input, shape index: {}]
  %s10 = inlined_call_operand.hbm [shape: f32[2,32,128], index: 10, kind: output, shape index: {}]
  %s11 = sld [smem:[#allocation0]]
  $region89: #{tpu_custom_call.1} parent=0
    _
  %s13 = ssub.s32 1, %s11
  %s14 = scalar_select 0, %s13, %s11
  $region1: #{tpu_custom_call.1} parent=0
    #allocation2 [shape = 'u8[196608]{0}', space=vmem, size = 0x30000, scoped, tag = 'input window, operand 3, single buffered']
    #allocation3 [shape = 's32[2]{0}', space=sflag, size = 0x8, scoped, tag = 'scoped memory for tpu_custom_call.1']
    #allocation4 [shape = 's32[2]{0}', space=sflag, size = 0x8, scoped, tag = 'scoped memory for tpu_custom_call.1']
    #allocation5 [shape = 'u8[196608]{0}', space=vmem, size = 0x30000, scoped, tag = 'input window, operand 4, single buffered']
    #allocation6 [shape = 's32[1]{0}', space=sflag, size = 0x4, scoped, tag = 'scoped memory for tpu_custom_call.1']
    #allocation7 [shape = 'u8[262144]{0}', space=vmem, size = 0x40000, scoped, tag = 'input window, operand 6, single buffered']
    #allocation8 [shape = 'u8[65536]{0}', space=vmem, size = 0x10000, scoped, tag = 'input window, operand 8, single buffered']
    #allocation9 [shape = 's32[1]{0}', space=sflag, size = 0x4, scoped, tag = 'scoped memory for tpu_custom_call.1']
    #allocation10 [shape = 'u8[16384]{0}', space=vmem, size = 0x4000, scoped, tag = 'output window, operand 0']
    %15 = vsyncpa [#allocation3], 0
    %16 = vsyncpa [#allocation6], 0
    %17 = vsyncpa [#allocation9], 0
    %18 = vsyncpa [#allocation4], 0
    %s19 = scalar_lea.sflag [#allocation4], 1
    %20 = vsyncpa %s19, 0
    loop: start=0, step=1, limit=6
    $region2: #{tpu_custom_call.1} parent=1 // loop_pre_header
      _
    $region3: #{tpu_custom_call.1} parent=1 // loop_header
      %s22 = sphi 0, %s26
      %p23 = scmp.ge.s32.totalorder %s22, 6
      %s29 = sphi 0, %s41
      %s30 = sphi 0, %s37
      %s31 = sphi 0, %s29
      %s32 = sphi 0, %s30
      %s33 = sphi 0, %s31
      %s34 = sphi 0, %s32
      %s44 = sphi 0, %s46
      %s47 = sphi 0, %s44
      %s48 = sphi 0, %s47
      %s64 = sphi 0, %s48
      %s68 = sphi 0, %s68
      %s70 = sphi 0, %s68
      %s71 = sphi 0, %s70
      %s85 = sphi 0, %s71
      %s89 = sphi 0, %s89
      %s91 = sphi 0, %s89
      %s92 = sphi 0, %s91
      %s106 = sphi 0, %s92
      %s110 = sphi 0, %s110
      %s112 = sphi 0, %s110
      %s113 = sphi 0, %s112
      %s127 = sphi 0, %s113
      %s131 = sphi 0, %s131
      %s133 = sphi 0, %s131
      %s134 = sphi 0, %s133
      %s148 = sphi 0, %s134
      %s152 = sphi 0, %s152
      %s154 = sphi 0, %s152
      %s155 = sphi 0, %s154
      %s169 = sphi 0, %s155
      %s173 = sphi 0, %s173
      %s175 = sphi 0, %s173
      %s176 = sphi 0, %s175
      %s190 = sphi 0, %s176
      %s194 = sphi 0, %s194
      %s196 = sphi 0, %s194
      %s197 = sphi 0, %s196
      %s211 = sphi 0, %s197
      %s215 = sphi 0, %s215
      %s217 = sphi 0, %s215
      %s218 = sphi 0, %s217
      %s232 = sphi 0, %s218
      %s236 = sphi 0, %s236
      %s238 = sphi 0, %s236
      %s239 = sphi 0, %s238
      %s253 = sphi 0, %s239
      %s261 = sphi 0, %s263
      %s264 = sphi 0, %s261
      %s265 = sphi 0, %s264
      %s281 = sphi 0, %s265
    $region4: #{tpu_custom_call.1} parent=1 // loop_header_branch
      %25 = sbr.rel (%p23) target = $region8
    $region5: #{tpu_custom_call.1} parent=1 // loop_body
      %s27 = ssub.s32 %s22, 1
      %s28 = ssub.s32 %s22, 2
      %s35 = sadd.s32 1, %s30
      %p36 = scmp.ge.s32.totalorder %s35, 2
      %s37 = scalar_select %p36, 0, %s35
      %s38 = sadd.s32 1, %s29
      %s39 = scalar_select %p36, %s38, %s29
      %p40 = scmp.ge.s32.totalorder %s39, 2
      %s41 = scalar_select %p40, 0, %s39
      %s42 = ssub.s32 %s29, %s41
      %p43 = scmp.eq.s32.totalorder %s42, 0
      %s45 = sadd.s32 %s44, 1
      %s46 = scalar_select %p43, %s44, %s45
      %p49 = pneg %p43
      %p50 = scmp.eq.s32.totalorder %s22, 3
      %p51 = por %p49, %p50
      %p52 = scmp.ne.s32.totalorder %s44, %s47
      %p53 = scmp.eq.s32.totalorder %s22, 0
      %p54 = por %p52, %p53
      %p55 = scmp.ne.s32.totalorder %s44, %s47
      %p56 = scmp.eq.s32.totalorder %s27, 3
      %p57 = por %p55, %p56
      %p58 = scmp.ne.s32.totalorder %s47, %s48
      %p59 = scmp.eq.s32.totalorder %s27, 0
      %p60 = por %p58, %p59
      %p61 = scmp.ne.s32.totalorder %s47, %s48
      %p62 = scmp.eq.s32.totalorder %s28, 3
      %p63 = por %p61, %p62
      %p65 = scmp.ne.s32.totalorder %s48, %s64
      %p66 = scmp.eq.s32.totalorder %s28, 0
      %p67 = por %p65, %p66
      %s69 = sadd.s32 %s68, 1
      %p72 = scmp.eq.s32.totalorder %s22, 3
      %p73 = scmp.ne.s32.totalorder %s68, %s70
      %p74 = scmp.eq.s32.totalorder %s22, 0
      %p75 = por %p73, %p74
      %p76 = scmp.ne.s32.totalorder %s68, %s70
      %p77 = scmp.eq.s32.totalorder %s27, 3
      %p78 = por %p76, %p77
      %p79 = scmp.ne.s32.totalorder %s70, %s71
      %p80 = scmp.eq.s32.totalorder %s27, 0
      %p81 = por %p79, %p80
      %p82 = scmp.ne.s32.totalorder %s70, %s71
      %p83 = scmp.eq.s32.totalorder %s28, 3
      %p84 = por %p82, %p83
      %p86 = scmp.ne.s32.totalorder %s71, %s85
      %p87 = scmp.eq.s32.totalorder %s28, 0
      %p88 = por %p86, %p87
      %s90 = sadd.s32 %s89, 1
      %p93 = scmp.eq.s32.totalorder %s22, 3
      %p94 = scmp.ne.s32.totalorder %s89, %s91
      %p95 = scmp.eq.s32.totalorder %s22, 0
      %p96 = por %p94, %p95
      %p97 = scmp.ne.s32.totalorder %s89, %s91
      %p98 = scmp.eq.s32.totalorder %s27, 3
      %p99 = por %p97, %p98
      %p100 = scmp.ne.s32.totalorder %s91, %s92
      %p101 = scmp.eq.s32.totalorder %s27, 0
      %p102 = por %p100, %p101
      %p103 = scmp.ne.s32.totalorder %s91, %s92
      %p104 = scmp.eq.s32.totalorder %s28, 3
      %p105 = por %p103, %p104
      %p107 = scmp.ne.s32.totalorder %s92, %s106
      %p108 = scmp.eq.s32.totalorder %s28, 0
      %p109 = por %p107, %p108
      %s111 = sadd.s32 %s110, 1
      %p114 = scmp.eq.s32.totalorder %s22, 3
      %p115 = scmp.ne.s32.totalorder %s110, %s112
      %p116 = scmp.eq.s32.totalorder %s22, 0
      %p117 = por %p115, %p116
      %p118 = scmp.ne.s32.totalorder %s110, %s112
      %p119 = scmp.eq.s32.totalorder %s27, 3
      %p120 = por %p118, %p119
      %p121 = scmp.ne.s32.totalorder %s112, %s113
      %p122 = scmp.eq.s32.totalorder %s27, 0
      %p123 = por %p121, %p122
      %p124 = scmp.ne.s32.totalorder %s112, %s113
      %p125 = scmp.eq.s32.totalorder %s28, 3
      %p126 = por %p124, %p125
      %p128 = scmp.ne.s32.totalorder %s113, %s127
      %p129 = scmp.eq.s32.totalorder %s28, 0
      %p130 = por %p128, %p129
      %s132 = sadd.s32 %s131, 1
      %p135 = scmp.eq.s32.totalorder %s22, 3
      %p136 = scmp.ne.s32.totalorder %s131, %s133
      %p137 = scmp.eq.s32.totalorder %s22, 0
      %p138 = por %p136, %p137
      %p139 = scmp.ne.s32.totalorder %s131, %s133
      %p140 = scmp.eq.s32.totalorder %s27, 3
      %p141 = por %p139, %p140
      %p142 = scmp.ne.s32.totalorder %s133, %s134
      %p143 = scmp.eq.s32.totalorder %s27, 0
      %p144 = por %p142, %p143
      %p145 = scmp.ne.s32.totalorder %s133, %s134
      %p146 = scmp.eq.s32.totalorder %s28, 3
      %p147 = por %p145, %p146
      %p149 = scmp.ne.s32.totalorder %s134, %s148
      %p150 = scmp.eq.s32.totalorder %s28, 0
      %p151 = por %p149, %p150
      %s153 = sadd.s32 %s152, 1
      %p156 = scmp.eq.s32.totalorder %s22, 3
      %p157 = scmp.ne.s32.totalorder %s152, %s154
      %p158 = scmp.eq.s32.totalorder %s22, 0
      %p159 = por %p157, %p158
      %p160 = scmp.ne.s32.totalorder %s152, %s154
      %p161 = scmp.eq.s32.totalorder %s27, 3
      %p162 = por %p160, %p161
      %p163 = scmp.ne.s32.totalorder %s154, %s155
      %p164 = scmp.eq.s32.totalorder %s27, 0
      %p165 = por %p163, %p164
      %p166 = scmp.ne.s32.totalorder %s154, %s155
      %p167 = scmp.eq.s32.totalorder %s28, 3
      %p168 = por %p166, %p167
      %p170 = scmp.ne.s32.totalorder %s155, %s169
      %p171 = scmp.eq.s32.totalorder %s28, 0
      %p172 = por %p170, %p171
      %s174 = sadd.s32 %s173, 1
      %p177 = scmp.eq.s32.totalorder %s22, 3
      %p178 = scmp.ne.s32.totalorder %s173, %s175
      %p179 = scmp.eq.s32.totalorder %s22, 0
      %p180 = por %p178, %p179
      %p181 = scmp.ne.s32.totalorder %s173, %s175
      %p182 = scmp.eq.s32.totalorder %s27, 3
      %p183 = por %p181, %p182
      %p184 = scmp.ne.s32.totalorder %s175, %s176
      %p185 = scmp.eq.s32.totalorder %s27, 0
      %p186 = por %p184, %p185
      %p187 = scmp.ne.s32.totalorder %s175, %s176
      %p188 = scmp.eq.s32.totalorder %s28, 3
      %p189 = por %p187, %p188
      %p191 = scmp.ne.s32.totalorder %s176, %s190
      %p192 = scmp.eq.s32.totalorder %s28, 0
      %p193 = por %p191, %p192
      %s195 = sadd.s32 %s194, 1
      %p198 = scmp.eq.s32.totalorder %s22, 3
      %p199 = scmp.ne.s32.totalorder %s194, %s196
      %p200 = scmp.eq.s32.totalorder %s22, 0
      %p201 = por %p199, %p200
      %p202 = scmp.ne.s32.totalorder %s194, %s196
      %p203 = scmp.eq.s32.totalorder %s27, 3
      %p204 = por %p202, %p203
      %p205 = scmp.ne.s32.totalorder %s196, %s197
      %p206 = scmp.eq.s32.totalorder %s27, 0
      %p207 = por %p205, %p206
      %p208 = scmp.ne.s32.totalorder %s196, %s197
      %p209 = scmp.eq.s32.totalorder %s28, 3
      %p210 = por %p208, %p209
      %p212 = scmp.ne.s32.totalorder %s197, %s211
      %p213 = scmp.eq.s32.totalorder %s28, 0
      %p214 = por %p212, %p213
      %s216 = sadd.s32 %s215, 1
      %p219 = scmp.eq.s32.totalorder %s22, 3
      %p220 = scmp.ne.s32.totalorder %s215, %s217
      %p221 = scmp.eq.s32.totalorder %s22, 0
      %p222 = por %p220, %p221
      %p223 = scmp.ne.s32.totalorder %s215, %s217
      %p224 = scmp.eq.s32.totalorder %s27, 3
      %p225 = por %p223, %p224
      %p226 = scmp.ne.s32.totalorder %s217, %s218
      %p227 = scmp.eq.s32.totalorder %s27, 0
      %p228 = por %p226, %p227
      %p229 = scmp.ne.s32.totalorder %s217, %s218
      %p230 = scmp.eq.s32.totalorder %s28, 3
      %p231 = por %p229, %p230
      %p233 = scmp.ne.s32.totalorder %s218, %s232
      %p234 = scmp.eq.s32.totalorder %s28, 0
      %p235 = por %p233, %p234
      %s237 = sadd.s32 %s236, 1
      %p240 = scmp.eq.s32.totalorder %s22, 3
      %p241 = scmp.ne.s32.totalorder %s236, %s238
      %p242 = scmp.eq.s32.totalorder %s22, 0
      %p243 = por %p241, %p242
      %p244 = scmp.ne.s32.totalorder %s236, %s238
      %p245 = scmp.eq.s32.totalorder %s27, 3
      %p246 = por %p244, %p245
      %p247 = scmp.ne.s32.totalorder %s238, %s239
      %p248 = scmp.eq.s32.totalorder %s27, 0
      %p249 = por %p247, %p248
      %p250 = scmp.ne.s32.totalorder %s238, %s239
      %p251 = scmp.eq.s32.totalorder %s28, 3
      %p252 = por %p250, %p251
      %p254 = scmp.ne.s32.totalorder %s239, %s253
      %p255 = scmp.eq.s32.totalorder %s28, 0
      %p256 = por %p254, %p255
      %s257 = ssub.s32 %s29, %s41
      %s258 = ssub.s32 %s30, %s37
      %s259 = sor.u32 %s257, %s258
      %p260 = scmp.eq.s32.totalorder %s259, 0
      %s262 = sadd.s32 %s261, 1
      %s263 = scalar_select %p260, %s261, %s262
      %p266 = pneg %p260
      %p267 = scmp.eq.s32.totalorder %s22, 3
      %p268 = por %p266, %p267
      %p269 = scmp.ne.s32.totalorder %s261, %s264
      %p270 = scmp.eq.s32.totalorder %s22, 0
      %p271 = por %p269, %p270
      %p272 = scmp.ne.s32.totalorder %s261, %s264
      %p273 = scmp.eq.s32.totalorder %s27, 3
      %p274 = por %p272, %p273
      %p275 = scmp.ne.s32.totalorder %s264, %s265
      %p276 = scmp.eq.s32.totalorder %s27, 0
      %p277 = por %p275, %p276
      %p278 = scmp.ne.s32.totalorder %s264, %s265
      %p279 = scmp.eq.s32.totalorder %s28, 3
      %p280 = por %p278, %p279
      %p282 = scmp.ne.s32.totalorder %s265, %s281
      %p283 = scmp.eq.s32.totalorder %s28, 0
      %p284 = por %p282, %p283
      %p285 = scmp.le.s32.totalorder 1, %s22
      %p286 = scmp.lt.s32.totalorder %s22, 5
      %p287 = pnand %p285, %p286
      %p288 = pneg %p287
      // Predicated region
      $region9: #{tpu_custom_call.1} parent=5 // pred_check
        _
      $region10: #{tpu_custom_call.1} parent=5 // pred_check_branch
        %290 = sbr.rel (%p287) target = $region12
      $region11: #{tpu_custom_call.1} parent=5 // pred_region
        %s291 = ssub.s32 %s22, 1
        // Predicated region
        $region13: #{tpu_custom_call.1} parent=11 // pred_check
          %p292 = pneg %p81
        $region14: #{tpu_custom_call.1} parent=11 // pred_check_branch
          %294 = sbr.rel (%p292) target = $region16
        $region15: #{tpu_custom_call.1} parent=11 // pred_region
          _
        $region16: #{tpu_custom_call.1} parent=11 // pred_fallthru
          _
        // Predicated region
        $region17: #{tpu_custom_call.1} parent=11 // pred_check
          %p295 = pneg %p102
        $region18: #{tpu_custom_call.1} parent=11 // pred_check_branch
          %297 = sbr.rel (%p295) target = $region20
        $region19: #{tpu_custom_call.1} parent=11 // pred_region
          _
        $region20: #{tpu_custom_call.1} parent=11 // pred_fallthru
          _
        // Predicated region
        $region21: #{tpu_custom_call.1} parent=11 // pred_check
          %p298 = pneg %p123
        $region22: #{tpu_custom_call.1} parent=11 // pred_check_branch
          %300 = sbr.rel (%p298) target = $region24
        $region23: #{tpu_custom_call.1} parent=11 // pred_region
          %s302 = ssub.s32 6144, 6144
          %303 = vsyncadd [#allocation3], %s302
          %s304 = sshll.u32 [#allocation2], 4
          %s305 = int_to_ptr.vmem [resolvable:$true] %s304
          %310 = dma.hbm_to_vmem [thread:$0]  %s3, 6144, %s305, [#allocation3], 128, 128, 8
        $region24: #{tpu_custom_call.1} parent=11 // pred_fallthru
          _
        // Predicated region
        $region25: #{tpu_custom_call.1} parent=11 // pred_check
          %p311 = pneg %p144
        $region26: #{tpu_custom_call.1} parent=11 // pred_check_branch
          %313 = sbr.rel (%p311) target = $region28
        $region27: #{tpu_custom_call.1} parent=11 // pred_region
          %s315 = ssub.s32 6144, 6144
          %316 = vsyncadd [#allocation6], %s315
          %s317 = sshll.u32 [#allocation5], 4
          %s318 = int_to_ptr.vmem [resolvable:$true] %s317
          %323 = dma.hbm_to_vmem [thread:$0]  %s4, 6144, %s318, [#allocation6], 128, 128, 8
        $region28: #{tpu_custom_call.1} parent=11 // pred_fallthru
          _
        // Predicated region
        $region29: #{tpu_custom_call.1} parent=11 // pred_check
          %p324 = pneg %p165
        $region30: #{tpu_custom_call.1} parent=11 // pred_check_branch
          %326 = sbr.rel (%p324) target = $region32
        $region31: #{tpu_custom_call.1} parent=11 // pred_region
          _
        $region32: #{tpu_custom_call.1} parent=11 // pred_fallthru
          _
        // Predicated region
        $region33: #{tpu_custom_call.1} parent=11 // pred_check
          %p327 = pneg %p186
        $region34: #{tpu_custom_call.1} parent=11 // pred_check_branch
          %329 = sbr.rel (%p327) target = $region36
        $region35: #{tpu_custom_call.1} parent=11 // pred_region
          %s331 = ssub.s32 8192, 8192
          %332 = vsyncadd [#allocation6], %s331
          %s333 = sshll.u32 [#allocation7], 4
          %s334 = int_to_ptr.vmem [resolvable:$true] %s333
          %339 = dma.hbm_to_vmem [thread:$0]  %s6, 8192, %s334, [#allocation6], 128, 128, 8
        $region36: #{tpu_custom_call.1} parent=11 // pred_fallthru
          _
        // Predicated region
        $region37: #{tpu_custom_call.1} parent=11 // pred_check
          %p340 = pneg %p207
        $region38: #{tpu_custom_call.1} parent=11 // pred_check_branch
          %342 = sbr.rel (%p340) target = $region40
        $region39: #{tpu_custom_call.1} parent=11 // pred_region
          _
        $region40: #{tpu_custom_call.1} parent=11 // pred_fallthru
          _
        // Predicated region
        $region41: #{tpu_custom_call.1} parent=11 // pred_check
          %p343 = pneg %p228
        $region42: #{tpu_custom_call.1} parent=11 // pred_check_branch
          %345 = sbr.rel (%p343) target = $region44
        $region43: #{tpu_custom_call.1} parent=11 // pred_region
          %s347 = ssub.s32 2048, 2048
          %348 = vsyncadd [#allocation9], %s347
          %s349 = sshll.u32 [#allocation8], 4
          %s350 = int_to_ptr.vmem [resolvable:$true] %s349
          %355 = dma.hbm_to_vmem [thread:$0]  %s8, 2048, %s350, [#allocation9], 128, 128, 8
        $region44: #{tpu_custom_call.1} parent=11 // pred_fallthru
          _
        // Predicated region
        $region45: #{tpu_custom_call.1} parent=11 // pred_check
          %p356 = pneg %p249
        $region46: #{tpu_custom_call.1} parent=11 // pred_check_branch
          %358 = sbr.rel (%p356) target = $region48
        $region47: #{tpu_custom_call.1} parent=11 // pred_region
          _
        $region48: #{tpu_custom_call.1} parent=11 // pred_fallthru
          _
      $region12: #{tpu_custom_call.1} parent=5 // pred_fallthru
        _
      %p359 = scmp.lt.s32.totalorder %s22, 4
      // Predicated region
      $region49: #{tpu_custom_call.1} parent=5 // pred_check
        %p360 = pneg %p359
      $region50: #{tpu_custom_call.1} parent=5 // pred_check_branch
        %362 = sbr.rel (%p360) target = $region52
      $region51: #{tpu_custom_call.1} parent=5 // pred_region
        // Predicated region
        $region53: #{tpu_custom_call.1} parent=51 // pred_check
          %p363 = pneg %p54
        $region54: #{tpu_custom_call.1} parent=51 // pred_check_branch
          %365 = sbr.rel (%p363) target = $region56
        $region55: #{tpu_custom_call.1} parent=51 // pred_region
          %p366 = scmp.lt.s32.totalorder %s29, 1
          %s367 = scalar_select %p366, %s29, 1
          %s368 = smul.addr %s367, 6
          %s369 = smul.addr %s368, 8
          %s370 = scalar_lea.vmem %s0, %s369
        $region56: #{tpu_custom_call.1} parent=51 // pred_fallthru
          _
      $region52: #{tpu_custom_call.1} parent=5 // pred_fallthru
        _
      %p371 = scmp.le.s32.totalorder 1, %s22
      %p372 = scmp.lt.s32.totalorder %s22, 5
      %p373 = pnand %p371, %p372
      %p374 = pneg %p373
      // Predicated region
      $region57: #{tpu_custom_call.1} parent=5 // pred_check
        _
      $region58: #{tpu_custom_call.1} parent=5 // pred_check_branch
        %376 = sbr.rel (%p373) target = $region60
      $region59: #{tpu_custom_call.1} parent=5 // pred_region
        %s377 = ssub.s32 %s22, 1
        // Predicated region
        $region61: #{tpu_custom_call.1} parent=59 // pred_check
          %p378 = pneg %p123
        $region62: #{tpu_custom_call.1} parent=59 // pred_check_branch
          %380 = sbr.rel (%p378) target = $region64
        $region63: #{tpu_custom_call.1} parent=59 // pred_region
          %381 = dma.done [#allocation3], 6144
        $region64: #{tpu_custom_call.1} parent=59 // pred_fallthru
          _
        // Predicated region
        $region65: #{tpu_custom_call.1} parent=59 // pred_check
          %p382 = pneg %p144
        $region66: #{tpu_custom_call.1} parent=59 // pred_check_branch
          %384 = sbr.rel (%p382) target = $region68
        $region67: #{tpu_custom_call.1} parent=59 // pred_region
          %385 = dma.done [#allocation6], 6144
        $region68: #{tpu_custom_call.1} parent=59 // pred_fallthru
          _
        // Predicated region
        $region69: #{tpu_custom_call.1} parent=59 // pred_check
          %p386 = pneg %p186
        $region70: #{tpu_custom_call.1} parent=59 // pred_check_branch
          %388 = sbr.rel (%p386) target = $region72
        $region71: #{tpu_custom_call.1} parent=59 // pred_region
          %389 = dma.done [#allocation6], 8192
        $region72: #{tpu_custom_call.1} parent=59 // pred_fallthru
          _
        // Predicated region
        $region73: #{tpu_custom_call.1} parent=59 // pred_check
          %p390 = pneg %p228
        $region74: #{tpu_custom_call.1} parent=59 // pred_check_branch
          %392 = sbr.rel (%p390) target = $region76
        $region75: #{tpu_custom_call.1} parent=59 // pred_region
          %393 = dma.done [#allocation9], 2048
        $region76: #{tpu_custom_call.1} parent=59 // pred_fallthru
          _
        %p394 = scmp.lt.s32.totalorder %s31, 1
        %s395 = scalar_select %p394, %s31, 1
        %s396 = smul.addr %s395, 6
        %s397 = smul.addr %s396, 8
        %s398 = scalar_lea.vmem %s0, %s397
        %p399 = pneg %p60
        %p400 = pneg %p57
        %p401 = pneg %p81
        %p402 = pneg %p78
        %p403 = pneg %p102
        %p404 = pneg %p99
        %p405 = pneg %p123
        %p406 = pneg %p120
        %p407 = pneg %p144
        %p408 = pneg %p141
        %p409 = pneg %p165
        %p410 = pneg %p162
        %p411 = pneg %p186
        %p412 = pneg %p183
        %p413 = pneg %p207
        %p414 = pneg %p204
        %p415 = pneg %p228
        %p416 = pneg %p225
        %p417 = pneg %p249
        %p418 = pneg %p246
        %p419 = pneg %p277
        %p420 = pneg %p274
        %s421 = sand.u32 %s264, 1
        %s422 = scalar_lea.sflag [#allocation4], %s421
        %s423 = sand.u32 %s264, 1
        %s424 = smul.addr %s423, 16
        %s425 = scalar_lea.vmem [#allocation10], %s424
        %p426 = scmp.lt.s32.totalorder %s31, 1
        %s427 = scalar_select %p426, %s31, 1
        %s428 = smul.addr %s427, 6
        %s429 = smul.addr %s428, 8
        %s430 = scalar_lea.vmem %s0, %s429
        %s431 = smul.u32 2, %s32
        %s432 = smul.u32 %s32, 16
        %s433 = scalar_lea.vmem %s430, %s432
        %v434 = vld [vmem:[%s433] sm:$0xff]
        %v435 = vld [vmem:[%s433 + $0x8] sm:$0xff]
        %v436 = vld [vmem:[%s433 + $0x10] sm:$0xff]
        %v437 = vld [vmem:[%s433 + $0x18] sm:$0x7f]
        %v438 = vld [vmem:[%s1] sm:$0x3]
        %440 = vset.pattern.permute.xlu0 0
        %441 = vperm.xlu0 %440, %v434
        %v442 = vpop.permute.xlu0 %441
        %445 = vset.pattern.permute.xlu0 0
        %446 = vperm.xlu0 %445, %v435
        %v447 = vpop.permute.xlu0 %446
        %450 = vset.pattern.permute.xlu0 0
        %451 = vperm.xlu0 %450, %v436
        %v452 = vpop.permute.xlu0 %451
        %v454 = vlaneseq
        %v455 = vshrl.u32 %v454, 7
        %v456 = vsub.s32 0, %v455
        %v457 = vrot.slane %v438, %v456
        %v458 = vmul.f32 %v442, %v457
        %v459 = vmul.f32 %v447, %v457
        %v460 = vmul.f32 %v452, %v457
        %462 = vset.pattern.permute.xlu0 0
        %463 = vperm.xlu0 %462, %v437
        %v464 = vpop.permute.xlu0 %463
        %v466 = vlaneseq
        %v467 = vshrl.u32 %v466, 7
        %v468 = vsub.s32 1, %v467
        %v469 = vrot.slane %v438, %v468
        %v470 = vmul.f32 %v447, %v469
        %v471 = vmul.f32 %v452, %v469
        %v472 = vmul.f32 %v464, %v469
        %v473 = vadd.f32 %v458, %v470
        %v474 = vadd.f32 %v459, %v471
        %v475 = vadd.f32 %v460, %v472
        %v476 = vld [vmem:[%s2] sm:$0x1]
        %v478 = vlaneseq
        %v479 = vshrl.u32 %v478, 7
        %v480 = vsub.s32 0, %v479
        %v481 = vrot.slane %v476, %v480
        %v483 = vadd.f32 %v473, %v481
        %v484 = vadd.f32 %v474, %v481
        %v485 = vadd.f32 %v475, %v481
        %v486 = vmax.f32 %v483, 0.0
        %v487 = vmax.f32 %v484, 0.0
        %v488 = vmax.f32 %v485, 0.0
        %v489 = vld [vmem:[#allocation7] sm:$0xff]
        %v490 = vld [vmem:[#allocation7 + $0x8] sm:$0xff]
        %v491 = vld [vmem:[#allocation7 + $0x10] sm:$0xff]
        %v492 = vld [vmem:[#allocation7 + $0x18] sm:$0xff]
        %v493 = vld [vmem:[#allocation7 + $0x20] sm:$0xff]
        %v494 = vld [vmem:[#allocation7 + $0x28] sm:$0xff]
        %v495 = vld [vmem:[#allocation7 + $0x30] sm:$0xff]
        %v496 = vld [vmem:[#allocation7 + $0x38] sm:$0xff]
        %v497 = vld [vmem:[#allocation7 + $0x40] sm:$0xff]
        %v498 = vld [vmem:[#allocation7 + $0x48] sm:$0xff]
        %v499 = vld [vmem:[#allocation7 + $0x50] sm:$0xff]
        %v500 = vld [vmem:[#allocation7 + $0x58] sm:$0xff]
        %v501 = vld [vmem:[#allocation7 + $0x60] sm:$0xff]
        %v502 = vld [vmem:[#allocation7 + $0x68] sm:$0xff]
        %v503 = vld [vmem:[#allocation7 + $0x70] sm:$0xff]
        %v504 = vld [vmem:[#allocation7 + $0x78] sm:$0xff]
        %v505 = vld [vmem:[%s7] sm:$0x1]
        %v507 = vlaneseq
        %v508 = vshrl.u32 %v507, 7
        %v509 = vsub.s32 0, %v508
        %v510 = vrot.slane %v505, %v509
        %512 = vmatprep.subr.mxu0 0.0
        %513 = vmatpush1.msra.mxu0 %v504
        %514 = vmatprep.subr.mxu0 0.0
        %515 = vmatpush1.msra.mxu0 %v503
        %516 = vmatprep.subr.mxu0 0.0
        %517 = vmatpush1.msra.mxu0 %v502
        %518 = vmatprep.subr.mxu0 0.0
        %519 = vmatpush1.msra.mxu0 %v501
        %520 = vmatprep.subr.mxu0 0.0
        %521 = vmatpush1.msra.mxu0 %v500
        %522 = vmatprep.subr.mxu0 0.0
        %523 = vmatpush1.msra.mxu0 %v499
        %524 = vmatprep.subr.mxu0 0.0
        %525 = vmatpush1.msra.mxu0 %v498
        %526 = vmatprep.subr.mxu0 0.0
        %527 = vmatpush1.msra.mxu0 %v497
        %528 = vmatprep.subr.mxu0 0.0
        %529 = vmatpush1.msra.mxu0 %v496
        %530 = vmatprep.subr.mxu0 0.0
        %531 = vmatpush1.msra.mxu0 %v495
        %532 = vmatprep.subr.mxu0 0.0
        %533 = vmatpush1.msra.mxu0 %v494
        %534 = vmatprep.subr.mxu0 0.0
        %535 = vmatpush1.msra.mxu0 %v493
        %536 = vmatprep.subr.mxu0 0.0
        %537 = vmatpush1.msra.mxu0 %v492
        %538 = vmatprep.subr.mxu0 0.0
        %539 = vmatpush1.msra.mxu0 %v491
        %540 = vmatprep.subr.mxu0 0.0
        %541 = vmatpush1.msra.mxu0 %v490
        %542 = vmatprep.subr.mxu0 0.0
        %543 = vmatpush1.msra.mxu0 %v489
        %544 = vmatprep.subr.mxu0 0.0
        %545 = vmatpush2.msra.mxu0 0.0
        %546 = vmatprep.subr.mxu0 0.0
        %547 = vmatpush2.msra.mxu0 0.0
        %548 = vmatprep.subr.mxu0 0.0
        %549 = vmatpush2.msra.mxu0 0.0
        %550 = vmatprep.subr.mxu0 0.0
        %551 = vmatpush2.msra.mxu0 0.0
        %552 = vmatprep.subr.mxu0 0.0
        %553 = vmatpush2.msra.mxu0 0.0
        %554 = vmatprep.subr.mxu0 0.0
        %555 = vmatpush2.msra.mxu0 0.0
        %556 = vmatprep.subr.mxu0 0.0
        %557 = vmatpush2.msra.mxu0 0.0
        %558 = vmatprep.subr.mxu0 0.0
        %559 = vmatpush2.msra.mxu0 0.0
        %560 = vmatprep.subr.mxu0 0.0
        %561 = vmatpush2.msra.mxu0 0.0
        %562 = vmatprep.subr.mxu0 0.0
        %563 = vmatpush2.msra.mxu0 0.0
        %564 = vmatprep.subr.mxu0 0.0
        %565 = vmatpush2.msra.mxu0 0.0
        %566 = vmatprep.subr.mxu0 0.0
        %567 = vmatpush2.msra.mxu0 0.0
        %568 = vmatprep.subr.mxu0 0.0
        %569 = vmatpush2.msra.mxu0 0.0
        %570 = vmatprep.subr.mxu0 0.0
        %571 = vmatpush2.msra.mxu0 0.0
        %572 = vmatprep.subr.mxu0 0.0
        %573 = vmatpush2.msra.mxu0 0.0
        %574 = vmatprep.subr.mxu0 0.0
        %575 = vmatpush2.msra.mxu0 0.0
        %576 = vmatprep.mubr.f32.mxu0 0.0
        %577 = vmatmul.mubr.f32.gmra.mxu0 %v486
        %v578 = vpop.f32.mrf.mxu0
        %v579 = vadd.f32 %v510, %v578
        %v580 = vpop.f32.mrf.mxu0
        %581 = vmatprep.mubr.f32.mxu0 0.0
        %582 = vmatmul.mubr.f32.gmra.mxu0 %v487
        %v583 = vpop.f32.mrf.mxu0
        %v584 = vadd.f32 %v510, %v583
        %v585 = vpop.f32.mrf.mxu0
        %586 = vmatprep.mubr.f32.mxu0 0.0
        %587 = vmatmul.mubr.f32.gmra.mxu0 %v488
        %v588 = vpop.f32.mrf.mxu0
        %v589 = vadd.f32 %v510, %v588
        %v590 = vpop.f32.mrf.mxu0
        %591 = vdwg.mxu0
        %v592 = vmax.f32 %v579, 0.0
        %v593 = vmax.f32 %v584, 0.0
        %v594 = vmax.f32 %v589, 0.0
        %v595 = vld [vmem:[#allocation2] sm:$0xff]
        %v596 = vld [vmem:[#allocation2 + $0x8] sm:$0xff]
        %v597 = vld [vmem:[#allocation2 + $0x10] sm:$0xff]
        %v598 = vld [vmem:[#allocation2 + $0x18] sm:$0xff]
        %v599 = vld [vmem:[#allocation2 + $0x20] sm:$0xff]
        %v600 = vld [vmem:[#allocation2 + $0x28] sm:$0xff]
        %v601 = vld [vmem:[#allocation2 + $0x30] sm:$0xff]
        %v602 = vld [vmem:[#allocation2 + $0x38] sm:$0xff]
        %v603 = vld [vmem:[#allocation2 + $0x40] sm:$0xff]
        %v604 = vld [vmem:[#allocation2 + $0x48] sm:$0xff]
        %v605 = vld [vmem:[#allocation2 + $0x50] sm:$0xff]
        %v606 = vld [vmem:[#allocation2 + $0x58] sm:$0xff]
        %v607 = vld [vmem:[#allocation2 + $0x60] sm:$0xff]
        %v608 = vld [vmem:[#allocation2 + $0x68] sm:$0xff]
        %v609 = vld [vmem:[#allocation2 + $0x70] sm:$0xff]
        %v610 = vld [vmem:[#allocation2 + $0x78] sm:$0xff]
        %v611 = vld [vmem:[#allocation5] sm:$0xff]
        %v612 = vld [vmem:[#allocation5 + $0x8] sm:$0xff]
        %v613 = vld [vmem:[#allocation5 + $0x10] sm:$0xff]
        %v614 = vld [vmem:[#allocation5 + $0x18] sm:$0xff]
        %v615 = vld [vmem:[#allocation5 + $0x20] sm:$0xff]
        %v616 = vld [vmem:[#allocation5 + $0x28] sm:$0xff]
        %v617 = vld [vmem:[#allocation5 + $0x30] sm:$0xff]
        %v618 = vld [vmem:[#allocation5 + $0x38] sm:$0xff]
        %v619 = vld [vmem:[#allocation5 + $0x40] sm:$0xff]
        %v620 = vld [vmem:[#allocation5 + $0x48] sm:$0xff]
        %v621 = vld [vmem:[#allocation5 + $0x50] sm:$0xff]
        %v622 = vld [vmem:[#allocation5 + $0x58] sm:$0xff]
        %v623 = vld [vmem:[#allocation5 + $0x60] sm:$0xff]
        %v624 = vld [vmem:[#allocation5 + $0x68] sm:$0xff]
        %v625 = vld [vmem:[#allocation5 + $0x70] sm:$0xff]
        %v626 = vld [vmem:[#allocation5 + $0x78] sm:$0xff]
        %vm630 = vcmask 1043456
        %v631 = vrot.slane %v592, 4
        %v632 = vrot.slane %v593, 4
        %v633 = vsel %vm630, %v631, %v632
        %v634 = vrot.slane %v594, 4
        %v635 = vsel %vm630, %v632, %v634
        %639 = vmatprep.subr.mxu0 0.0
        %640 = vmatpush1.msra.mxu0 %v626
        %641 = vmatprep.subr.mxu0 0.0
        %642 = vmatpush1.msra.mxu0 %v625
        %643 = vmatprep.subr.mxu0 0.0
        %644 = vmatpush1.msra.mxu0 %v624
        %645 = vmatprep.subr.mxu0 0.0
        %646 = vmatpush1.msra.mxu0 %v623
        %647 = vmatprep.subr.mxu0 0.0
        %648 = vmatpush1.msra.mxu0 %v622
        %649 = vmatprep.subr.mxu0 0.0
        %650 = vmatpush1.msra.mxu0 %v621
        %651 = vmatprep.subr.mxu0 0.0
        %652 = vmatpush1.msra.mxu0 %v620
        %653 = vmatprep.subr.mxu0 0.0
        %654 = vmatpush1.msra.mxu0 %v619
        %655 = vmatprep.subr.mxu0 0.0
        %656 = vmatpush1.msra.mxu0 %v618
        %657 = vmatprep.subr.mxu0 0.0
        %658 = vmatpush1.msra.mxu0 %v617
        %659 = vmatprep.subr.mxu0 0.0
        %660 = vmatpush1.msra.mxu0 %v616
        %661 = vmatprep.subr.mxu0 0.0
        %662 = vmatpush1.msra.mxu0 %v615
        %663 = vmatprep.subr.mxu0 0.0
        %664 = vmatpush1.msra.mxu0 %v614
        %665 = vmatprep.subr.mxu0 0.0
        %666 = vmatpush1.msra.mxu0 %v613
        %667 = vmatprep.subr.mxu0 0.0
        %668 = vmatpush1.msra.mxu0 %v612
        %669 = vmatprep.subr.mxu0 0.0
        %670 = vmatpush1.msra.mxu0 %v611
        %671 = vmatprep.subr.mxu0 0.0
        %672 = vmatpush2.msra.mxu0 0.0
        %673 = vmatprep.subr.mxu0 0.0
        %674 = vmatpush2.msra.mxu0 0.0
        %675 = vmatprep.subr.mxu0 0.0
        %676 = vmatpush2.msra.mxu0 0.0
        %677 = vmatprep.subr.mxu0 0.0
        %678 = vmatpush2.msra.mxu0 0.0
        %679 = vmatprep.subr.mxu0 0.0
        %680 = vmatpush2.msra.mxu0 0.0
        %681 = vmatprep.subr.mxu0 0.0
        %682 = vmatpush2.msra.mxu0 0.0
        %683 = vmatprep.subr.mxu0 0.0
        %684 = vmatpush2.msra.mxu0 0.0
        %685 = vmatprep.subr.mxu0 0.0
        %686 = vmatpush2.msra.mxu0 0.0
        %687 = vmatprep.subr.mxu0 0.0
        %688 = vmatpush2.msra.mxu0 0.0
        %689 = vmatprep.subr.mxu0 0.0
        %690 = vmatpush2.msra.mxu0 0.0
        %691 = vmatprep.subr.mxu0 0.0
        %692 = vmatpush2.msra.mxu0 0.0
        %693 = vmatprep.subr.mxu0 0.0
        %694 = vmatpush2.msra.mxu0 0.0
        %695 = vmatprep.subr.mxu0 0.0
        %696 = vmatpush2.msra.mxu0 0.0
        %697 = vmatprep.subr.mxu0 0.0
        %698 = vmatpush2.msra.mxu0 0.0
        %699 = vmatprep.subr.mxu0 0.0
        %700 = vmatpush2.msra.mxu0 0.0
        %701 = vmatprep.subr.mxu0 0.0
        %702 = vmatpush2.msra.mxu0 0.0
        %703 = vmatprep.mubr.f32.mxu0 0.0
        %704 = vmatmul.mubr.f32.gmra.mxu0 %v633
        %v705 = vpop.f32.mrf.mxu0
        %v706 = vadd.f32 0.0, %v705
        %v707 = vpop.f32.mrf.mxu0
        %708 = vmatprep.mubr.f32.mxu0 0.0
        %709 = vmatmul.mubr.f32.gmra.mxu0 %v635
        %v710 = vpop.f32.mrf.mxu0
        %v711 = vadd.f32 0.0, %v710
        %v712 = vpop.f32.mrf.mxu0
        %713 = vmatprep.mubr.f32.mxu0 0.0
        %714 = vmatmul.mubr.f32.gmra.mxu0 %v634
        %v715 = vpop.f32.mrf.mxu0
        %v716 = vadd.f32 0.0, %v715
        %v717 = vpop.f32.mrf.mxu0
        %718 = vdwg.mxu0
        %719 = vmatprep.subr.mxu0 0.0
        %720 = vmatpush1.msra.mxu0 %v610
        %721 = vmatprep.subr.mxu0 0.0
        %722 = vmatpush1.msra.mxu0 %v609
        %723 = vmatprep.subr.mxu0 0.0
        %724 = vmatpush1.msra.mxu0 %v608
        %725 = vmatprep.subr.mxu0 0.0
        %726 = vmatpush1.msra.mxu0 %v607
        %727 = vmatprep.subr.mxu0 0.0
        %728 = vmatpush1.msra.mxu0 %v606
        %729 = vmatprep.subr.mxu0 0.0
        %730 = vmatpush1.msra.mxu0 %v605
        %731 = vmatprep.subr.mxu0 0.0
        %732 = vmatpush1.msra.mxu0 %v604
        %733 = vmatprep.subr.mxu0 0.0
        %734 = vmatpush1.msra.mxu0 %v603
        %735 = vmatprep.subr.mxu0 0.0
        %736 = vmatpush1.msra.mxu0 %v602
        %737 = vmatprep.subr.mxu0 0.0
        %738 = vmatpush1.msra.mxu0 %v601
        %739 = vmatprep.subr.mxu0 0.0
        %740 = vmatpush1.msra.mxu0 %v600
        %741 = vmatprep.subr.mxu0 0.0
        %742 = vmatpush1.msra.mxu0 %v599
        %743 = vmatprep.subr.mxu0 0.0
        %744 = vmatpush1.msra.mxu0 %v598
        %745 = vmatprep.subr.mxu0 0.0
        %746 = vmatpush1.msra.mxu0 %v597
        %747 = vmatprep.subr.mxu0 0.0
        %748 = vmatpush1.msra.mxu0 %v596
        %749 = vmatprep.subr.mxu0 0.0
        %750 = vmatpush1.msra.mxu0 %v595
        %751 = vmatprep.subr.mxu0 0.0
        %752 = vmatpush2.msra.mxu0 0.0
        %753 = vmatprep.subr.mxu0 0.0
        %754 = vmatpush2.msra.mxu0 0.0
        %755 = vmatprep.subr.mxu0 0.0
        %756 = vmatpush2.msra.mxu0 0.0
        %757 = vmatprep.subr.mxu0 0.0
        %758 = vmatpush2.msra.mxu0 0.0
        %759 = vmatprep.subr.mxu0 0.0
        %760 = vmatpush2.msra.mxu0 0.0
        %761 = vmatprep.subr.mxu0 0.0
        %762 = vmatpush2.msra.mxu0 0.0
        %763 = vmatprep.subr.mxu0 0.0
        %764 = vmatpush2.msra.mxu0 0.0
        %765 = vmatprep.subr.mxu0 0.0
        %766 = vmatpush2.msra.mxu0 0.0
        %767 = vmatprep.subr.mxu0 0.0
        %768 = vmatpush2.msra.mxu0 0.0
        %769 = vmatprep.subr.mxu0 0.0
        %770 = vmatpush2.msra.mxu0 0.0
        %771 = vmatprep.subr.mxu0 0.0
        %772 = vmatpush2.msra.mxu0 0.0
        %773 = vmatprep.subr.mxu0 0.0
        %774 = vmatpush2.msra.mxu0 0.0
        %775 = vmatprep.subr.mxu0 0.0
        %776 = vmatpush2.msra.mxu0 0.0
        %777 = vmatprep.subr.mxu0 0.0
        %778 = vmatpush2.msra.mxu0 0.0
        %779 = vmatprep.subr.mxu0 0.0
        %780 = vmatpush2.msra.mxu0 0.0
        %781 = vmatprep.subr.mxu0 0.0
        %782 = vmatpush2.msra.mxu0 0.0
        %783 = vmatprep.mubr.f32.mxu0 0.0
        %784 = vmatmul.mubr.f32.gmra.mxu0 %v592
        %v785 = vpop.f32.mrf.mxu0
        %v786 = vadd.f32 %v706, %v785
        %v787 = vpop.f32.mrf.mxu0
        %788 = vmatprep.mubr.f32.mxu0 0.0
        %789 = vmatmul.mubr.f32.gmra.mxu0 %v593
        %v790 = vpop.f32.mrf.mxu0
        %v791 = vadd.f32 %v711, %v790
        %v792 = vpop.f32.mrf.mxu0
        %793 = vmatprep.mubr.f32.mxu0 0.0
        %794 = vmatmul.mubr.f32.gmra.mxu0 %v594
        %v795 = vpop.f32.mrf.mxu0
        %v796 = vadd.f32 %v716, %v795
        %v797 = vpop.f32.mrf.mxu0
        %798 = vdwg.mxu0
        %v799 = vld [vmem:[%s5] sm:$0x1]
        %v801 = vlaneseq
        %v802 = vshrl.u32 %v801, 7
        %v803 = vsub.s32 0, %v802
        %v804 = vrot.slane %v799, %v803
        %v806 = vadd.f32 %v786, %v804
        %v807 = vadd.f32 %v791, %v804
        %v808 = vadd.f32 %v796, %v804
        %v809 = vmax.f32 %v806, 0.0
        %v810 = vmax.f32 %v807, 0.0
        %v811 = vmax.f32 %v808, 0.0
        %s812 = scalar_lea.vmem [#allocation7], 128
        %v813 = vld [vmem:[%s812] sm:$0xff]
        %v814 = vld [vmem:[%s812 + $0x8] sm:$0xff]
        %v815 = vld [vmem:[%s812 + $0x10] sm:$0xff]
        %v816 = vld [vmem:[%s812 + $0x18] sm:$0xff]
        %v817 = vld [vmem:[%s812 + $0x20] sm:$0xff]
        %v818 = vld [vmem:[%s812 + $0x28] sm:$0xff]
        %v819 = vld [vmem:[%s812 + $0x30] sm:$0xff]
        %v820 = vld [vmem:[%s812 + $0x38] sm:$0xff]
        %v821 = vld [vmem:[%s812 + $0x40] sm:$0xff]
        %v822 = vld [vmem:[%s812 + $0x48] sm:$0xff]
        %v823 = vld [vmem:[%s812 + $0x50] sm:$0xff]
        %v824 = vld [vmem:[%s812 + $0x58] sm:$0xff]
        %v825 = vld [vmem:[%s812 + $0x60] sm:$0xff]
        %v826 = vld [vmem:[%s812 + $0x68] sm:$0xff]
        %v827 = vld [vmem:[%s812 + $0x70] sm:$0xff]
        %v828 = vld [vmem:[%s812 + $0x78] sm:$0xff]
        %s829 = scalar_lea.vmem %s7, 1
        %v830 = vld [vmem:[%s829] sm:$0x1]
        %v832 = vlaneseq
        %v833 = vshrl.u32 %v832, 7
        %v834 = vsub.s32 0, %v833
        %v835 = vrot.slane %v830, %v834
        %837 = vmatprep.subr.mxu0 0.0
        %838 = vmatpush1.msra.mxu0 %v828
        %839 = vmatprep.subr.mxu0 0.0
        %840 = vmatpush1.msra.mxu0 %v827
        %841 = vmatprep.subr.mxu0 0.0
        %842 = vmatpush1.msra.mxu0 %v826
        %843 = vmatprep.subr.mxu0 0.0
        %844 = vmatpush1.msra.mxu0 %v825
        %845 = vmatprep.subr.mxu0 0.0
        %846 = vmatpush1.msra.mxu0 %v824
        %847 = vmatprep.subr.mxu0 0.0
        %848 = vmatpush1.msra.mxu0 %v823
        %849 = vmatprep.subr.mxu0 0.0
        %850 = vmatpush1.msra.mxu0 %v822
        %851 = vmatprep.subr.mxu0 0.0
        %852 = vmatpush1.msra.mxu0 %v821
        %853 = vmatprep.subr.mxu0 0.0
        %854 = vmatpush1.msra.mxu0 %v820
        %855 = vmatprep.subr.mxu0 0.0
        %856 = vmatpush1.msra.mxu0 %v819
        %857 = vmatprep.subr.mxu0 0.0
        %858 = vmatpush1.msra.mxu0 %v818
        %859 = vmatprep.subr.mxu0 0.0
        %860 = vmatpush1.msra.mxu0 %v817
        %861 = vmatprep.subr.mxu0 0.0
        %862 = vmatpush1.msra.mxu0 %v816
        %863 = vmatprep.subr.mxu0 0.0
        %864 = vmatpush1.msra.mxu0 %v815
        %865 = vmatprep.subr.mxu0 0.0
        %866 = vmatpush1.msra.mxu0 %v814
        %867 = vmatprep.subr.mxu0 0.0
        %868 = vmatpush1.msra.mxu0 %v813
        %869 = vmatprep.subr.mxu0 0.0
        %870 = vmatpush2.msra.mxu0 0.0
        %871 = vmatprep.subr.mxu0 0.0
        %872 = vmatpush2.msra.mxu0 0.0
        %873 = vmatprep.subr.mxu0 0.0
        %874 = vmatpush2.msra.mxu0 0.0
        %875 = vmatprep.subr.mxu0 0.0
        %876 = vmatpush2.msra.mxu0 0.0
        %877 = vmatprep.subr.mxu0 0.0
        %878 = vmatpush2.msra.mxu0 0.0
        %879 = vmatprep.subr.mxu0 0.0
        %880 = vmatpush2.msra.mxu0 0.0
        %881 = vmatprep.subr.mxu0 0.0
        %882 = vmatpush2.msra.mxu0 0.0
        %883 = vmatprep.subr.mxu0 0.0
        %884 = vmatpush2.msra.mxu0 0.0
        %885 = vmatprep.subr.mxu0 0.0
        %886 = vmatpush2.msra.mxu0 0.0
        %887 = vmatprep.subr.mxu0 0.0
        %888 = vmatpush2.msra.mxu0 0.0
        %889 = vmatprep.subr.mxu0 0.0
        %890 = vmatpush2.msra.mxu0 0.0
        %891 = vmatprep.subr.mxu0 0.0
        %892 = vmatpush2.msra.mxu0 0.0
        %893 = vmatprep.subr.mxu0 0.0
        %894 = vmatpush2.msra.mxu0 0.0
        %895 = vmatprep.subr.mxu0 0.0
        %896 = vmatpush2.msra.mxu0 0.0
        %897 = vmatprep.subr.mxu0 0.0
        %898 = vmatpush2.msra.mxu0 0.0
        %899 = vmatprep.subr.mxu0 0.0
        %900 = vmatpush2.msra.mxu0 0.0
        %901 = vmatprep.mubr.f32.mxu0 0.0
        %902 = vmatmul.mubr.f32.gmra.mxu0 %v809
        %v903 = vpop.f32.mrf.mxu0
        %v904 = vadd.f32 %v835, %v903
        %v905 = vpop.f32.mrf.mxu0
        %906 = vmatprep.mubr.f32.mxu0 0.0
        %907 = vmatmul.mubr.f32.gmra.mxu0 %v810
        %v908 = vpop.f32.mrf.mxu0
        %v909 = vadd.f32 %v835, %v908
        %v910 = vpop.f32.mrf.mxu0
        %911 = vmatprep.mubr.f32.mxu0 0.0
        %912 = vmatmul.mubr.f32.gmra.mxu0 %v811
        %v913 = vpop.f32.mrf.mxu0
        %v914 = vadd.f32 %v835, %v913
        %v915 = vpop.f32.mrf.mxu0
        %916 = vdwg.mxu0
        %v917 = vmax.f32 %v904, 0.0
        %v918 = vmax.f32 %v909, 0.0
        %v919 = vmax.f32 %v914, 0.0
        %s920 = scalar_lea.vmem [#allocation2], 128
        %v921 = vld [vmem:[%s920] sm:$0xff]
        %v922 = vld [vmem:[%s920 + $0x8] sm:$0xff]
        %v923 = vld [vmem:[%s920 + $0x10] sm:$0xff]
        %v924 = vld [vmem:[%s920 + $0x18] sm:$0xff]
        %v925 = vld [vmem:[%s920 + $0x20] sm:$0xff]
        %v926 = vld [vmem:[%s920 + $0x28] sm:$0xff]
        %v927 = vld [vmem:[%s920 + $0x30] sm:$0xff]
        %v928 = vld [vmem:[%s920 + $0x38] sm:$0xff]
        %v929 = vld [vmem:[%s920 + $0x40] sm:$0xff]
        %v930 = vld [vmem:[%s920 + $0x48] sm:$0xff]
        %v931 = vld [vmem:[%s920 + $0x50] sm:$0xff]
        %v932 = vld [vmem:[%s920 + $0x58] sm:$0xff]
        %v933 = vld [vmem:[%s920 + $0x60] sm:$0xff]
        %v934 = vld [vmem:[%s920 + $0x68] sm:$0xff]
        %v935 = vld [vmem:[%s920 + $0x70] sm:$0xff]
        %v936 = vld [vmem:[%s920 + $0x78] sm:$0xff]
        %s937 = scalar_lea.vmem [#allocation5], 128
        %v938 = vld [vmem:[%s937] sm:$0xff]
        %v939 = vld [vmem:[%s937 + $0x8] sm:$0xff]
        %v940 = vld [vmem:[%s937 + $0x10] sm:$0xff]
        %v941 = vld [vmem:[%s937 + $0x18] sm:$0xff]
        %v942 = vld [vmem:[%s937 + $0x20] sm:$0xff]
        %v943 = vld [vmem:[%s937 + $0x28] sm:$0xff]
        %v944 = vld [vmem:[%s937 + $0x30] sm:$0xff]
        %v945 = vld [vmem:[%s937 + $0x38] sm:$0xff]
        %v946 = vld [vmem:[%s937 + $0x40] sm:$0xff]
        %v947 = vld [vmem:[%s937 + $0x48] sm:$0xff]
        %v948 = vld [vmem:[%s937 + $0x50] sm:$0xff]
        %v949 = vld [vmem:[%s937 + $0x58] sm:$0xff]
        %v950 = vld [vmem:[%s937 + $0x60] sm:$0xff]
        %v951 = vld [vmem:[%s937 + $0x68] sm:$0xff]
        %v952 = vld [vmem:[%s937 + $0x70] sm:$0xff]
        %v953 = vld [vmem:[%s937 + $0x78] sm:$0xff]
        %vm957 = vcmask 1045504
        %v958 = vrot.slane %v917, 2
        %v959 = vrot.slane %v918, 2
        %v960 = vsel %vm957, %v958, %v959
        %v961 = vrot.slane %v919, 2
        %v962 = vsel %vm957, %v959, %v961
        %966 = vmatprep.subr.mxu0 0.0
        %967 = vmatpush1.msra.mxu0 %v953
        %968 = vmatprep.subr.mxu0 0.0
        %969 = vmatpush1.msra.mxu0 %v952
        %970 = vmatprep.subr.mxu0 0.0
        %971 = vmatpush1.msra.mxu0 %v951
        %972 = vmatprep.subr.mxu0 0.0
        %973 = vmatpush1.msra.mxu0 %v950
        %974 = vmatprep.subr.mxu0 0.0
        %975 = vmatpush1.msra.mxu0 %v949
        %976 = vmatprep.subr.mxu0 0.0
        %977 = vmatpush1.msra.mxu0 %v948
        %978 = vmatprep.subr.mxu0 0.0
        %979 = vmatpush1.msra.mxu0 %v947
        %980 = vmatprep.subr.mxu0 0.0
        %981 = vmatpush1.msra.mxu0 %v946
        %982 = vmatprep.subr.mxu0 0.0
        %983 = vmatpush1.msra.mxu0 %v945
        %984 = vmatprep.subr.mxu0 0.0
        %985 = vmatpush1.msra.mxu0 %v944
        %986 = vmatprep.subr.mxu0 0.0
        %987 = vmatpush1.msra.mxu0 %v943
        %988 = vmatprep.subr.mxu0 0.0
        %989 = vmatpush1.msra.mxu0 %v942
        %990 = vmatprep.subr.mxu0 0.0
        %991 = vmatpush1.msra.mxu0 %v941
        %992 = vmatprep.subr.mxu0 0.0
        %993 = vmatpush1.msra.mxu0 %v940
        %994 = vmatprep.subr.mxu0 0.0
        %995 = vmatpush1.msra.mxu0 %v939
        %996 = vmatprep.subr.mxu0 0.0
        %997 = vmatpush1.msra.mxu0 %v938
        %998 = vmatprep.subr.mxu0 0.0
        %999 = vmatpush2.msra.mxu0 0.0
        %1000 = vmatprep.subr.mxu0 0.0
        %1001 = vmatpush2.msra.mxu0 0.0
        %1002 = vmatprep.subr.mxu0 0.0
        %1003 = vmatpush2.msra.mxu0 0.0
        %1004 = vmatprep.subr.mxu0 0.0
        %1005 = vmatpush2.msra.mxu0 0.0
        %1006 = vmatprep.subr.mxu0 0.0
        %1007 = vmatpush2.msra.mxu0 0.0
        %1008 = vmatprep.subr.mxu0 0.0
        %1009 = vmatpush2.msra.mxu0 0.0
        %1010 = vmatprep.subr.mxu0 0.0
        %1011 = vmatpush2.msra.mxu0 0.0
        %1012 = vmatprep.subr.mxu0 0.0
        %1013 = vmatpush2.msra.mxu0 0.0
        %1014 = vmatprep.subr.mxu0 0.0
        %1015 = vmatpush2.msra.mxu0 0.0
        %1016 = vmatprep.subr.mxu0 0.0
        %1017 = vmatpush2.msra.mxu0 0.0
        %1018 = vmatprep.subr.mxu0 0.0
        %1019 = vmatpush2.msra.mxu0 0.0
        %1020 = vmatprep.subr.mxu0 0.0
        %1021 = vmatpush2.msra.mxu0 0.0
        %1022 = vmatprep.subr.mxu0 0.0
        %1023 = vmatpush2.msra.mxu0 0.0
        %1024 = vmatprep.subr.mxu0 0.0
        %1025 = vmatpush2.msra.mxu0 0.0
        %1026 = vmatprep.subr.mxu0 0.0
        %1027 = vmatpush2.msra.mxu0 0.0
        %1028 = vmatprep.subr.mxu0 0.0
        %1029 = vmatpush2.msra.mxu0 0.0
        %1030 = vmatprep.mubr.f32.mxu0 0.0
        %1031 = vmatmul.mubr.f32.gmra.mxu0 %v960
        %v1032 = vpop.f32.mrf.mxu0
        %v1033 = vadd.f32 0.0, %v1032
        %v1034 = vpop.f32.mrf.mxu0
        %1035 = vmatprep.mubr.f32.mxu0 0.0
        %1036 = vmatmul.mubr.f32.gmra.mxu0 %v962
        %v1037 = vpop.f32.mrf.mxu0
        %v1038 = vadd.f32 0.0, %v1037
        %v1039 = vpop.f32.mrf.mxu0
        %1040 = vmatprep.mubr.f32.mxu0 0.0
        %1041 = vmatmul.mubr.f32.gmra.mxu0 %v961
        %v1042 = vpop.f32.mrf.mxu0
        %v1043 = vadd.f32 0.0, %v1042
        %v1044 = vpop.f32.mrf.mxu0
        %1045 = vdwg.mxu0
        %1046 = vmatprep.subr.mxu0 0.0
        %1047 = vmatpush1.msra.mxu0 %v936
        %1048 = vmatprep.subr.mxu0 0.0
        %1049 = vmatpush1.msra.mxu0 %v935
        %1050 = vmatprep.subr.mxu0 0.0
        %1051 = vmatpush1.msra.mxu0 %v934
        %1052 = vmatprep.subr.mxu0 0.0
        %1053 = vmatpush1.msra.mxu0 %v933
        %1054 = vmatprep.subr.mxu0 0.0
        %1055 = vmatpush1.msra.mxu0 %v932
        %1056 = vmatprep.subr.mxu0 0.0
        %1057 = vmatpush1.msra.mxu0 %v931
        %1058 = vmatprep.subr.mxu0 0.0
        %1059 = vmatpush1.msra.mxu0 %v930
        %1060 = vmatprep.subr.mxu0 0.0
        %1061 = vmatpush1.msra.mxu0 %v929
        %1062 = vmatprep.subr.mxu0 0.0
        %1063 = vmatpush1.msra.mxu0 %v928
        %1064 = vmatprep.subr.mxu0 0.0
        %1065 = vmatpush1.msra.mxu0 %v927
        %1066 = vmatprep.subr.mxu0 0.0
        %1067 = vmatpush1.msra.mxu0 %v926
        %1068 = vmatprep.subr.mxu0 0.0
        %1069 = vmatpush1.msra.mxu0 %v925
        %1070 = vmatprep.subr.mxu0 0.0
        %1071 = vmatpush1.msra.mxu0 %v924
        %1072 = vmatprep.subr.mxu0 0.0
        %1073 = vmatpush1.msra.mxu0 %v923
        %1074 = vmatprep.subr.mxu0 0.0
        %1075 = vmatpush1.msra.mxu0 %v922
        %1076 = vmatprep.subr.mxu0 0.0
        %1077 = vmatpush1.msra.mxu0 %v921
        %1078 = vmatprep.subr.mxu0 0.0
        %1079 = vmatpush2.msra.mxu0 0.0
        %1080 = vmatprep.subr.mxu0 0.0
        %1081 = vmatpush2.msra.mxu0 0.0
        %1082 = vmatprep.subr.mxu0 0.0
        %1083 = vmatpush2.msra.mxu0 0.0
        %1084 = vmatprep.subr.mxu0 0.0
        %1085 = vmatpush2.msra.mxu0 0.0
        %1086 = vmatprep.subr.mxu0 0.0
        %1087 = vmatpush2.msra.mxu0 0.0
        %1088 = vmatprep.subr.mxu0 0.0
        %1089 = vmatpush2.msra.mxu0 0.0
        %1090 = vmatprep.subr.mxu0 0.0
        %1091 = vmatpush2.msra.mxu0 0.0
        %1092 = vmatprep.subr.mxu0 0.0
        %1093 = vmatpush2.msra.mxu0 0.0
        %1094 = vmatprep.subr.mxu0 0.0
        %1095 = vmatpush2.msra.mxu0 0.0
        %1096 = vmatprep.subr.mxu0 0.0
        %1097 = vmatpush2.msra.mxu0 0.0
        %1098 = vmatprep.subr.mxu0 0.0
        %1099 = vmatpush2.msra.mxu0 0.0
        %1100 = vmatprep.subr.mxu0 0.0
        %1101 = vmatpush2.msra.mxu0 0.0
        %1102 = vmatprep.subr.mxu0 0.0
        %1103 = vmatpush2.msra.mxu0 0.0
        %1104 = vmatprep.subr.mxu0 0.0
        %1105 = vmatpush2.msra.mxu0 0.0
        %1106 = vmatprep.subr.mxu0 0.0
        %1107 = vmatpush2.msra.mxu0 0.0
        %1108 = vmatprep.subr.mxu0 0.0
        %1109 = vmatpush2.msra.mxu0 0.0
        %1110 = vmatprep.mubr.f32.mxu0 0.0
        %1111 = vmatmul.mubr.f32.gmra.mxu0 %v917
        %v1112 = vpop.f32.mrf.mxu0
        %v1113 = vadd.f32 %v1033, %v1112
        %v1114 = vpop.f32.mrf.mxu0
        %1115 = vmatprep.mubr.f32.mxu0 0.0
        %1116 = vmatmul.mubr.f32.gmra.mxu0 %v918
        %v1117 = vpop.f32.mrf.mxu0
        %v1118 = vadd.f32 %v1038, %v1117
        %v1119 = vpop.f32.mrf.mxu0
        %1120 = vmatprep.mubr.f32.mxu0 0.0
        %1121 = vmatmul.mubr.f32.gmra.mxu0 %v919
        %v1122 = vpop.f32.mrf.mxu0
        %v1123 = vadd.f32 %v1043, %v1122
        %v1124 = vpop.f32.mrf.mxu0
        %1125 = vdwg.mxu0
        %s1126 = scalar_lea.vmem %s5, 1
        %v1127 = vld [vmem:[%s1126] sm:$0x1]
        %v1129 = vlaneseq
        %v1130 = vshrl.u32 %v1129, 7
        %v1131 = vsub.s32 0, %v1130
        %v1132 = vrot.slane %v1127, %v1131
        %v1134 = vadd.f32 %v1113, %v1132
        %v1135 = vadd.f32 %v1118, %v1132
        %v1136 = vadd.f32 %v1123, %v1132
        %v1137 = vmax.f32 %v1134, 0.0
        %v1138 = vmax.f32 %v1135, 0.0
        %v1139 = vmax.f32 %v1136, 0.0
        %s1140 = scalar_lea.vmem [#allocation7], 256
        %v1141 = vld [vmem:[%s1140] sm:$0xff]
        %v1142 = vld [vmem:[%s1140 + $0x8] sm:$0xff]
        %v1143 = vld [vmem:[%s1140 + $0x10] sm:$0xff]
        %v1144 = vld [vmem:[%s1140 + $0x18] sm:$0xff]
        %v1145 = vld [vmem:[%s1140 + $0x20] sm:$0xff]
        %v1146 = vld [vmem:[%s1140 + $0x28] sm:$0xff]
        %v1147 = vld [vmem:[%s1140 + $0x30] sm:$0xff]
        %v1148 = vld [vmem:[%s1140 + $0x38] sm:$0xff]
        %v1149 = vld [vmem:[%s1140 + $0x40] sm:$0xff]
        %v1150 = vld [vmem:[%s1140 + $0x48] sm:$0xff]
        %v1151 = vld [vmem:[%s1140 + $0x50] sm:$0xff]
        %v1152 = vld [vmem:[%s1140 + $0x58] sm:$0xff]
        %v1153 = vld [vmem:[%s1140 + $0x60] sm:$0xff]
        %v1154 = vld [vmem:[%s1140 + $0x68] sm:$0xff]
        %v1155 = vld [vmem:[%s1140 + $0x70] sm:$0xff]
        %v1156 = vld [vmem:[%s1140 + $0x78] sm:$0xff]
        %s1157 = scalar_lea.vmem %s7, 2
        %v1158 = vld [vmem:[%s1157] sm:$0x1]
        %v1160 = vlaneseq
        %v1161 = vshrl.u32 %v1160, 7
        %v1162 = vsub.s32 0, %v1161
        %v1163 = vrot.slane %v1158, %v1162
        %1165 = vmatprep.subr.mxu0 0.0
        %1166 = vmatpush1.msra.mxu0 %v1156
        %1167 = vmatprep.subr.mxu0 0.0
        %1168 = vmatpush1.msra.mxu0 %v1155
        %1169 = vmatprep.subr.mxu0 0.0
        %1170 = vmatpush1.msra.mxu0 %v1154
        %1171 = vmatprep.subr.mxu0 0.0
        %1172 = vmatpush1.msra.mxu0 %v1153
        %1173 = vmatprep.subr.mxu0 0.0
        %1174 = vmatpush1.msra.mxu0 %v1152
        %1175 = vmatprep.subr.mxu0 0.0
        %1176 = vmatpush1.msra.mxu0 %v1151
        %1177 = vmatprep.subr.mxu0 0.0
        %1178 = vmatpush1.msra.mxu0 %v1150
        %1179 = vmatprep.subr.mxu0 0.0
        %1180 = vmatpush1.msra.mxu0 %v1149
        %1181 = vmatprep.subr.mxu0 0.0
        %1182 = vmatpush1.msra.mxu0 %v1148
        %1183 = vmatprep.subr.mxu0 0.0
        %1184 = vmatpush1.msra.mxu0 %v1147
        %1185 = vmatprep.subr.mxu0 0.0
        %1186 = vmatpush1.msra.mxu0 %v1146
        %1187 = vmatprep.subr.mxu0 0.0
        %1188 = vmatpush1.msra.mxu0 %v1145
        %1189 = vmatprep.subr.mxu0 0.0
        %1190 = vmatpush1.msra.mxu0 %v1144
        %1191 = vmatprep.subr.mxu0 0.0
        %1192 = vmatpush1.msra.mxu0 %v1143
        %1193 = vmatprep.subr.mxu0 0.0
        %1194 = vmatpush1.msra.mxu0 %v1142
        %1195 = vmatprep.subr.mxu0 0.0
        %1196 = vmatpush1.msra.mxu0 %v1141
        %1197 = vmatprep.subr.mxu0 0.0
        %1198 = vmatpush2.msra.mxu0 0.0
        %1199 = vmatprep.subr.mxu0 0.0
        %1200 = vmatpush2.msra.mxu0 0.0
        %1201 = vmatprep.subr.mxu0 0.0
        %1202 = vmatpush2.msra.mxu0 0.0
        %1203 = vmatprep.subr.mxu0 0.0
        %1204 = vmatpush2.msra.mxu0 0.0
        %1205 = vmatprep.subr.mxu0 0.0
        %1206 = vmatpush2.msra.mxu0 0.0
        %1207 = vmatprep.subr.mxu0 0.0
        %1208 = vmatpush2.msra.mxu0 0.0
        %1209 = vmatprep.subr.mxu0 0.0
        %1210 = vmatpush2.msra.mxu0 0.0
        %1211 = vmatprep.subr.mxu0 0.0
        %1212 = vmatpush2.msra.mxu0 0.0
        %1213 = vmatprep.subr.mxu0 0.0
        %1214 = vmatpush2.msra.mxu0 0.0
        %1215 = vmatprep.subr.mxu0 0.0
        %1216 = vmatpush2.msra.mxu0 0.0
        %1217 = vmatprep.subr.mxu0 0.0
        %1218 = vmatpush2.msra.mxu0 0.0
        %1219 = vmatprep.subr.mxu0 0.0
        %1220 = vmatpush2.msra.mxu0 0.0
        %1221 = vmatprep.subr.mxu0 0.0
        %1222 = vmatpush2.msra.mxu0 0.0
        %1223 = vmatprep.subr.mxu0 0.0
        %1224 = vmatpush2.msra.mxu0 0.0
        %1225 = vmatprep.subr.mxu0 0.0
        %1226 = vmatpush2.msra.mxu0 0.0
        %1227 = vmatprep.subr.mxu0 0.0
        %1228 = vmatpush2.msra.mxu0 0.0
        %1229 = vmatprep.mubr.f32.mxu0 0.0
        %1230 = vmatmul.mubr.f32.gmra.mxu0 %v1137
        %v1231 = vpop.f32.mrf.mxu0
        %v1232 = vadd.f32 %v1163, %v1231
        %v1233 = vpop.f32.mrf.mxu0
        %1234 = vmatprep.mubr.f32.mxu0 0.0
        %1235 = vmatmul.mubr.f32.gmra.mxu0 %v1138
        %v1236 = vpop.f32.mrf.mxu0
        %v1237 = vadd.f32 %v1163, %v1236
        %v1238 = vpop.f32.mrf.mxu0
        %1239 = vmatprep.mubr.f32.mxu0 0.0
        %1240 = vmatmul.mubr.f32.gmra.mxu0 %v1139
        %v1241 = vpop.f32.mrf.mxu0
        %v1242 = vadd.f32 %v1163, %v1241
        %v1243 = vpop.f32.mrf.mxu0
        %1244 = vdwg.mxu0
        %v1245 = vmax.f32 %v1232, 0.0
        %v1246 = vmax.f32 %v1237, 0.0
        %v1247 = vmax.f32 %v1242, 0.0
        %s1248 = scalar_lea.vmem [#allocation2], 256
        %v1249 = vld [vmem:[%s1248] sm:$0xff]
        %v1250 = vld [vmem:[%s1248 + $0x8] sm:$0xff]
        %v1251 = vld [vmem:[%s1248 + $0x10] sm:$0xff]
        %v1252 = vld [vmem:[%s1248 + $0x18] sm:$0xff]
        %v1253 = vld [vmem:[%s1248 + $0x20] sm:$0xff]
        %v1254 = vld [vmem:[%s1248 + $0x28] sm:$0xff]
        %v1255 = vld [vmem:[%s1248 + $0x30] sm:$0xff]
        %v1256 = vld [vmem:[%s1248 + $0x38] sm:$0xff]
        %v1257 = vld [vmem:[%s1248 + $0x40] sm:$0xff]
        %v1258 = vld [vmem:[%s1248 + $0x48] sm:$0xff]
        %v1259 = vld [vmem:[%s1248 + $0x50] sm:$0xff]
        %v1260 = vld [vmem:[%s1248 + $0x58] sm:$0xff]
        %v1261 = vld [vmem:[%s1248 + $0x60] sm:$0xff]
        %v1262 = vld [vmem:[%s1248 + $0x68] sm:$0xff]
        %v1263 = vld [vmem:[%s1248 + $0x70] sm:$0xff]
        %v1264 = vld [vmem:[%s1248 + $0x78] sm:$0xff]
        %s1265 = scalar_lea.vmem [#allocation5], 256
        %v1266 = vld [vmem:[%s1265] sm:$0xff]
        %v1267 = vld [vmem:[%s1265 + $0x8] sm:$0xff]
        %v1268 = vld [vmem:[%s1265 + $0x10] sm:$0xff]
        %v1269 = vld [vmem:[%s1265 + $0x18] sm:$0xff]
        %v1270 = vld [vmem:[%s1265 + $0x20] sm:$0xff]
        %v1271 = vld [vmem:[%s1265 + $0x28] sm:$0xff]
        %v1272 = vld [vmem:[%s1265 + $0x30] sm:$0xff]
        %v1273 = vld [vmem:[%s1265 + $0x38] sm:$0xff]
        %v1274 = vld [vmem:[%s1265 + $0x40] sm:$0xff]
        %v1275 = vld [vmem:[%s1265 + $0x48] sm:$0xff]
        %v1276 = vld [vmem:[%s1265 + $0x50] sm:$0xff]
        %v1277 = vld [vmem:[%s1265 + $0x58] sm:$0xff]
        %v1278 = vld [vmem:[%s1265 + $0x60] sm:$0xff]
        %v1279 = vld [vmem:[%s1265 + $0x68] sm:$0xff]
        %v1280 = vld [vmem:[%s1265 + $0x70] sm:$0xff]
        %v1281 = vld [vmem:[%s1265 + $0x78] sm:$0xff]
        %vm1285 = vcmask 1046528
        %v1286 = vrot.slane %v1245, 1
        %v1287 = vrot.slane %v1246, 1
        %v1288 = vsel %vm1285, %v1286, %v1287
        %v1289 = vrot.slane %v1247, 1
        %v1290 = vsel %vm1285, %v1287, %v1289
        %1293 = vmatprep.subr.mxu0 0.0
        %1294 = vmatpush1.msra.mxu0 %v1281
        %1295 = vmatprep.subr.mxu0 0.0
        %1296 = vmatpush1.msra.mxu0 %v1280
        %1297 = vmatprep.subr.mxu0 0.0
        %1298 = vmatpush1.msra.mxu0 %v1279
        %1299 = vmatprep.subr.mxu0 0.0
        %1300 = vmatpush1.msra.mxu0 %v1278
        %1301 = vmatprep.subr.mxu0 0.0
        %1302 = vmatpush1.msra.mxu0 %v1277
        %1303 = vmatprep.subr.mxu0 0.0
        %1304 = vmatpush1.msra.mxu0 %v1276
        %1305 = vmatprep.subr.mxu0 0.0
        %1306 = vmatpush1.msra.mxu0 %v1275
        %1307 = vmatprep.subr.mxu0 0.0
        %1308 = vmatpush1.msra.mxu0 %v1274
        %1309 = vmatprep.subr.mxu0 0.0
        %1310 = vmatpush1.msra.mxu0 %v1273
        %1311 = vmatprep.subr.mxu0 0.0
        %1312 = vmatpush1.msra.mxu0 %v1272
        %1313 = vmatprep.subr.mxu0 0.0
        %1314 = vmatpush1.msra.mxu0 %v1271
        %1315 = vmatprep.subr.mxu0 0.0
        %1316 = vmatpush1.msra.mxu0 %v1270
        %1317 = vmatprep.subr.mxu0 0.0
        %1318 = vmatpush1.msra.mxu0 %v1269
        %1319 = vmatprep.subr.mxu0 0.0
        %1320 = vmatpush1.msra.mxu0 %v1268
        %1321 = vmatprep.subr.mxu0 0.0
        %1322 = vmatpush1.msra.mxu0 %v1267
        %1323 = vmatprep.subr.mxu0 0.0
        %1324 = vmatpush1.msra.mxu0 %v1266
        %1325 = vmatprep.subr.mxu0 0.0
        %1326 = vmatpush2.msra.mxu0 0.0
        %1327 = vmatprep.subr.mxu0 0.0
        %1328 = vmatpush2.msra.mxu0 0.0
        %1329 = vmatprep.subr.mxu0 0.0
        %1330 = vmatpush2.msra.mxu0 0.0
        %1331 = vmatprep.subr.mxu0 0.0
        %1332 = vmatpush2.msra.mxu0 0.0
        %1333 = vmatprep.subr.mxu0 0.0
        %1334 = vmatpush2.msra.mxu0 0.0
        %1335 = vmatprep.subr.mxu0 0.0
        %1336 = vmatpush2.msra.mxu0 0.0
        %1337 = vmatprep.subr.mxu0 0.0
        %1338 = vmatpush2.msra.mxu0 0.0
        %1339 = vmatprep.subr.mxu0 0.0
        %1340 = vmatpush2.msra.mxu0 0.0
        %1341 = vmatprep.subr.mxu0 0.0
        %1342 = vmatpush2.msra.mxu0 0.0
        %1343 = vmatprep.subr.mxu0 0.0
        %1344 = vmatpush2.msra.mxu0 0.0
        %1345 = vmatprep.subr.mxu0 0.0
        %1346 = vmatpush2.msra.mxu0 0.0
        %1347 = vmatprep.subr.mxu0 0.0
        %1348 = vmatpush2.msra.mxu0 0.0
        %1349 = vmatprep.subr.mxu0 0.0
        %1350 = vmatpush2.msra.mxu0 0.0
        %1351 = vmatprep.subr.mxu0 0.0
        %1352 = vmatpush2.msra.mxu0 0.0
        %1353 = vmatprep.subr.mxu0 0.0
        %1354 = vmatpush2.msra.mxu0 0.0
        %1355 = vmatprep.subr.mxu0 0.0
        %1356 = vmatpush2.msra.mxu0 0.0
        %1357 = vmatprep.mubr.f32.mxu0 0.0
        %1358 = vmatmul.mubr.f32.gmra.mxu0 %v1288
        %v1359 = vpop.f32.mrf.mxu0
        %v1360 = vadd.f32 0.0, %v1359
        %v1361 = vpop.f32.mrf.mxu0
        %1362 = vmatprep.mubr.f32.mxu0 0.0
        %1363 = vmatmul.mubr.f32.gmra.mxu0 %v1290
        %v1364 = vpop.f32.mrf.mxu0
        %v1365 = vadd.f32 0.0, %v1364
        %v1366 = vpop.f32.mrf.mxu0
        %1367 = vdwg.mxu0
        %1368 = vmatprep.subr.mxu0 0.0
        %1369 = vmatpush1.msra.mxu0 %v1264
        %1370 = vmatprep.subr.mxu0 0.0
        %1371 = vmatpush1.msra.mxu0 %v1263
        %1372 = vmatprep.subr.mxu0 0.0
        %1373 = vmatpush1.msra.mxu0 %v1262
        %1374 = vmatprep.subr.mxu0 0.0
        %1375 = vmatpush1.msra.mxu0 %v1261
        %1376 = vmatprep.subr.mxu0 0.0
        %1377 = vmatpush1.msra.mxu0 %v1260
        %1378 = vmatprep.subr.mxu0 0.0
        %1379 = vmatpush1.msra.mxu0 %v1259
        %1380 = vmatprep.subr.mxu0 0.0
        %1381 = vmatpush1.msra.mxu0 %v1258
        %1382 = vmatprep.subr.mxu0 0.0
        %1383 = vmatpush1.msra.mxu0 %v1257
        %1384 = vmatprep.subr.mxu0 0.0
        %1385 = vmatpush1.msra.mxu0 %v1256
        %1386 = vmatprep.subr.mxu0 0.0
        %1387 = vmatpush1.msra.mxu0 %v1255
        %1388 = vmatprep.subr.mxu0 0.0
        %1389 = vmatpush1.msra.mxu0 %v1254
        %1390 = vmatprep.subr.mxu0 0.0
        %1391 = vmatpush1.msra.mxu0 %v1253
        %1392 = vmatprep.subr.mxu0 0.0
        %1393 = vmatpush1.msra.mxu0 %v1252
        %1394 = vmatprep.subr.mxu0 0.0
        %1395 = vmatpush1.msra.mxu0 %v1251
        %1396 = vmatprep.subr.mxu0 0.0
        %1397 = vmatpush1.msra.mxu0 %v1250
        %1398 = vmatprep.subr.mxu0 0.0
        %1399 = vmatpush1.msra.mxu0 %v1249
        %1400 = vmatprep.subr.mxu0 0.0
        %1401 = vmatpush2.msra.mxu0 0.0
        %1402 = vmatprep.subr.mxu0 0.0
        %1403 = vmatpush2.msra.mxu0 0.0
        %1404 = vmatprep.subr.mxu0 0.0
        %1405 = vmatpush2.msra.mxu0 0.0
        %1406 = vmatprep.subr.mxu0 0.0
        %1407 = vmatpush2.msra.mxu0 0.0
        %1408 = vmatprep.subr.mxu0 0.0
        %1409 = vmatpush2.msra.mxu0 0.0
        %1410 = vmatprep.subr.mxu0 0.0
        %1411 = vmatpush2.msra.mxu0 0.0
        %1412 = vmatprep.subr.mxu0 0.0
        %1413 = vmatpush2.msra.mxu0 0.0
        %1414 = vmatprep.subr.mxu0 0.0
        %1415 = vmatpush2.msra.mxu0 0.0
        %1416 = vmatprep.subr.mxu0 0.0
        %1417 = vmatpush2.msra.mxu0 0.0
        %1418 = vmatprep.subr.mxu0 0.0
        %1419 = vmatpush2.msra.mxu0 0.0
        %1420 = vmatprep.subr.mxu0 0.0
        %1421 = vmatpush2.msra.mxu0 0.0
        %1422 = vmatprep.subr.mxu0 0.0
        %1423 = vmatpush2.msra.mxu0 0.0
        %1424 = vmatprep.subr.mxu0 0.0
        %1425 = vmatpush2.msra.mxu0 0.0
        %1426 = vmatprep.subr.mxu0 0.0
        %1427 = vmatpush2.msra.mxu0 0.0
        %1428 = vmatprep.subr.mxu0 0.0
        %1429 = vmatpush2.msra.mxu0 0.0
        %1430 = vmatprep.subr.mxu0 0.0
        %1431 = vmatpush2.msra.mxu0 0.0
        %1432 = vmatprep.mubr.f32.mxu0 0.0
        %1433 = vmatmul.mubr.f32.gmra.mxu0 %v1245
        %v1434 = vpop.f32.mrf.mxu0
        %v1435 = vadd.f32 %v1360, %v1434
        %v1436 = vpop.f32.mrf.mxu0
        %1437 = vmatprep.mubr.f32.mxu0 0.0
        %1438 = vmatmul.mubr.f32.gmra.mxu0 %v1246
        %v1439 = vpop.f32.mrf.mxu0
        %v1440 = vadd.f32 %v1365, %v1439
        %v1441 = vpop.f32.mrf.mxu0
        %1442 = vdwg.mxu0
        %s1443 = scalar_lea.vmem %s5, 2
        %v1444 = vld [vmem:[%s1443] sm:$0x1]
        %v1446 = vlaneseq
        %v1447 = vshrl.u32 %v1446, 7
        %v1448 = vsub.s32 0, %v1447
        %v1449 = vrot.slane %v1444, %v1448
        %v1451 = vadd.f32 %v1435, %v1449
        %v1452 = vadd.f32 %v1440, %v1449
        %v1453 = vmax.f32 %v1451, 0.0
        %v1454 = vmax.f32 %v1452, 0.0
        %s1455 = scalar_lea.vmem [#allocation7], 384
        %v1456 = vld [vmem:[%s1455] sm:$0xff]
        %v1457 = vld [vmem:[%s1455 + $0x8] sm:$0xff]
        %v1458 = vld [vmem:[%s1455 + $0x10] sm:$0xff]
        %v1459 = vld [vmem:[%s1455 + $0x18] sm:$0xff]
        %v1460 = vld [vmem:[%s1455 + $0x20] sm:$0xff]
        %v1461 = vld [vmem:[%s1455 + $0x28] sm:$0xff]
        %v1462 = vld [vmem:[%s1455 + $0x30] sm:$0xff]
        %v1463 = vld [vmem:[%s1455 + $0x38] sm:$0xff]
        %v1464 = vld [vmem:[%s1455 + $0x40] sm:$0xff]
        %v1465 = vld [vmem:[%s1455 + $0x48] sm:$0xff]
        %v1466 = vld [vmem:[%s1455 + $0x50] sm:$0xff]
        %v1467 = vld [vmem:[%s1455 + $0x58] sm:$0xff]
        %v1468 = vld [vmem:[%s1455 + $0x60] sm:$0xff]
        %v1469 = vld [vmem:[%s1455 + $0x68] sm:$0xff]
        %v1470 = vld [vmem:[%s1455 + $0x70] sm:$0xff]
        %v1471 = vld [vmem:[%s1455 + $0x78] sm:$0xff]
        %s1472 = scalar_lea.vmem %s7, 3
        %v1473 = vld [vmem:[%s1472] sm:$0x1]
        %v1475 = vlaneseq
        %v1476 = vshrl.u32 %v1475, 7
        %v1477 = vsub.s32 0, %v1476
        %v1478 = vrot.slane %v1473, %v1477
        %1480 = vmatprep.subr.mxu0 0.0
        %1481 = vmatpush1.msra.mxu0 %v1471
        %1482 = vmatprep.subr.mxu0 0.0
        %1483 = vmatpush1.msra.mxu0 %v1470
        %1484 = vmatprep.subr.mxu0 0.0
        %1485 = vmatpush1.msra.mxu0 %v1469
        %1486 = vmatprep.subr.mxu0 0.0
        %1487 = vmatpush1.msra.mxu0 %v1468
        %1488 = vmatprep.subr.mxu0 0.0
        %1489 = vmatpush1.msra.mxu0 %v1467
        %1490 = vmatprep.subr.mxu0 0.0
        %1491 = vmatpush1.msra.mxu0 %v1466
        %1492 = vmatprep.subr.mxu0 0.0
        %1493 = vmatpush1.msra.mxu0 %v1465
        %1494 = vmatprep.subr.mxu0 0.0
        %1495 = vmatpush1.msra.mxu0 %v1464
        %1496 = vmatprep.subr.mxu0 0.0
        %1497 = vmatpush1.msra.mxu0 %v1463
        %1498 = vmatprep.subr.mxu0 0.0
        %1499 = vmatpush1.msra.mxu0 %v1462
        %1500 = vmatprep.subr.mxu0 0.0
        %1501 = vmatpush1.msra.mxu0 %v1461
        %1502 = vmatprep.subr.mxu0 0.0
        %1503 = vmatpush1.msra.mxu0 %v1460
        %1504 = vmatprep.subr.mxu0 0.0
        %1505 = vmatpush1.msra.mxu0 %v1459
        %1506 = vmatprep.subr.mxu0 0.0
        %1507 = vmatpush1.msra.mxu0 %v1458
        %1508 = vmatprep.subr.mxu0 0.0
        %1509 = vmatpush1.msra.mxu0 %v1457
        %1510 = vmatprep.subr.mxu0 0.0
        %1511 = vmatpush1.msra.mxu0 %v1456
        %1512 = vmatprep.subr.mxu0 0.0
        %1513 = vmatpush2.msra.mxu0 0.0
        %1514 = vmatprep.subr.mxu0 0.0
        %1515 = vmatpush2.msra.mxu0 0.0
        %1516 = vmatprep.subr.mxu0 0.0
        %1517 = vmatpush2.msra.mxu0 0.0
        %1518 = vmatprep.subr.mxu0 0.0
        %1519 = vmatpush2.msra.mxu0 0.0
        %1520 = vmatprep.subr.mxu0 0.0
        %1521 = vmatpush2.msra.mxu0 0.0
        %1522 = vmatprep.subr.mxu0 0.0
        %1523 = vmatpush2.msra.mxu0 0.0
        %1524 = vmatprep.subr.mxu0 0.0
        %1525 = vmatpush2.msra.mxu0 0.0
        %1526 = vmatprep.subr.mxu0 0.0
        %1527 = vmatpush2.msra.mxu0 0.0
        %1528 = vmatprep.subr.mxu0 0.0
        %1529 = vmatpush2.msra.mxu0 0.0
        %1530 = vmatprep.subr.mxu0 0.0
        %1531 = vmatpush2.msra.mxu0 0.0
        %1532 = vmatprep.subr.mxu0 0.0
        %1533 = vmatpush2.msra.mxu0 0.0
        %1534 = vmatprep.subr.mxu0 0.0
        %1535 = vmatpush2.msra.mxu0 0.0
        %1536 = vmatprep.subr.mxu0 0.0
        %1537 = vmatpush2.msra.mxu0 0.0
        %1538 = vmatprep.subr.mxu0 0.0
        %1539 = vmatpush2.msra.mxu0 0.0
        %1540 = vmatprep.subr.mxu0 0.0
        %1541 = vmatpush2.msra.mxu0 0.0
        %1542 = vmatprep.subr.mxu0 0.0
        %1543 = vmatpush2.msra.mxu0 0.0
        %1544 = vmatprep.mubr.f32.mxu0 0.0
        %1545 = vmatmul.mubr.f32.gmra.mxu0 %v1453
        %v1546 = vpop.f32.mrf.mxu0
        %v1547 = vadd.f32 %v1478, %v1546
        %v1548 = vpop.f32.mrf.mxu0
        %1549 = vmatprep.mubr.f32.mxu0 0.0
        %1550 = vmatmul.mubr.f32.gmra.mxu0 %v1454
        %v1551 = vpop.f32.mrf.mxu0
        %v1552 = vadd.f32 %v1478, %v1551
        %v1553 = vpop.f32.mrf.mxu0
        %1554 = vdwg.mxu0
        %v1555 = vmax.f32 %v1547, 0.0
        %v1556 = vmax.f32 %v1552, 0.0
        %v1557 = vld [vmem:[#allocation8] sm:$0xff]
        %v1558 = vld [vmem:[#allocation8 + $0x8] sm:$0xff]
        %v1559 = vld [vmem:[#allocation8 + $0x10] sm:$0xff]
        %v1560 = vld [vmem:[#allocation8 + $0x18] sm:$0xff]
        %v1561 = vld [vmem:[#allocation8 + $0x20] sm:$0xff]
        %v1562 = vld [vmem:[#allocation8 + $0x28] sm:$0xff]
        %v1563 = vld [vmem:[#allocation8 + $0x30] sm:$0xff]
        %v1564 = vld [vmem:[#allocation8 + $0x38] sm:$0xff]
        %v1565 = vld [vmem:[#allocation8 + $0x40] sm:$0xff]
        %v1566 = vld [vmem:[#allocation8 + $0x48] sm:$0xff]
        %v1567 = vld [vmem:[#allocation8 + $0x50] sm:$0xff]
        %v1568 = vld [vmem:[#allocation8 + $0x58] sm:$0xff]
        %v1569 = vld [vmem:[#allocation8 + $0x60] sm:$0xff]
        %v1570 = vld [vmem:[#allocation8 + $0x68] sm:$0xff]
        %v1571 = vld [vmem:[#allocation8 + $0x70] sm:$0xff]
        %v1572 = vld [vmem:[#allocation8 + $0x78] sm:$0xff]
        %v1573 = vld [vmem:[%s9] sm:$0x1]
        %v1575 = vlaneseq
        %v1576 = vshrl.u32 %v1575, 7
        %v1577 = vsub.s32 0, %v1576
        %v1578 = vrot.slane %v1573, %v1577
        %1580 = vmatprep.subr.mxu0 0.0
        %1581 = vmatpush1.msra.mxu0 %v1572
        %1582 = vmatprep.subr.mxu0 0.0
        %1583 = vmatpush1.msra.mxu0 %v1571
        %1584 = vmatprep.subr.mxu0 0.0
        %1585 = vmatpush1.msra.mxu0 %v1570
        %1586 = vmatprep.subr.mxu0 0.0
        %1587 = vmatpush1.msra.mxu0 %v1569
        %1588 = vmatprep.subr.mxu0 0.0
        %1589 = vmatpush1.msra.mxu0 %v1568
        %1590 = vmatprep.subr.mxu0 0.0
        %1591 = vmatpush1.msra.mxu0 %v1567
        %1592 = vmatprep.subr.mxu0 0.0
        %1593 = vmatpush1.msra.mxu0 %v1566
        %1594 = vmatprep.subr.mxu0 0.0
        %1595 = vmatpush1.msra.mxu0 %v1565
        %1596 = vmatprep.subr.mxu0 0.0
        %1597 = vmatpush1.msra.mxu0 %v1564
        %1598 = vmatprep.subr.mxu0 0.0
        %1599 = vmatpush1.msra.mxu0 %v1563
        %1600 = vmatprep.subr.mxu0 0.0
        %1601 = vmatpush1.msra.mxu0 %v1562
        %1602 = vmatprep.subr.mxu0 0.0
        %1603 = vmatpush1.msra.mxu0 %v1561
        %1604 = vmatprep.subr.mxu0 0.0
        %1605 = vmatpush1.msra.mxu0 %v1560
        %1606 = vmatprep.subr.mxu0 0.0
        %1607 = vmatpush1.msra.mxu0 %v1559
        %1608 = vmatprep.subr.mxu0 0.0
        %1609 = vmatpush1.msra.mxu0 %v1558
        %1610 = vmatprep.subr.mxu0 0.0
        %1611 = vmatpush1.msra.mxu0 %v1557
        %1612 = vmatprep.subr.mxu0 0.0
        %1613 = vmatpush2.msra.mxu0 0.0
        %1614 = vmatprep.subr.mxu0 0.0
        %1615 = vmatpush2.msra.mxu0 0.0
        %1616 = vmatprep.subr.mxu0 0.0
        %1617 = vmatpush2.msra.mxu0 0.0
        %1618 = vmatprep.subr.mxu0 0.0
        %1619 = vmatpush2.msra.mxu0 0.0
        %1620 = vmatprep.subr.mxu0 0.0
        %1621 = vmatpush2.msra.mxu0 0.0
        %1622 = vmatprep.subr.mxu0 0.0
        %1623 = vmatpush2.msra.mxu0 0.0
        %1624 = vmatprep.subr.mxu0 0.0
        %1625 = vmatpush2.msra.mxu0 0.0
        %1626 = vmatprep.subr.mxu0 0.0
        %1627 = vmatpush2.msra.mxu0 0.0
        %1628 = vmatprep.subr.mxu0 0.0
        %1629 = vmatpush2.msra.mxu0 0.0
        %1630 = vmatprep.subr.mxu0 0.0
        %1631 = vmatpush2.msra.mxu0 0.0
        %1632 = vmatprep.subr.mxu0 0.0
        %1633 = vmatpush2.msra.mxu0 0.0
        %1634 = vmatprep.subr.mxu0 0.0
        %1635 = vmatpush2.msra.mxu0 0.0
        %1636 = vmatprep.subr.mxu0 0.0
        %1637 = vmatpush2.msra.mxu0 0.0
        %1638 = vmatprep.subr.mxu0 0.0
        %1639 = vmatpush2.msra.mxu0 0.0
        %1640 = vmatprep.subr.mxu0 0.0
        %1641 = vmatpush2.msra.mxu0 0.0
        %1642 = vmatprep.subr.mxu0 0.0
        %1643 = vmatpush2.msra.mxu0 0.0
        %1644 = vmatprep.mubr.f32.mxu0 0.0
        %1645 = vmatmul.mubr.f32.gmra.mxu0 %v1555
        %v1646 = vpop.f32.mrf.mxu0
        %v1647 = vadd.f32 %v1578, %v1646
        %v1648 = vpop.f32.mrf.mxu0
        %1649 = vmatprep.mubr.f32.mxu0 0.0
        %1650 = vmatmul.mubr.f32.gmra.mxu0 %v1556
        %v1651 = vpop.f32.mrf.mxu0
        %v1652 = vadd.f32 %v1578, %v1651
        %v1653 = vpop.f32.mrf.mxu0
        %1654 = vdwg.mxu0
        %1655 = vmax.xlane.f32.xlu0 %v1647
        %v1656 = vpop.xlane.xlu0 %1655
        %1657 = vmax.xlane.f32.xlu0 %v1652
        %v1658 = vpop.xlane.xlu0 %1657
        %v1659 = vsub.f32 %v1647, %v1656
        %v1660 = vsub.f32 %v1652, %v1658
        %v1661 = vmul.f32 %v1659, 1.442695
        %v1662 = vpow.pop %v1661
        %v1663 = vmul.f32 %v1660, 1.442695
        %v1664 = vpow.pop %v1663
        %1665 = vadd.xlane.f32.xlu0 %v1662
        %v1666 = vpop.xlane.xlu0 %1665
        %1667 = vadd.xlane.f32.xlu0 %v1664
        %v1668 = vpop.xlane.xlu0 %1667
        %v1669 = vlog2.pop %v1666
        %v1670 = vmul.f32 %v1669, 0.6931472
        %v1671 = vlog2.pop %v1668
        %v1672 = vmul.f32 %v1671, 0.6931472
        %v1673 = vsub.f32 %v1659, %v1670
        %v1674 = vsub.f32 %v1660, %v1672
        %1675 = vst [vmem:[%s425] sm:$0xff] %v1673
        %1676 = vst [vmem:[%s425 + $0x8] sm:$0xff] %v1674
        %s1677 = sand.u32 %s264, 1
        %s1678 = scalar_lea.sflag [#allocation4], %s1677
        %s1679 = sand.u32 %s264, 1
        %s1680 = smul.addr %s1679, 16
        %s1681 = scalar_lea.vmem [#allocation10], %s1680
        // Predicated region
        $region77: #{tpu_custom_call.1} parent=59 // pred_check
          %p1682 = pneg %p274
        $region78: #{tpu_custom_call.1} parent=59 // pred_check_branch
          %1684 = sbr.rel (%p1682) target = $region80
        $region79: #{tpu_custom_call.1} parent=59 // pred_region
          %s1685 = smul.u32 2, %s32
          %s1687 = ssub.s32 256, 256
          %1688 = vsyncadd %s1678, %s1687
          %s1689 = smul.addr %s31, 4
          %s1690 = sadd.s32 %s1685, %s1689
          %s1691 = smul.addr %s1690, 128
          %s1692 = scalar_lea.hbm %s10, %s1691
          %s1693 = sshll.u32 %s1681, 4
          %s1694 = int_to_ptr.vmem [resolvable:$true] %s1693
          %1699 = dma.vmem_to_hbm [thread:$0]  %s1694, 256, %s1692, %s1678, 128, 128, 8
        $region80: #{tpu_custom_call.1} parent=59 // pred_fallthru
          _
      $region60: #{tpu_custom_call.1} parent=5 // pred_fallthru
        _
      %p1700 = scmp.le.s32.totalorder 2, %s22
      // Predicated region
      $region81: #{tpu_custom_call.1} parent=5 // pred_check
        %p1701 = pneg %p1700
      $region82: #{tpu_custom_call.1} parent=5 // pred_check_branch
        %1703 = sbr.rel (%p1701) target = $region84
      $region83: #{tpu_custom_call.1} parent=5 // pred_region
        %s1704 = ssub.s32 %s22, 2
        // Predicated region
        $region85: #{tpu_custom_call.1} parent=83 // pred_check
          %p1705 = pneg %p280
        $region86: #{tpu_custom_call.1} parent=83 // pred_check_branch
          %1707 = sbr.rel (%p1705) target = $region88
        $region87: #{tpu_custom_call.1} parent=83 // pred_region
          %s1708 = sand.u32 %s265, 1
          %s1709 = scalar_lea.sflag [#allocation4], %s1708
          %s1710 = sand.u32 %s265, 1
          %s1711 = smul.addr %s1710, 16
          %s1712 = scalar_lea.vmem [#allocation10], %s1711
          %1713 = dma.done %s1709, 256
        $region88: #{tpu_custom_call.1} parent=83 // pred_fallthru
          _
      $region84: #{tpu_custom_call.1} parent=5 // pred_fallthru
        _
    $region6: #{tpu_custom_call.1} parent=1 // loop_footer
      %s26 = sadd.s32 1, %s22
    $region7: #{tpu_custom_call.1} parent=1 // loop_footer_branch
      %21 = sbr.rel target = $region3
    $region8: #{tpu_custom_call.1} parent=1 // loop_exit
      _
    %1714 = vsyncpa [#allocation3], 1
    %s1715 = scalar_lea.sflag [#allocation3], 1
    %1716 = vsyncpa %s1715, 1
    %1717 = vsyncpa [#allocation6], 1
    %1718 = vsyncpa [#allocation9], 1
    %1719 = vsyncpa [#allocation4], 1
    %s1720 = scalar_lea.sflag [#allocation4], 1
    %1721 = vsyncpa %s1720, 1

</llo_original>
